<compile_context>
chip_gen: v6e
topology: v6e:2x2x1
jax: 0.10.0
libtpu: 0.0.40
codegen_flags: <defaults>
</compile_context>

<pallas_src>
import functools

import jax
import jax.numpy as jnp
from jax.experimental import pallas as pl
from jax.experimental.pallas import tpu as pltpu


def _round_up(x, m):
    return (x + m - 1) // m * m


def _largest_divisor_leq(n, k):
    k = max(1, min(n, k))
    while n % k:
        k -= 1
    return k


# ---------------------------------------------------------------------------
# Fused single-pass kernel: pool + SE MLP + scale on a resident (Bt,C,H,W) tile
# ---------------------------------------------------------------------------
def _fused_kernel(x_ref, w1t_ref, b1_ref, w2t_ref, b2_ref, o_ref, *, hw):
    x = x_ref[...]                                        # (Bt, C, H, W)
    xf = x.astype(jnp.float32)

    s = jnp.sum(jnp.sum(xf, axis=3), axis=2)              # (Bt, C)
    mx = jnp.max(jnp.max(xf, axis=3), axis=2)             # (Bt, C)
    avg = s * (1.0 / hw)

    w1t = w1t_ref[...].astype(jnp.float32)                # (C, Cr)
    b1 = b1_ref[...].astype(jnp.float32)                  # (1, Cr)
    w2t = w2t_ref[...].astype(jnp.float32)                # (Cr, C)
    b2 = b2_ref[...].astype(jnp.float32)                  # (1, C)

    def branch(p):                                        # (Bt, C) -> (Bt, C)
        h = jnp.maximum(
            jnp.dot(p, w1t, preferred_element_type=jnp.float32) + b1, 0.0)
        return jax.nn.sigmoid(
            jnp.dot(h, w2t, preferred_element_type=jnp.float32) + b2)

    att = branch(avg) + branch(mx)                        # (Bt, C), f32
    o_ref[...] = (xf * att[:, :, None, None]).astype(o_ref.dtype)


# ---------------------------------------------------------------------------
# Two-pass path: pass 1 (pool + SE), pass 2 (scale)
# ---------------------------------------------------------------------------
def _pool_att_kernel(x_ref, w1_ref, b1_ref, w2_ref, b2_ref, att_ref,
                     sum_sc, max_sc, *, valid_h, th, hw, needs_mask):
    t = pl.program_id(1)
    nt = pl.num_programs(1)

    @pl.when(t == 0)
    def _():
        sum_sc[...] = jnp.zeros_like(sum_sc)
        max_sc[...] = jnp.full_like(max_sc, -jnp.inf)

    x = x_ref[0].astype(jnp.float32)                      # (C, th, W)

    def accumulate(xs, xm):
        # Lane-wide (C, W) partials; single cross-lane reduce in the epilogue.
        sum_sc[...] += jnp.sum(xs, axis=1)
        max_sc[...] = jnp.maximum(max_sc[...], jnp.max(xm, axis=1))

    if needs_mask:
        # Interior tiles are fully valid -> no mask work (VPU filler removed).
        @pl.when(t < nt - 1)
        def _():
            accumulate(x, x)

        # Only the trailing partial H tile contains garbage rows.
        @pl.when(t == nt - 1)
        def _():
            row = jax.lax.broadcasted_iota(jnp.int32, (th, x.shape[2]), 0)
            valid = (t * th + row) < valid_h              # (th, W)
            accumulate(jnp.where(valid[None], x, 0.0),
                       jnp.where(valid[None], x, -jnp.inf))
    else:
        accumulate(x, x)

    @pl.when(t == nt - 1)
    def _():
        total_sum = jnp.sum(sum_sc[...], axis=1, keepdims=True)   # (C, 1)
        total_max = jnp.max(max_sc[...], axis=1, keepdims=True)   # (C, 1)
        avg = total_sum * (1.0 / hw)
        pools = jnp.concatenate([avg, total_max], axis=1)         # (C, 2)
        w1 = w1_ref[...].astype(jnp.float32)
        b1 = b1_ref[...].astype(jnp.float32)
        w2 = w2_ref[...].astype(jnp.float32)
        b2 = b2_ref[...].astype(jnp.float32)
        h = jnp.maximum(
            jnp.dot(w1, pools, preferred_element_type=jnp.float32) + b1, 0.0)
        a = jax.nn.sigmoid(
            jnp.dot(w2, h, preferred_element_type=jnp.float32) + b2)
        att_ref[0] = (a[:, 0:1] + a[:, 1:2]).astype(att_ref.dtype)   # (C, 1)


def _scale_kernel(x_ref, att_ref, o_ref):
    x = x_ref[0].astype(jnp.float32)                      # (C, th, W)
    att = att_ref[0]                                      # (C, 1), f32
    o_ref[0] = (x * att[:, :, None]).astype(o_ref.dtype)


# ---------------------------------------------------------------------------
# Dispatch wrapper
# ---------------------------------------------------------------------------
def channel_attention(x, w1, b1, w2, b2, *,
                      target_block_bytes=1 << 20,
                      fused_vmem_budget=12 << 20,
                      force_two_pass=False):
    """x: (B, C, H, W). w1: (Cr, C), b1: (Cr, 1), w2: (C, Cr), b2: (C, 1)."""
    B, C, H, W = x.shape
    Cr = w1.shape[0]
    HW = H * W
    itemsize = x.dtype.itemsize

    # Padded per-batch VMEM footprint (last two dims tile to (8, 128)).
    per_batch_pad = C * _round_up(H, 8) * _round_up(W, 128)

    # Batch-block so each DMA is ~target_block_bytes; Bt must divide B.
    desired_bt = max(1, target_block_bytes // max(1, per_batch_pad * itemsize))
    bt = _largest_divisor_leq(B, desired_bt)

    def fused_vmem(btv):
        blk = btv * per_batch_pad
        # 2x double-buffered input + 2x output (input dtype) + one f32 temp.
        return blk * (4 * itemsize + 4)

    while bt > 1 and fused_vmem(bt) > fused_vmem_budget:
        bt = _largest_divisor_leq(B, bt - 1)

    use_fused = (not force_two_pass) and fused_vmem(bt) <= fused_vmem_budget

    if use_fused:
        # --- Fused single pass: 1 read + 1 write of x in HBM. ---
        w1t = jnp.transpose(w1)                           # (C, Cr)
        w2t = jnp.transpose(w2)                           # (Cr, C)
        b1r = jnp.reshape(b1, (1, Cr))
        b2r = jnp.reshape(b2, (1, C))
        grid_b = B // bt
        return pl.pallas_call(
            functools.partial(_fused_kernel, hw=float(HW)),
            out_shape=jax.ShapeDtypeStruct((B, C, H, W), x.dtype),
            grid_spec=pltpu.PrefetchScalarGridSpec(
                num_scalar_prefetch=0,
                grid=(grid_b,),
                in_specs=[
                    pl.BlockSpec((bt, C, H, W), lambda b: (b, 0, 0, 0)),
                    pl.BlockSpec((C, Cr), lambda b: (0, 0)),
                    pl.BlockSpec((1, Cr), lambda b: (0, 0)),
                    pl.BlockSpec((Cr, C), lambda b: (0, 0)),
                    pl.BlockSpec((1, C), lambda b: (0, 0)),
                ],
                out_specs=pl.BlockSpec((bt, C, H, W), lambda b: (b, 0, 0, 0)),
            ),
            compiler_params=pltpu.CompilerParams(
                dimension_semantics=("parallel",)),
        )(x, w1t, b1r, w2t, b2r)

    # --- Two-pass path: tile over H (W stays the lane dim, no reshape). ---
    row_bytes = C * _round_up(W, 128) * itemsize
    th = max(8, (target_block_bytes // max(1, row_bytes)) // 8 * 8)
    th = min(th, _round_up(H, 8))
    nh = pl.cdiv(H, th)
    needs_mask = (H % th) != 0

    att = pl.pallas_call(
        functools.partial(_pool_att_kernel, valid_h=H, th=th, hw=float(HW),
                          needs_mask=needs_mask),
        out_shape=jax.ShapeDtypeStruct((B, C, 1), jnp.float32),
        grid_spec=pltpu.PrefetchScalarGridSpec(
            num_scalar_prefetch=0,
            grid=(B, nh),
            in_specs=[
                pl.BlockSpec((1, C, th, W), lambda b, t: (b, 0, t, 0)),
                pl.BlockSpec((Cr, C), lambda b, t: (0, 0)),
                pl.BlockSpec((Cr, 1), lambda b, t: (0, 0)),
                pl.BlockSpec((C, Cr), lambda b, t: (0, 0)),
                pl.BlockSpec((C, 1), lambda b, t: (0, 0)),
            ],
            out_specs=pl.BlockSpec((1, C, 1), lambda b, t: (b, 0, 0)),
            scratch_shapes=[pltpu.VMEM((C, W), jnp.float32),   # sum partials
                            pltpu.VMEM((C, W), jnp.float32)],  # max partials
        ),
        compiler_params=pltpu.CompilerParams(
            dimension_semantics=("parallel", "arbitrary")),
    )(x, w1, b1, w2, b2)

    return pl.pallas_call(
        _scale_kernel,
        out_shape=jax.ShapeDtypeStruct((B, C, H, W), x.dtype),
        grid_spec=pltpu.PrefetchScalarGridSpec(
            num_scalar_prefetch=0,
            grid=(B, nh),
            in_specs=[
                pl.BlockSpec((1, C, th, W), lambda b, t: (b, 0, t, 0)),
                pl.BlockSpec((1, C, 1), lambda b, t: (b, 0, 0)),
            ],
            out_specs=pl.BlockSpec((1, C, th, W), lambda b, t: (b, 0, t, 0)),
        ),
        compiler_params=pltpu.CompilerParams(
            dimension_semantics=("parallel", "parallel")),
    )(x, att)


# ---------------------------------------------------------------------------
# Pure-JAX reference matching the PyTorch forward pass
# ---------------------------------------------------------------------------
def channel_attention_ref(x, w1, b1, w2, b2):
    avg_pool = jnp.mean(x, axis=(2, 3))                   # (B, C)
    max_pool = jnp.max(x, axis=(2, 3))                    # (B, C)

    def branch(pool):
        h = jnp.maximum(pool @ w1.T + b1[:, 0], 0.0)      # (B, Cr)
        return jax.nn.sigmoid(h @ w2.T + b2[:, 0])        # (B, C)

    att = branch(avg_pool) + branch(max_pool)             # (B, C)
    return x * att[:, :, None, None]


def _make_params(key, C, reduction):
    Cr = C // reduction
    kw1, kb1, kw2, kb2 = jax.random.split(key, 4)
    w1 = 0.1 * jax.random.normal(kw1, (Cr, C), dtype=jnp.float32)   # fc1.weight
    b1 = 0.1 * jax.random.normal(kb1, (Cr, 1), dtype=jnp.float32)   # fc1.bias
    w2 = 0.1 * jax.random.normal(kw2, (C, Cr), dtype=jnp.float32)   # fc2.weight
    b2 = 0.1 * jax.random.normal(kb2, (C, 1), dtype=jnp.float32)    # fc2.bias
    return w1, b1, w2, b2


if __name__ == "__main__":
    keys = jax.random.split(jax.random.PRNGKey(0), 8)

    def run_case(kx, kp, B, C, H, W, reduction, **kw):
        x = jax.random.normal(kx, (B, C, H, W), dtype=jnp.float32)
        w1, b1, w2, b2 = _make_params(kp, C, reduction)
        out = jax.block_until_ready(channel_attention(x, w1, b1, w2, b2, **kw))
        ref = channel_attention_ref(x, w1, b1, w2, b2)
        assert out.shape == x.shape and out.dtype == x.dtype
        assert jnp.allclose(out, ref, rtol=1e-5, atol=1e-5), \
            f"mismatch B={B} C={C} H={H} W={W} kw={kw}"

    # Fused single-pass path (batch-blocked, whole feature map resident in VMEM).
    run_case(keys[0], keys[1], 2, 32, 16, 16, 16)
    # Fused path with odd spatial extent (H, W not multiples of 8 / 128).
    run_case(keys[2], keys[3], 1, 16, 10, 10, 8)
    # Two-pass path with a partial (masked) trailing H tile.
    run_case(keys[4], keys[5], 2, 32, 20, 16, 16,
             force_two_pass=True, target_block_bytes=16 * 1024)
    # Two-pass path, evenly tiled H (no mask).
    run_case(keys[6], keys[7], 1, 16, 32, 16, 8,
             force_two_pass=True, target_block_bytes=8 * 1024)

    print("KERNEL_OK")
</pallas_src>

<mosaic_0001>
module attributes {stable_mosaic.version = 11 : i64} {
  func.func @_fused_kernel(%arg0: i32, %arg1: memref<2x32x16x16xf32, #tpu.memory_space<vmem>>, %arg2: memref<32x2xf32, #tpu.memory_space<vmem>>, %arg3: memref<1x2xf32, #tpu.memory_space<vmem>>, %arg4: memref<2x32xf32, #tpu.memory_space<vmem>>, %arg5: memref<1x32xf32, #tpu.memory_space<vmem>>, %arg6: memref<2x32x16x16xf32, #tpu.memory_space<vmem>>) attributes {dimension_semantics = [#tpu.dimension_semantics<parallel>], iteration_bounds = array<i64: 1>, scalar_prefetch = 0 : i64, scratch_operands = 0 : i64, tpu.core_type = #tpu.core_type<tc>, window_params = [{transform_indices = @transform_0, window_bounds = array<i64: 2, 32, 16, 16>}, {pipeline_mode = #tpu.pipeline_mode<synchronous>, transform_indices = @transform_1, window_bounds = array<i64: 32, 2>}, {pipeline_mode = #tpu.pipeline_mode<synchronous>, transform_indices = @transform_2, window_bounds = array<i64: 1, 2>}, {pipeline_mode = #tpu.pipeline_mode<synchronous>, transform_indices = @transform_3, window_bounds = array<i64: 2, 32>}, {pipeline_mode = #tpu.pipeline_mode<synchronous>, transform_indices = @transform_4, window_bounds = array<i64: 1, 32>}, {transform_indices = @transform_5, window_bounds = array<i64: 2, 32, 16, 16>}]} {
    %c0 = arith.constant 0 : index
    %c0_0 = arith.constant 0 : index
    %c0_1 = arith.constant 0 : index
    %c0_2 = arith.constant 0 : index
    %0 = vector.load %arg1[%c0, %c0_0, %c0_1, %c0_2] : memref<2x32x16x16xf32, #tpu.memory_space<vmem>>, vector<2x32x16x16xf32>
    %cst = arith.constant dense<0.000000e+00> : vector<2x32x16xf32>
    %1 = vector.multi_reduction <add>, %0, %cst [3] : vector<2x32x16x16xf32> to vector<2x32x16xf32>
    %cst_3 = arith.constant dense<0.000000e+00> : vector<2x32xf32>
    %2 = vector.multi_reduction <add>, %1, %cst_3 [2] : vector<2x32x16xf32> to vector<2x32xf32>
    %cst_4 = arith.constant dense<0xFF800000> : vector<2x32x16xf32>
    %3 = vector.multi_reduction <maximumf>, %0, %cst_4 [3] : vector<2x32x16x16xf32> to vector<2x32x16xf32>
    %cst_5 = arith.constant dense<0xFF800000> : vector<2x32xf32>
    %4 = vector.multi_reduction <maximumf>, %3, %cst_5 [2] : vector<2x32x16xf32> to vector<2x32xf32>
    %cst_6 = arith.constant 3.906250e-03 : f32
    %5 = vector.broadcast %cst_6 : f32 to vector<2x32xf32>
    %6 = arith.mulf %2, %5 : vector<2x32xf32>
    %c0_7 = arith.constant 0 : index
    %c0_8 = arith.constant 0 : index
    %7 = vector.load %arg2[%c0_7, %c0_8] : memref<32x2xf32, #tpu.memory_space<vmem>>, vector<32x2xf32>
    %c0_9 = arith.constant 0 : index
    %c0_10 = arith.constant 0 : index
    %8 = vector.load %arg3[%c0_9, %c0_10] : memref<1x2xf32, #tpu.memory_space<vmem>>, vector<1x2xf32>
    %c0_11 = arith.constant 0 : index
    %c0_12 = arith.constant 0 : index
    %9 = vector.load %arg4[%c0_11, %c0_12] : memref<2x32xf32, #tpu.memory_space<vmem>>, vector<2x32xf32>
    %c0_13 = arith.constant 0 : index
    %c0_14 = arith.constant 0 : index
    %10 = vector.load %arg5[%c0_13, %c0_14] : memref<1x32xf32, #tpu.memory_space<vmem>>, vector<1x32xf32>
    %cst_15 = arith.constant dense<0.000000e+00> : vector<2x2xf32>
    %11 = tpu.matmul %6, %7, %cst_15 {dimension_numbers = #tpu.dot_dimension_numbers<[1], [0], [0], [1], [0, 0, 1, 1], [], []>} : vector<2x32xf32>, vector<32x2xf32>, vector<2x2xf32> -> vector<2x2xf32>
    %12 = vector.broadcast %8 : vector<1x2xf32> to vector<2x2xf32>
    %13 = arith.addf %11, %12 : vector<2x2xf32>
    %cst_16 = arith.constant 0.000000e+00 : f32
    %14 = vector.broadcast %cst_16 : f32 to vector<2x2xf32>
    %15 = arith.maximumf %13, %14 : vector<2x2xf32>
    %cst_17 = arith.constant dense<0.000000e+00> : vector<2x32xf32>
    %16 = tpu.matmul %15, %9, %cst_17 {dimension_numbers = #tpu.dot_dimension_numbers<[1], [0], [0], [1], [0, 0, 1, 1], [], []>} : vector<2x2xf32>, vector<2x32xf32>, vector<2x32xf32> -> vector<2x32xf32>
    %17 = vector.broadcast %10 : vector<1x32xf32> to vector<2x32xf32>
    %18 = arith.addf %16, %17 : vector<2x32xf32>
    %19 = arith.negf %18 : vector<2x32xf32>
    %20 = math.exp %19 : vector<2x32xf32>
    %cst_18 = arith.constant 1.000000e+00 : f32
    %21 = vector.broadcast %cst_18 : f32 to vector<2x32xf32>
    %22 = arith.addf %21, %20 : vector<2x32xf32>
    %23 = arith.divf %21, %22 : vector<2x32xf32>
    %cst_19 = arith.constant dense<0.000000e+00> : vector<2x2xf32>
    %24 = tpu.matmul %4, %7, %cst_19 {dimension_numbers = #tpu.dot_dimension_numbers<[1], [0], [0], [1], [0, 0, 1, 1], [], []>} : vector<2x32xf32>, vector<32x2xf32>, vector<2x2xf32> -> vector<2x2xf32>
    %25 = vector.broadcast %8 : vector<1x2xf32> to vector<2x2xf32>
    %26 = arith.addf %24, %25 : vector<2x2xf32>
    %cst_20 = arith.constant 0.000000e+00 : f32
    %27 = vector.broadcast %cst_20 : f32 to vector<2x2xf32>
    %28 = arith.maximumf %26, %27 : vector<2x2xf32>
    %cst_21 = arith.constant dense<0.000000e+00> : vector<2x32xf32>
    %29 = tpu.matmul %28, %9, %cst_21 {dimension_numbers = #tpu.dot_dimension_numbers<[1], [0], [0], [1], [0, 0, 1, 1], [], []>} : vector<2x2xf32>, vector<2x32xf32>, vector<2x32xf32> -> vector<2x32xf32>
    %30 = vector.broadcast %10 : vector<1x32xf32> to vector<2x32xf32>
    %31 = arith.addf %29, %30 : vector<2x32xf32>
    %32 = arith.negf %31 : vector<2x32xf32>
    %33 = math.exp %32 : vector<2x32xf32>
    %cst_22 = arith.constant 1.000000e+00 : f32
    %34 = vector.broadcast %cst_22 : f32 to vector<2x32xf32>
    %35 = arith.addf %34, %33 : vector<2x32xf32>
    %36 = arith.divf %34, %35 : vector<2x32xf32>
    %37 = arith.addf %23, %36 : vector<2x32xf32>
    %38 = vector.shape_cast %37 : vector<2x32xf32> to vector<2x32x1x1xf32>
    %39 = vector.broadcast %38 : vector<2x32x1x1xf32> to vector<2x32x16x16xf32>
    %40 = arith.mulf %0, %39 : vector<2x32x16x16xf32>
    %c0_23 = arith.constant 0 : index
    %c0_24 = arith.constant 0 : index
    %c0_25 = arith.constant 0 : index
    %c0_26 = arith.constant 0 : index
    %41 = vector.load %arg6[%c0_23, %c0_24, %c0_25, %c0_26] : memref<2x32x16x16xf32, #tpu.memory_space<vmem>>, vector<2x32x16x16xf32>
    tpu.vector_store %arg6[%c0_23, %c0_24, %c0_25, %c0_26], %40 {strides = array<i32>} : memref<2x32x16x16xf32, #tpu.memory_space<vmem>>, vector<2x32x16x16xf32>,
    return
  }
  func.func @transform_0(%arg0: i32) -> (i32, i32, i32, i32) {
    %c0_i32 = arith.constant 0 : i32
    %c0_i32_0 = arith.constant 0 : i32
    %c0_i32_1 = arith.constant 0 : i32
    %c0_i32_2 = arith.constant 0 : i32
    return %arg0, %c0_i32, %c0_i32_0, %c0_i32_1 : i32, i32, i32, i32
  }
  func.func @transform_1(%arg0: i32) -> (i32, i32) {
    %c0_i32 = arith.constant 0 : i32
    %c0_i32_0 = arith.constant 0 : i32
    %c0_i32_1 = arith.constant 0 : i32
    return %c0_i32, %c0_i32_0 : i32, i32
  }
  func.func @transform_2(%arg0: i32) -> (i32, i32) {
    %c0_i32 = arith.constant 0 : i32
    %c0_i32_0 = arith.constant 0 : i32
    %c0_i32_1 = arith.constant 0 : i32
    return %c0_i32, %c0_i32_0 : i32, i32
  }
  func.func @transform_3(%arg0: i32) -> (i32, i32) {
    %c0_i32 = arith.constant 0 : i32
    %c0_i32_0 = arith.constant 0 : i32
    %c0_i32_1 = arith.constant 0 : i32
    return %c0_i32, %c0_i32_0 : i32, i32
  }
  func.func @transform_4(%arg0: i32) -> (i32, i32) {
    %c0_i32 = arith.constant 0 : i32
    %c0_i32_0 = arith.constant 0 : i32
    %c0_i32_1 = arith.constant 0 : i32
    return %c0_i32, %c0_i32_0 : i32, i32
  }
  func.func @transform_5(%arg0: i32) -> (i32, i32, i32, i32) {
    %c0_i32 = arith.constant 0 : i32
    %c0_i32_0 = arith.constant 0 : i32
    %c0_i32_1 = arith.constant 0 : i32
    %c0_i32_2 = arith.constant 0 : i32
    return %arg0, %c0_i32, %c0_i32_0, %c0_i32_1 : i32, i32, i32, i32
  }
}

</mosaic_0001>

<llo_original>
// kernel: tpu_custom_call.1
$region0: #{tpu_custom_call.1}
  #allocation0 [shape = 'u32[]', space=smem, size = 0x4, offset = 0x4, fixed_abs, tag = 'smem constant byte address 0x4 - core index']
  #allocation1 [shape = 'u32[144,128]{1,0:T(1,128)}', space=vmem, size = 0x12000, scoped, tag = 'internal scratch']
  %s0 = inlined_call_operand.vmem [shape: f32[2,32,16,16], index: 0, kind: input, shape index: {}]
  %s1 = inlined_call_operand.vmem [shape: f32[32,2], index: 1, kind: input, shape index: {}]
  %s2 = inlined_call_operand.vmem [shape: f32[1,2], index: 2, kind: input, shape index: {}]
  %s3 = inlined_call_operand.vmem [shape: f32[2,32], index: 3, kind: input, shape index: {}]
  %s4 = inlined_call_operand.vmem [shape: f32[1,32], index: 4, kind: input, shape index: {}]
  %s5 = inlined_call_operand.vmem [shape: f32[2,32,16,16], index: 5, kind: output, shape index: {}]
  %s6 = sld [smem:[#allocation0]]
  $region30: #{tpu_custom_call.1} parent=0
    _
  %s8 = ssub.s32 1, %s6
  %s9 = scalar_select 0, %s8, %s6
  // Predicated region
  $region2: #{tpu_custom_call.1} parent=0 // pred_check
    _
  $region3: #{tpu_custom_call.1} parent=0 // pred_check_branch
    %11 = sbr.rel (0) target = $region5
  $region4: #{tpu_custom_call.1} parent=0 // pred_region
    _
  $region5: #{tpu_custom_call.1} parent=0 // pred_fallthru
    _
  // Predicated region
  $region6: #{tpu_custom_call.1} parent=0 // pred_check
    _
  $region7: #{tpu_custom_call.1} parent=0 // pred_check_branch
    %13 = sbr.rel (0) target = $region9
  $region8: #{tpu_custom_call.1} parent=0 // pred_region
    _
  $region9: #{tpu_custom_call.1} parent=0 // pred_fallthru
    _
  // Predicated region
  $region10: #{tpu_custom_call.1} parent=0 // pred_check
    _
  $region11: #{tpu_custom_call.1} parent=0 // pred_check_branch
    %15 = sbr.rel (0) target = $region13
  $region12: #{tpu_custom_call.1} parent=0 // pred_region
    _
  $region13: #{tpu_custom_call.1} parent=0 // pred_fallthru
    _
  // Predicated region
  $region14: #{tpu_custom_call.1} parent=0 // pred_check
    _
  $region15: #{tpu_custom_call.1} parent=0 // pred_check_branch
    %17 = sbr.rel (0) target = $region17
  $region16: #{tpu_custom_call.1} parent=0 // pred_region
    _
  $region17: #{tpu_custom_call.1} parent=0 // pred_fallthru
    _
  // Predicated region
  $region18: #{tpu_custom_call.1} parent=0 // pred_check
    _
  $region19: #{tpu_custom_call.1} parent=0 // pred_check_branch
    %19 = sbr.rel (0) target = $region21
  $region20: #{tpu_custom_call.1} parent=0 // pred_region
    _
  $region21: #{tpu_custom_call.1} parent=0 // pred_fallthru
    _
  %v20 = vld [vmem:[%s0] sm:$0xff]
  %v21 = vld [vmem:[%s0 + $0x8] sm:$0xff]
  %v22 = vld [vmem:[%s0 + $0x10] sm:$0xff]
  %v23 = vld [vmem:[%s0 + $0x18] sm:$0xff]
  %v24 = vld [vmem:[%s0 + $0x20] sm:$0xff]
  %v25 = vld [vmem:[%s0 + $0x28] sm:$0xff]
  %v26 = vld [vmem:[%s0 + $0x30] sm:$0xff]
  %v27 = vld [vmem:[%s0 + $0x38] sm:$0xff]
  %v28 = vld [vmem:[%s0 + $0x40] sm:$0xff]
  %v29 = vld [vmem:[%s0 + $0x48] sm:$0xff]
  %v30 = vld [vmem:[%s0 + $0x50] sm:$0xff]
  %v31 = vld [vmem:[%s0 + $0x58] sm:$0xff]
  %v32 = vld [vmem:[%s0 + $0x60] sm:$0xff]
  %v33 = vld [vmem:[%s0 + $0x68] sm:$0xff]
  %v34 = vld [vmem:[%s0 + $0x70] sm:$0xff]
  %v35 = vld [vmem:[%s0 + $0x78] sm:$0xff]
  %v36 = vld [vmem:[%s0 + $0x80] sm:$0xff]
  %v37 = vld [vmem:[%s0 + $0x88] sm:$0xff]
  %v38 = vld [vmem:[%s0 + $0x90] sm:$0xff]
  %v39 = vld [vmem:[%s0 + $0x98] sm:$0xff]
  %v40 = vld [vmem:[%s0 + $0xa0] sm:$0xff]
  %v41 = vld [vmem:[%s0 + $0xa8] sm:$0xff]
  %v42 = vld [vmem:[%s0 + $0xb0] sm:$0xff]
  %v43 = vld [vmem:[%s0 + $0xb8] sm:$0xff]
  %v44 = vld [vmem:[%s0 + $0xc0] sm:$0xff]
  %v45 = vld [vmem:[%s0 + $0xc8] sm:$0xff]
  %v46 = vld [vmem:[%s0 + $0xd0] sm:$0xff]
  %v47 = vld [vmem:[%s0 + $0xd8] sm:$0xff]
  %v48 = vld [vmem:[%s0 + $0xe0] sm:$0xff]
  %v49 = vld [vmem:[%s0 + $0xe8] sm:$0xff]
  %v50 = vld [vmem:[%s0 + $0xf0] sm:$0xff]
  %v51 = vld [vmem:[%s0 + $0xf8] sm:$0xff]
  %v52 = vld [vmem:[%s0 + $0x100] sm:$0xff]
  %v53 = vld [vmem:[%s0 + $0x108] sm:$0xff]
  %v54 = vld [vmem:[%s0 + $0x110] sm:$0xff]
  %v55 = vld [vmem:[%s0 + $0x118] sm:$0xff]
  %v56 = vld [vmem:[%s0 + $0x120] sm:$0xff]
  %v57 = vld [vmem:[%s0 + $0x128] sm:$0xff]
  %v58 = vld [vmem:[%s0 + $0x130] sm:$0xff]
  %v59 = vld [vmem:[%s0 + $0x138] sm:$0xff]
  %v60 = vld [vmem:[%s0 + $0x140] sm:$0xff]
  %v61 = vld [vmem:[%s0 + $0x148] sm:$0xff]
  %v62 = vld [vmem:[%s0 + $0x150] sm:$0xff]
  %v63 = vld [vmem:[%s0 + $0x158] sm:$0xff]
  %v64 = vld [vmem:[%s0 + $0x160] sm:$0xff]
  %v65 = vld [vmem:[%s0 + $0x168] sm:$0xff]
  %v66 = vld [vmem:[%s0 + $0x170] sm:$0xff]
  %v67 = vld [vmem:[%s0 + $0x178] sm:$0xff]
  %v68 = vld [vmem:[%s0 + $0x180] sm:$0xff]
  %v69 = vld [vmem:[%s0 + $0x188] sm:$0xff]
  %v70 = vld [vmem:[%s0 + $0x190] sm:$0xff]
  %v71 = vld [vmem:[%s0 + $0x198] sm:$0xff]
  %v72 = vld [vmem:[%s0 + $0x1a0] sm:$0xff]
  %v73 = vld [vmem:[%s0 + $0x1a8] sm:$0xff]
  %v74 = vld [vmem:[%s0 + $0x1b0] sm:$0xff]
  %v75 = vld [vmem:[%s0 + $0x1b8] sm:$0xff]
  %v76 = vld [vmem:[%s0 + $0x1c0] sm:$0xff]
  %v77 = vld [vmem:[%s0 + $0x1c8] sm:$0xff]
  %v78 = vld [vmem:[%s0 + $0x1d0] sm:$0xff]
  %v79 = vld [vmem:[%s0 + $0x1d8] sm:$0xff]
  %v80 = vld [vmem:[%s0 + $0x1e0] sm:$0xff]
  %v81 = vld [vmem:[%s0 + $0x1e8] sm:$0xff]
  %v82 = vld [vmem:[%s0 + $0x1f0] sm:$0xff]
  %v83 = vld [vmem:[%s0 + $0x1f8] sm:$0xff]
  %v84 = vld [vmem:[%s0 + $0x200] sm:$0xff]
  %v85 = vld [vmem:[%s0 + $0x208] sm:$0xff]
  %v86 = vld [vmem:[%s0 + $0x210] sm:$0xff]
  %v87 = vld [vmem:[%s0 + $0x218] sm:$0xff]
  %v88 = vld [vmem:[%s0 + $0x220] sm:$0xff]
  %v89 = vld [vmem:[%s0 + $0x228] sm:$0xff]
  %v90 = vld [vmem:[%s0 + $0x230] sm:$0xff]
  %v91 = vld [vmem:[%s0 + $0x238] sm:$0xff]
  %v92 = vld [vmem:[%s0 + $0x240] sm:$0xff]
  %v93 = vld [vmem:[%s0 + $0x248] sm:$0xff]
  %v94 = vld [vmem:[%s0 + $0x250] sm:$0xff]
  %v95 = vld [vmem:[%s0 + $0x258] sm:$0xff]
  %v96 = vld [vmem:[%s0 + $0x260] sm:$0xff]
  %v97 = vld [vmem:[%s0 + $0x268] sm:$0xff]
  %v98 = vld [vmem:[%s0 + $0x270] sm:$0xff]
  %v99 = vld [vmem:[%s0 + $0x278] sm:$0xff]
  %v100 = vld [vmem:[%s0 + $0x280] sm:$0xff]
  %v101 = vld [vmem:[%s0 + $0x288] sm:$0xff]
  %v102 = vld [vmem:[%s0 + $0x290] sm:$0xff]
  %v103 = vld [vmem:[%s0 + $0x298] sm:$0xff]
  %v104 = vld [vmem:[%s0 + $0x2a0] sm:$0xff]
  %v105 = vld [vmem:[%s0 + $0x2a8] sm:$0xff]
  %v106 = vld [vmem:[%s0 + $0x2b0] sm:$0xff]
  %v107 = vld [vmem:[%s0 + $0x2b8] sm:$0xff]
  %v108 = vld [vmem:[%s0 + $0x2c0] sm:$0xff]
  %v109 = vld [vmem:[%s0 + $0x2c8] sm:$0xff]
  %v110 = vld [vmem:[%s0 + $0x2d0] sm:$0xff]
  %v111 = vld [vmem:[%s0 + $0x2d8] sm:$0xff]
  %v112 = vld [vmem:[%s0 + $0x2e0] sm:$0xff]
  %v113 = vld [vmem:[%s0 + $0x2e8] sm:$0xff]
  %v114 = vld [vmem:[%s0 + $0x2f0] sm:$0xff]
  %v115 = vld [vmem:[%s0 + $0x2f8] sm:$0xff]
  %v116 = vld [vmem:[%s0 + $0x300] sm:$0xff]
  %v117 = vld [vmem:[%s0 + $0x308] sm:$0xff]
  %v118 = vld [vmem:[%s0 + $0x310] sm:$0xff]
  %v119 = vld [vmem:[%s0 + $0x318] sm:$0xff]
  %v120 = vld [vmem:[%s0 + $0x320] sm:$0xff]
  %v121 = vld [vmem:[%s0 + $0x328] sm:$0xff]
  %v122 = vld [vmem:[%s0 + $0x330] sm:$0xff]
  %v123 = vld [vmem:[%s0 + $0x338] sm:$0xff]
  %v124 = vld [vmem:[%s0 + $0x340] sm:$0xff]
  %v125 = vld [vmem:[%s0 + $0x348] sm:$0xff]
  %v126 = vld [vmem:[%s0 + $0x350] sm:$0xff]
  %v127 = vld [vmem:[%s0 + $0x358] sm:$0xff]
  %v128 = vld [vmem:[%s0 + $0x360] sm:$0xff]
  %v129 = vld [vmem:[%s0 + $0x368] sm:$0xff]
  %v130 = vld [vmem:[%s0 + $0x370] sm:$0xff]
  %v131 = vld [vmem:[%s0 + $0x378] sm:$0xff]
  %v132 = vld [vmem:[%s0 + $0x380] sm:$0xff]
  %v133 = vld [vmem:[%s0 + $0x388] sm:$0xff]
  %v134 = vld [vmem:[%s0 + $0x390] sm:$0xff]
  %v135 = vld [vmem:[%s0 + $0x398] sm:$0xff]
  %v136 = vld [vmem:[%s0 + $0x3a0] sm:$0xff]
  %v137 = vld [vmem:[%s0 + $0x3a8] sm:$0xff]
  %v138 = vld [vmem:[%s0 + $0x3b0] sm:$0xff]
  %v139 = vld [vmem:[%s0 + $0x3b8] sm:$0xff]
  %v140 = vld [vmem:[%s0 + $0x3c0] sm:$0xff]
  %v141 = vld [vmem:[%s0 + $0x3c8] sm:$0xff]
  %v142 = vld [vmem:[%s0 + $0x3d0] sm:$0xff]
  %v143 = vld [vmem:[%s0 + $0x3d8] sm:$0xff]
  %v144 = vld [vmem:[%s0 + $0x3e0] sm:$0xff]
  %v145 = vld [vmem:[%s0 + $0x3e8] sm:$0xff]
  %v146 = vld [vmem:[%s0 + $0x3f0] sm:$0xff]
  %v147 = vld [vmem:[%s0 + $0x3f8] sm:$0xff]
  %vm148 = vcmask 130048
  %v149 = vsel %vm148, %v20, 0.0
  %150 = vadd.xlane.f32.xlu0 %v149
  %v151 = vpop.xlane.xlu0 %150
  %v152 = vsel %vm148, %v21, 0.0
  %153 = vadd.xlane.f32.xlu0 %v152
  %v154 = vpop.xlane.xlu0 %153
  %v155 = vsel %vm148, %v22, 0.0
  %156 = vadd.xlane.f32.xlu0 %v155
  %v157 = vpop.xlane.xlu0 %156
  %v158 = vsel %vm148, %v23, 0.0
  %159 = vadd.xlane.f32.xlu0 %v158
  %v160 = vpop.xlane.xlu0 %159
  %v161 = vsel %vm148, %v24, 0.0
  %162 = vadd.xlane.f32.xlu0 %v161
  %v163 = vpop.xlane.xlu0 %162
  %v164 = vsel %vm148, %v25, 0.0
  %165 = vadd.xlane.f32.xlu0 %v164
  %v166 = vpop.xlane.xlu0 %165
  %v167 = vsel %vm148, %v26, 0.0
  %168 = vadd.xlane.f32.xlu0 %v167
  %v169 = vpop.xlane.xlu0 %168
  %v170 = vsel %vm148, %v27, 0.0
  %171 = vadd.xlane.f32.xlu0 %v170
  %v172 = vpop.xlane.xlu0 %171
  %v173 = vsel %vm148, %v28, 0.0
  %174 = vadd.xlane.f32.xlu0 %v173
  %v175 = vpop.xlane.xlu0 %174
  %v176 = vsel %vm148, %v29, 0.0
  %177 = vadd.xlane.f32.xlu0 %v176
  %v178 = vpop.xlane.xlu0 %177
  %v179 = vsel %vm148, %v30, 0.0
  %180 = vadd.xlane.f32.xlu0 %v179
  %v181 = vpop.xlane.xlu0 %180
  %v182 = vsel %vm148, %v31, 0.0
  %183 = vadd.xlane.f32.xlu0 %v182
  %v184 = vpop.xlane.xlu0 %183
  %v185 = vsel %vm148, %v32, 0.0
  %186 = vadd.xlane.f32.xlu0 %v185
  %v187 = vpop.xlane.xlu0 %186
  %v188 = vsel %vm148, %v33, 0.0
  %189 = vadd.xlane.f32.xlu0 %v188
  %v190 = vpop.xlane.xlu0 %189
  %v191 = vsel %vm148, %v34, 0.0
  %192 = vadd.xlane.f32.xlu0 %v191
  %v193 = vpop.xlane.xlu0 %192
  %v194 = vsel %vm148, %v35, 0.0
  %195 = vadd.xlane.f32.xlu0 %v194
  %v196 = vpop.xlane.xlu0 %195
  %v197 = vsel %vm148, %v36, 0.0
  %198 = vadd.xlane.f32.xlu0 %v197
  %v199 = vpop.xlane.xlu0 %198
  %v200 = vsel %vm148, %v37, 0.0
  %201 = vadd.xlane.f32.xlu0 %v200
  %v202 = vpop.xlane.xlu0 %201
  %v203 = vsel %vm148, %v38, 0.0
  %204 = vadd.xlane.f32.xlu0 %v203
  %v205 = vpop.xlane.xlu0 %204
  %v206 = vsel %vm148, %v39, 0.0
  %207 = vadd.xlane.f32.xlu0 %v206
  %v208 = vpop.xlane.xlu0 %207
  %v209 = vsel %vm148, %v40, 0.0
  %210 = vadd.xlane.f32.xlu0 %v209
  %v211 = vpop.xlane.xlu0 %210
  %v212 = vsel %vm148, %v41, 0.0
  %213 = vadd.xlane.f32.xlu0 %v212
  %v214 = vpop.xlane.xlu0 %213
  %v215 = vsel %vm148, %v42, 0.0
  %216 = vadd.xlane.f32.xlu0 %v215
  %v217 = vpop.xlane.xlu0 %216
  %v218 = vsel %vm148, %v43, 0.0
  %219 = vadd.xlane.f32.xlu0 %v218
  %v220 = vpop.xlane.xlu0 %219
  %v221 = vsel %vm148, %v44, 0.0
  %222 = vadd.xlane.f32.xlu0 %v221
  %v223 = vpop.xlane.xlu0 %222
  %v224 = vsel %vm148, %v45, 0.0
  %225 = vadd.xlane.f32.xlu0 %v224
  %v226 = vpop.xlane.xlu0 %225
  %v227 = vsel %vm148, %v46, 0.0
  %228 = vadd.xlane.f32.xlu0 %v227
  %v229 = vpop.xlane.xlu0 %228
  %v230 = vsel %vm148, %v47, 0.0
  %231 = vadd.xlane.f32.xlu0 %v230
  %v232 = vpop.xlane.xlu0 %231
  %v233 = vsel %vm148, %v48, 0.0
  %234 = vadd.xlane.f32.xlu0 %v233
  %v235 = vpop.xlane.xlu0 %234
  %v236 = vsel %vm148, %v49, 0.0
  %237 = vadd.xlane.f32.xlu0 %v236
  %v238 = vpop.xlane.xlu0 %237
  %v239 = vsel %vm148, %v50, 0.0
  %240 = vadd.xlane.f32.xlu0 %v239
  %v241 = vpop.xlane.xlu0 %240
  %v242 = vsel %vm148, %v51, 0.0
  %243 = vadd.xlane.f32.xlu0 %v242
  %v244 = vpop.xlane.xlu0 %243
  %v245 = vsel %vm148, %v52, 0.0
  %246 = vadd.xlane.f32.xlu0 %v245
  %v247 = vpop.xlane.xlu0 %246
  %v248 = vsel %vm148, %v53, 0.0
  %249 = vadd.xlane.f32.xlu0 %v248
  %v250 = vpop.xlane.xlu0 %249
  %v251 = vsel %vm148, %v54, 0.0
  %252 = vadd.xlane.f32.xlu0 %v251
  %v253 = vpop.xlane.xlu0 %252
  %v254 = vsel %vm148, %v55, 0.0
  %255 = vadd.xlane.f32.xlu0 %v254
  %v256 = vpop.xlane.xlu0 %255
  %v257 = vsel %vm148, %v56, 0.0
  %258 = vadd.xlane.f32.xlu0 %v257
  %v259 = vpop.xlane.xlu0 %258
  %v260 = vsel %vm148, %v57, 0.0
  %261 = vadd.xlane.f32.xlu0 %v260
  %v262 = vpop.xlane.xlu0 %261
  %v263 = vsel %vm148, %v58, 0.0
  %264 = vadd.xlane.f32.xlu0 %v263
  %v265 = vpop.xlane.xlu0 %264
  %v266 = vsel %vm148, %v59, 0.0
  %267 = vadd.xlane.f32.xlu0 %v266
  %v268 = vpop.xlane.xlu0 %267
  %v269 = vsel %vm148, %v60, 0.0
  %270 = vadd.xlane.f32.xlu0 %v269
  %v271 = vpop.xlane.xlu0 %270
  %v272 = vsel %vm148, %v61, 0.0
  %273 = vadd.xlane.f32.xlu0 %v272
  %v274 = vpop.xlane.xlu0 %273
  %v275 = vsel %vm148, %v62, 0.0
  %276 = vadd.xlane.f32.xlu0 %v275
  %v277 = vpop.xlane.xlu0 %276
  %v278 = vsel %vm148, %v63, 0.0
  %279 = vadd.xlane.f32.xlu0 %v278
  %v280 = vpop.xlane.xlu0 %279
  %v281 = vsel %vm148, %v64, 0.0
  %282 = vadd.xlane.f32.xlu0 %v281
  %v283 = vpop.xlane.xlu0 %282
  %v284 = vsel %vm148, %v65, 0.0
  %285 = vadd.xlane.f32.xlu0 %v284
  %v286 = vpop.xlane.xlu0 %285
  %v287 = vsel %vm148, %v66, 0.0
  %288 = vadd.xlane.f32.xlu0 %v287
  %v289 = vpop.xlane.xlu0 %288
  %v290 = vsel %vm148, %v67, 0.0
  %291 = vadd.xlane.f32.xlu0 %v290
  %v292 = vpop.xlane.xlu0 %291
  %v293 = vsel %vm148, %v68, 0.0
  %294 = vadd.xlane.f32.xlu0 %v293
  %v295 = vpop.xlane.xlu0 %294
  %v296 = vsel %vm148, %v69, 0.0
  %297 = vadd.xlane.f32.xlu0 %v296
  %v298 = vpop.xlane.xlu0 %297
  %v299 = vsel %vm148, %v70, 0.0
  %300 = vadd.xlane.f32.xlu0 %v299
  %v301 = vpop.xlane.xlu0 %300
  %v302 = vsel %vm148, %v71, 0.0
  %303 = vadd.xlane.f32.xlu0 %v302
  %v304 = vpop.xlane.xlu0 %303
  %v305 = vsel %vm148, %v72, 0.0
  %306 = vadd.xlane.f32.xlu0 %v305
  %v307 = vpop.xlane.xlu0 %306
  %v308 = vsel %vm148, %v73, 0.0
  %309 = vadd.xlane.f32.xlu0 %v308
  %v310 = vpop.xlane.xlu0 %309
  %v311 = vsel %vm148, %v74, 0.0
  %312 = vadd.xlane.f32.xlu0 %v311
  %v313 = vpop.xlane.xlu0 %312
  %v314 = vsel %vm148, %v75, 0.0
  %315 = vadd.xlane.f32.xlu0 %v314
  %v316 = vpop.xlane.xlu0 %315
  %v317 = vsel %vm148, %v76, 0.0
  %318 = vadd.xlane.f32.xlu0 %v317
  %v319 = vpop.xlane.xlu0 %318
  %v320 = vsel %vm148, %v77, 0.0
  %321 = vadd.xlane.f32.xlu0 %v320
  %v322 = vpop.xlane.xlu0 %321
  %v323 = vsel %vm148, %v78, 0.0
  %324 = vadd.xlane.f32.xlu0 %v323
  %v325 = vpop.xlane.xlu0 %324
  %v326 = vsel %vm148, %v79, 0.0
  %327 = vadd.xlane.f32.xlu0 %v326
  %v328 = vpop.xlane.xlu0 %327
  %v329 = vsel %vm148, %v80, 0.0
  %330 = vadd.xlane.f32.xlu0 %v329
  %v331 = vpop.xlane.xlu0 %330
  %v332 = vsel %vm148, %v81, 0.0
  %333 = vadd.xlane.f32.xlu0 %v332
  %v334 = vpop.xlane.xlu0 %333
  %v335 = vsel %vm148, %v82, 0.0
  %336 = vadd.xlane.f32.xlu0 %v335
  %v337 = vpop.xlane.xlu0 %336
  %v338 = vsel %vm148, %v83, 0.0
  %339 = vadd.xlane.f32.xlu0 %v338
  %v340 = vpop.xlane.xlu0 %339
  %v341 = vsel %vm148, %v84, 0.0
  %342 = vadd.xlane.f32.xlu0 %v341
  %v343 = vpop.xlane.xlu0 %342
  %v344 = vsel %vm148, %v85, 0.0
  %345 = vadd.xlane.f32.xlu0 %v344
  %v346 = vpop.xlane.xlu0 %345
  %v347 = vsel %vm148, %v86, 0.0
  %348 = vadd.xlane.f32.xlu0 %v347
  %v349 = vpop.xlane.xlu0 %348
  %v350 = vsel %vm148, %v87, 0.0
  %351 = vadd.xlane.f32.xlu0 %v350
  %v352 = vpop.xlane.xlu0 %351
  %v353 = vsel %vm148, %v88, 0.0
  %354 = vadd.xlane.f32.xlu0 %v353
  %v355 = vpop.xlane.xlu0 %354
  %v356 = vsel %vm148, %v89, 0.0
  %357 = vadd.xlane.f32.xlu0 %v356
  %v358 = vpop.xlane.xlu0 %357
  %v359 = vsel %vm148, %v90, 0.0
  %360 = vadd.xlane.f32.xlu0 %v359
  %v361 = vpop.xlane.xlu0 %360
  %v362 = vsel %vm148, %v91, 0.0
  %363 = vadd.xlane.f32.xlu0 %v362
  %v364 = vpop.xlane.xlu0 %363
  %v365 = vsel %vm148, %v92, 0.0
  %366 = vadd.xlane.f32.xlu0 %v365
  %v367 = vpop.xlane.xlu0 %366
  %v368 = vsel %vm148, %v93, 0.0
  %369 = vadd.xlane.f32.xlu0 %v368
  %v370 = vpop.xlane.xlu0 %369
  %v371 = vsel %vm148, %v94, 0.0
  %372 = vadd.xlane.f32.xlu0 %v371
  %v373 = vpop.xlane.xlu0 %372
  %v374 = vsel %vm148, %v95, 0.0
  %375 = vadd.xlane.f32.xlu0 %v374
  %v376 = vpop.xlane.xlu0 %375
  %v377 = vsel %vm148, %v96, 0.0
  %378 = vadd.xlane.f32.xlu0 %v377
  %v379 = vpop.xlane.xlu0 %378
  %v380 = vsel %vm148, %v97, 0.0
  %381 = vadd.xlane.f32.xlu0 %v380
  %v382 = vpop.xlane.xlu0 %381
  %v383 = vsel %vm148, %v98, 0.0
  %384 = vadd.xlane.f32.xlu0 %v383
  %v385 = vpop.xlane.xlu0 %384
  %v386 = vsel %vm148, %v99, 0.0
  %387 = vadd.xlane.f32.xlu0 %v386
  %v388 = vpop.xlane.xlu0 %387
  %v389 = vsel %vm148, %v100, 0.0
  %390 = vadd.xlane.f32.xlu0 %v389
  %v391 = vpop.xlane.xlu0 %390
  %v392 = vsel %vm148, %v101, 0.0
  %393 = vadd.xlane.f32.xlu0 %v392
  %v394 = vpop.xlane.xlu0 %393
  %v395 = vsel %vm148, %v102, 0.0
  %396 = vadd.xlane.f32.xlu0 %v395
  %v397 = vpop.xlane.xlu0 %396
  %v398 = vsel %vm148, %v103, 0.0
  %399 = vadd.xlane.f32.xlu0 %v398
  %v400 = vpop.xlane.xlu0 %399
  %v401 = vsel %vm148, %v104, 0.0
  %402 = vadd.xlane.f32.xlu0 %v401
  %v403 = vpop.xlane.xlu0 %402
  %v404 = vsel %vm148, %v105, 0.0
  %405 = vadd.xlane.f32.xlu0 %v404
  %v406 = vpop.xlane.xlu0 %405
  %v407 = vsel %vm148, %v106, 0.0
  %408 = vadd.xlane.f32.xlu0 %v407
  %v409 = vpop.xlane.xlu0 %408
  %v410 = vsel %vm148, %v107, 0.0
  %411 = vadd.xlane.f32.xlu0 %v410
  %v412 = vpop.xlane.xlu0 %411
  %v413 = vsel %vm148, %v108, 0.0
  %414 = vadd.xlane.f32.xlu0 %v413
  %v415 = vpop.xlane.xlu0 %414
  %v416 = vsel %vm148, %v109, 0.0
  %417 = vadd.xlane.f32.xlu0 %v416
  %v418 = vpop.xlane.xlu0 %417
  %v419 = vsel %vm148, %v110, 0.0
  %420 = vadd.xlane.f32.xlu0 %v419
  %v421 = vpop.xlane.xlu0 %420
  %v422 = vsel %vm148, %v111, 0.0
  %423 = vadd.xlane.f32.xlu0 %v422
  %v424 = vpop.xlane.xlu0 %423
  %v425 = vsel %vm148, %v112, 0.0
  %426 = vadd.xlane.f32.xlu0 %v425
  %v427 = vpop.xlane.xlu0 %426
  %v428 = vsel %vm148, %v113, 0.0
  %429 = vadd.xlane.f32.xlu0 %v428
  %v430 = vpop.xlane.xlu0 %429
  %v431 = vsel %vm148, %v114, 0.0
  %432 = vadd.xlane.f32.xlu0 %v431
  %v433 = vpop.xlane.xlu0 %432
  %v434 = vsel %vm148, %v115, 0.0
  %435 = vadd.xlane.f32.xlu0 %v434
  %v436 = vpop.xlane.xlu0 %435
  %v437 = vsel %vm148, %v116, 0.0
  %438 = vadd.xlane.f32.xlu0 %v437
  %v439 = vpop.xlane.xlu0 %438
  %v440 = vsel %vm148, %v117, 0.0
  %441 = vadd.xlane.f32.xlu0 %v440
  %v442 = vpop.xlane.xlu0 %441
  %v443 = vsel %vm148, %v118, 0.0
  %444 = vadd.xlane.f32.xlu0 %v443
  %v445 = vpop.xlane.xlu0 %444
  %v446 = vsel %vm148, %v119, 0.0
  %447 = vadd.xlane.f32.xlu0 %v446
  %v448 = vpop.xlane.xlu0 %447
  %v449 = vsel %vm148, %v120, 0.0
  %450 = vadd.xlane.f32.xlu0 %v449
  %v451 = vpop.xlane.xlu0 %450
  %v452 = vsel %vm148, %v121, 0.0
  %453 = vadd.xlane.f32.xlu0 %v452
  %v454 = vpop.xlane.xlu0 %453
  %v455 = vsel %vm148, %v122, 0.0
  %456 = vadd.xlane.f32.xlu0 %v455
  %v457 = vpop.xlane.xlu0 %456
  %v458 = vsel %vm148, %v123, 0.0
  %459 = vadd.xlane.f32.xlu0 %v458
  %v460 = vpop.xlane.xlu0 %459
  %v461 = vsel %vm148, %v124, 0.0
  %462 = vadd.xlane.f32.xlu0 %v461
  %v463 = vpop.xlane.xlu0 %462
  %v464 = vsel %vm148, %v125, 0.0
  %465 = vadd.xlane.f32.xlu0 %v464
  %v466 = vpop.xlane.xlu0 %465
  %v467 = vsel %vm148, %v126, 0.0
  %468 = vadd.xlane.f32.xlu0 %v467
  %v469 = vpop.xlane.xlu0 %468
  %v470 = vsel %vm148, %v127, 0.0
  %471 = vadd.xlane.f32.xlu0 %v470
  %v472 = vpop.xlane.xlu0 %471
  %v473 = vsel %vm148, %v128, 0.0
  %474 = vadd.xlane.f32.xlu0 %v473
  %v475 = vpop.xlane.xlu0 %474
  %v476 = vsel %vm148, %v129, 0.0
  %477 = vadd.xlane.f32.xlu0 %v476
  %v478 = vpop.xlane.xlu0 %477
  %v479 = vsel %vm148, %v130, 0.0
  %480 = vadd.xlane.f32.xlu0 %v479
  %v481 = vpop.xlane.xlu0 %480
  %v482 = vsel %vm148, %v131, 0.0
  %483 = vadd.xlane.f32.xlu0 %v482
  %v484 = vpop.xlane.xlu0 %483
  %v485 = vsel %vm148, %v132, 0.0
  %486 = vadd.xlane.f32.xlu0 %v485
  %v487 = vpop.xlane.xlu0 %486
  %v488 = vsel %vm148, %v133, 0.0
  %489 = vadd.xlane.f32.xlu0 %v488
  %v490 = vpop.xlane.xlu0 %489
  %v491 = vsel %vm148, %v134, 0.0
  %492 = vadd.xlane.f32.xlu0 %v491
  %v493 = vpop.xlane.xlu0 %492
  %v494 = vsel %vm148, %v135, 0.0
  %495 = vadd.xlane.f32.xlu0 %v494
  %v496 = vpop.xlane.xlu0 %495
  %v497 = vsel %vm148, %v136, 0.0
  %498 = vadd.xlane.f32.xlu0 %v497
  %v499 = vpop.xlane.xlu0 %498
  %v500 = vsel %vm148, %v137, 0.0
  %501 = vadd.xlane.f32.xlu0 %v500
  %v502 = vpop.xlane.xlu0 %501
  %v503 = vsel %vm148, %v138, 0.0
  %504 = vadd.xlane.f32.xlu0 %v503
  %v505 = vpop.xlane.xlu0 %504
  %v506 = vsel %vm148, %v139, 0.0
  %507 = vadd.xlane.f32.xlu0 %v506
  %v508 = vpop.xlane.xlu0 %507
  %v509 = vsel %vm148, %v140, 0.0
  %510 = vadd.xlane.f32.xlu0 %v509
  %v511 = vpop.xlane.xlu0 %510
  %v512 = vsel %vm148, %v141, 0.0
  %513 = vadd.xlane.f32.xlu0 %v512
  %v514 = vpop.xlane.xlu0 %513
  %v515 = vsel %vm148, %v142, 0.0
  %516 = vadd.xlane.f32.xlu0 %v515
  %v517 = vpop.xlane.xlu0 %516
  %v518 = vsel %vm148, %v143, 0.0
  %519 = vadd.xlane.f32.xlu0 %v518
  %v520 = vpop.xlane.xlu0 %519
  %v521 = vsel %vm148, %v144, 0.0
  %522 = vadd.xlane.f32.xlu0 %v521
  %v523 = vpop.xlane.xlu0 %522
  %v524 = vsel %vm148, %v145, 0.0
  %525 = vadd.xlane.f32.xlu0 %v524
  %v526 = vpop.xlane.xlu0 %525
  %v527 = vsel %vm148, %v146, 0.0
  %528 = vadd.xlane.f32.xlu0 %v527
  %v529 = vpop.xlane.xlu0 %528
  %v530 = vsel %vm148, %v147, 0.0
  %531 = vadd.xlane.f32.xlu0 %v530
  %v532 = vpop.xlane.xlu0 %531
  %v661 = vlaneseq
  %v662 = vand.u32 %v661, 127
  %v663 = vlaneseq
  %v664 = vshrl.u32 %v663, 7
  %v665 = vsub.s32 %v662, %v664
  %v666 = vrot.slane %v151, %v665
  %v667 = vadd.s32 %v662, 4294967288
  %v668 = vlaneseq
  %v669 = vshrl.u32 %v668, 7
  %v670 = vsub.s32 %v667, %v669
  %v671 = vrot.slane %v154, %v670
  %vm672 = vcmask 130112
  %v673 = vsel %vm672, %v671, %v666
  %v674 = vlaneseq
  %v675 = vshrl.u32 %v674, 7
  %v676 = vsub.s32 %v662, %v675
  %v677 = vrot.slane %v157, %v676
  %v678 = vlaneseq
  %v679 = vshrl.u32 %v678, 7
  %v680 = vsub.s32 %v667, %v679
  %v681 = vrot.slane %v160, %v680
  %v682 = vsel %vm672, %v681, %v677
  %v683 = vlaneseq
  %v684 = vshrl.u32 %v683, 7
  %v685 = vsub.s32 %v662, %v684
  %v686 = vrot.slane %v163, %v685
  %v687 = vlaneseq
  %v688 = vshrl.u32 %v687, 7
  %v689 = vsub.s32 %v667, %v688
  %v690 = vrot.slane %v166, %v689
  %v691 = vsel %vm672, %v690, %v686
  %v692 = vlaneseq
  %v693 = vshrl.u32 %v692, 7
  %v694 = vsub.s32 %v662, %v693
  %v695 = vrot.slane %v169, %v694
  %v696 = vlaneseq
  %v697 = vshrl.u32 %v696, 7
  %v698 = vsub.s32 %v667, %v697
  %v699 = vrot.slane %v172, %v698
  %v700 = vsel %vm672, %v699, %v695
  %v701 = vlaneseq
  %v702 = vshrl.u32 %v701, 7
  %v703 = vsub.s32 %v662, %v702
  %v704 = vrot.slane %v175, %v703
  %v705 = vlaneseq
  %v706 = vshrl.u32 %v705, 7
  %v707 = vsub.s32 %v667, %v706
  %v708 = vrot.slane %v178, %v707
  %v709 = vsel %vm672, %v708, %v704
  %v710 = vlaneseq
  %v711 = vshrl.u32 %v710, 7
  %v712 = vsub.s32 %v662, %v711
  %v713 = vrot.slane %v181, %v712
  %v714 = vlaneseq
  %v715 = vshrl.u32 %v714, 7
  %v716 = vsub.s32 %v667, %v715
  %v717 = vrot.slane %v184, %v716
  %v718 = vsel %vm672, %v717, %v713
  %v719 = vlaneseq
  %v720 = vshrl.u32 %v719, 7
  %v721 = vsub.s32 %v662, %v720
  %v722 = vrot.slane %v187, %v721
  %v723 = vlaneseq
  %v724 = vshrl.u32 %v723, 7
  %v725 = vsub.s32 %v667, %v724
  %v726 = vrot.slane %v190, %v725
  %v727 = vsel %vm672, %v726, %v722
  %v728 = vlaneseq
  %v729 = vshrl.u32 %v728, 7
  %v730 = vsub.s32 %v662, %v729
  %v731 = vrot.slane %v193, %v730
  %v732 = vlaneseq
  %v733 = vshrl.u32 %v732, 7
  %v734 = vsub.s32 %v667, %v733
  %v735 = vrot.slane %v196, %v734
  %v736 = vsel %vm672, %v735, %v731
  %v737 = vlaneseq
  %v738 = vshrl.u32 %v737, 7
  %v739 = vsub.s32 %v662, %v738
  %v740 = vrot.slane %v199, %v739
  %v741 = vlaneseq
  %v742 = vshrl.u32 %v741, 7
  %v743 = vsub.s32 %v667, %v742
  %v744 = vrot.slane %v202, %v743
  %v745 = vsel %vm672, %v744, %v740
  %v746 = vlaneseq
  %v747 = vshrl.u32 %v746, 7
  %v748 = vsub.s32 %v662, %v747
  %v749 = vrot.slane %v205, %v748
  %v750 = vlaneseq
  %v751 = vshrl.u32 %v750, 7
  %v752 = vsub.s32 %v667, %v751
  %v753 = vrot.slane %v208, %v752
  %v754 = vsel %vm672, %v753, %v749
  %v755 = vlaneseq
  %v756 = vshrl.u32 %v755, 7
  %v757 = vsub.s32 %v662, %v756
  %v758 = vrot.slane %v211, %v757
  %v759 = vlaneseq
  %v760 = vshrl.u32 %v759, 7
  %v761 = vsub.s32 %v667, %v760
  %v762 = vrot.slane %v214, %v761
  %v763 = vsel %vm672, %v762, %v758
  %v764 = vlaneseq
  %v765 = vshrl.u32 %v764, 7
  %v766 = vsub.s32 %v662, %v765
  %v767 = vrot.slane %v217, %v766
  %v768 = vlaneseq
  %v769 = vshrl.u32 %v768, 7
  %v770 = vsub.s32 %v667, %v769
  %v771 = vrot.slane %v220, %v770
  %v772 = vsel %vm672, %v771, %v767
  %v773 = vlaneseq
  %v774 = vshrl.u32 %v773, 7
  %v775 = vsub.s32 %v662, %v774
  %v776 = vrot.slane %v223, %v775
  %v777 = vlaneseq
  %v778 = vshrl.u32 %v777, 7
  %v779 = vsub.s32 %v667, %v778
  %v780 = vrot.slane %v226, %v779
  %v781 = vsel %vm672, %v780, %v776
  %v782 = vlaneseq
  %v783 = vshrl.u32 %v782, 7
  %v784 = vsub.s32 %v662, %v783
  %v785 = vrot.slane %v229, %v784
  %v786 = vlaneseq
  %v787 = vshrl.u32 %v786, 7
  %v788 = vsub.s32 %v667, %v787
  %v789 = vrot.slane %v232, %v788
  %v790 = vsel %vm672, %v789, %v785
  %v791 = vlaneseq
  %v792 = vshrl.u32 %v791, 7
  %v793 = vsub.s32 %v662, %v792
  %v794 = vrot.slane %v235, %v793
  %v795 = vlaneseq
  %v796 = vshrl.u32 %v795, 7
  %v797 = vsub.s32 %v667, %v796
  %v798 = vrot.slane %v238, %v797
  %v799 = vsel %vm672, %v798, %v794
  %v800 = vlaneseq
  %v801 = vshrl.u32 %v800, 7
  %v802 = vsub.s32 %v662, %v801
  %v803 = vrot.slane %v241, %v802
  %v804 = vlaneseq
  %v805 = vshrl.u32 %v804, 7
  %v806 = vsub.s32 %v667, %v805
  %v807 = vrot.slane %v244, %v806
  %v808 = vsel %vm672, %v807, %v803
  %v809 = vlaneseq
  %v810 = vshrl.u32 %v809, 7
  %v811 = vsub.s32 %v662, %v810
  %v812 = vrot.slane %v247, %v811
  %v813 = vlaneseq
  %v814 = vshrl.u32 %v813, 7
  %v815 = vsub.s32 %v667, %v814
  %v816 = vrot.slane %v250, %v815
  %v817 = vsel %vm672, %v816, %v812
  %v818 = vlaneseq
  %v819 = vshrl.u32 %v818, 7
  %v820 = vsub.s32 %v662, %v819
  %v821 = vrot.slane %v253, %v820
  %v822 = vlaneseq
  %v823 = vshrl.u32 %v822, 7
  %v824 = vsub.s32 %v667, %v823
  %v825 = vrot.slane %v256, %v824
  %v826 = vsel %vm672, %v825, %v821
  %v827 = vlaneseq
  %v828 = vshrl.u32 %v827, 7
  %v829 = vsub.s32 %v662, %v828
  %v830 = vrot.slane %v259, %v829
  %v831 = vlaneseq
  %v832 = vshrl.u32 %v831, 7
  %v833 = vsub.s32 %v667, %v832
  %v834 = vrot.slane %v262, %v833
  %v835 = vsel %vm672, %v834, %v830
  %v836 = vlaneseq
  %v837 = vshrl.u32 %v836, 7
  %v838 = vsub.s32 %v662, %v837
  %v839 = vrot.slane %v265, %v838
  %v840 = vlaneseq
  %v841 = vshrl.u32 %v840, 7
  %v842 = vsub.s32 %v667, %v841
  %v843 = vrot.slane %v268, %v842
  %v844 = vsel %vm672, %v843, %v839
  %v845 = vlaneseq
  %v846 = vshrl.u32 %v845, 7
  %v847 = vsub.s32 %v662, %v846
  %v848 = vrot.slane %v271, %v847
  %v849 = vlaneseq
  %v850 = vshrl.u32 %v849, 7
  %v851 = vsub.s32 %v667, %v850
  %v852 = vrot.slane %v274, %v851
  %v853 = vsel %vm672, %v852, %v848
  %v854 = vlaneseq
  %v855 = vshrl.u32 %v854, 7
  %v856 = vsub.s32 %v662, %v855
  %v857 = vrot.slane %v277, %v856
  %v858 = vlaneseq
  %v859 = vshrl.u32 %v858, 7
  %v860 = vsub.s32 %v667, %v859
  %v861 = vrot.slane %v280, %v860
  %v862 = vsel %vm672, %v861, %v857
  %v863 = vlaneseq
  %v864 = vshrl.u32 %v863, 7
  %v865 = vsub.s32 %v662, %v864
  %v866 = vrot.slane %v283, %v865
  %v867 = vlaneseq
  %v868 = vshrl.u32 %v867, 7
  %v869 = vsub.s32 %v667, %v868
  %v870 = vrot.slane %v286, %v869
  %v871 = vsel %vm672, %v870, %v866
  %v872 = vlaneseq
  %v873 = vshrl.u32 %v872, 7
  %v874 = vsub.s32 %v662, %v873
  %v875 = vrot.slane %v289, %v874
  %v876 = vlaneseq
  %v877 = vshrl.u32 %v876, 7
  %v878 = vsub.s32 %v667, %v877
  %v879 = vrot.slane %v292, %v878
  %v880 = vsel %vm672, %v879, %v875
  %v881 = vlaneseq
  %v882 = vshrl.u32 %v881, 7
  %v883 = vsub.s32 %v662, %v882
  %v884 = vrot.slane %v295, %v883
  %v885 = vlaneseq
  %v886 = vshrl.u32 %v885, 7
  %v887 = vsub.s32 %v667, %v886
  %v888 = vrot.slane %v298, %v887
  %v889 = vsel %vm672, %v888, %v884
  %v890 = vlaneseq
  %v891 = vshrl.u32 %v890, 7
  %v892 = vsub.s32 %v662, %v891
  %v893 = vrot.slane %v301, %v892
  %v894 = vlaneseq
  %v895 = vshrl.u32 %v894, 7
  %v896 = vsub.s32 %v667, %v895
  %v897 = vrot.slane %v304, %v896
  %v898 = vsel %vm672, %v897, %v893
  %v899 = vlaneseq
  %v900 = vshrl.u32 %v899, 7
  %v901 = vsub.s32 %v662, %v900
  %v902 = vrot.slane %v307, %v901
  %v903 = vlaneseq
  %v904 = vshrl.u32 %v903, 7
  %v905 = vsub.s32 %v667, %v904
  %v906 = vrot.slane %v310, %v905
  %v907 = vsel %vm672, %v906, %v902
  %v908 = vlaneseq
  %v909 = vshrl.u32 %v908, 7
  %v910 = vsub.s32 %v662, %v909
  %v911 = vrot.slane %v313, %v910
  %v912 = vlaneseq
  %v913 = vshrl.u32 %v912, 7
  %v914 = vsub.s32 %v667, %v913
  %v915 = vrot.slane %v316, %v914
  %v916 = vsel %vm672, %v915, %v911
  %v917 = vlaneseq
  %v918 = vshrl.u32 %v917, 7
  %v919 = vsub.s32 %v662, %v918
  %v920 = vrot.slane %v319, %v919
  %v921 = vlaneseq
  %v922 = vshrl.u32 %v921, 7
  %v923 = vsub.s32 %v667, %v922
  %v924 = vrot.slane %v322, %v923
  %v925 = vsel %vm672, %v924, %v920
  %v926 = vlaneseq
  %v927 = vshrl.u32 %v926, 7
  %v928 = vsub.s32 %v662, %v927
  %v929 = vrot.slane %v325, %v928
  %v930 = vlaneseq
  %v931 = vshrl.u32 %v930, 7
  %v932 = vsub.s32 %v667, %v931
  %v933 = vrot.slane %v328, %v932
  %v934 = vsel %vm672, %v933, %v929
  %v935 = vlaneseq
  %v936 = vshrl.u32 %v935, 7
  %v937 = vsub.s32 %v662, %v936
  %v938 = vrot.slane %v331, %v937
  %v939 = vlaneseq
  %v940 = vshrl.u32 %v939, 7
  %v941 = vsub.s32 %v667, %v940
  %v942 = vrot.slane %v334, %v941
  %v943 = vsel %vm672, %v942, %v938
  %v944 = vlaneseq
  %v945 = vshrl.u32 %v944, 7
  %v946 = vsub.s32 %v662, %v945
  %v947 = vrot.slane %v337, %v946
  %v948 = vlaneseq
  %v949 = vshrl.u32 %v948, 7
  %v950 = vsub.s32 %v667, %v949
  %v951 = vrot.slane %v340, %v950
  %v952 = vsel %vm672, %v951, %v947
  %v953 = vlaneseq
  %v954 = vshrl.u32 %v953, 7
  %v955 = vsub.s32 %v662, %v954
  %v956 = vrot.slane %v343, %v955
  %v957 = vlaneseq
  %v958 = vshrl.u32 %v957, 7
  %v959 = vsub.s32 %v667, %v958
  %v960 = vrot.slane %v346, %v959
  %v961 = vsel %vm672, %v960, %v956
  %v962 = vlaneseq
  %v963 = vshrl.u32 %v962, 7
  %v964 = vsub.s32 %v662, %v963
  %v965 = vrot.slane %v349, %v964
  %v966 = vlaneseq
  %v967 = vshrl.u32 %v966, 7
  %v968 = vsub.s32 %v667, %v967
  %v969 = vrot.slane %v352, %v968
  %v970 = vsel %vm672, %v969, %v965
  %v971 = vlaneseq
  %v972 = vshrl.u32 %v971, 7
  %v973 = vsub.s32 %v662, %v972
  %v974 = vrot.slane %v355, %v973
  %v975 = vlaneseq
  %v976 = vshrl.u32 %v975, 7
  %v977 = vsub.s32 %v667, %v976
  %v978 = vrot.slane %v358, %v977
  %v979 = vsel %vm672, %v978, %v974
  %v980 = vlaneseq
  %v981 = vshrl.u32 %v980, 7
  %v982 = vsub.s32 %v662, %v981
  %v983 = vrot.slane %v361, %v982
  %v984 = vlaneseq
  %v985 = vshrl.u32 %v984, 7
  %v986 = vsub.s32 %v667, %v985
  %v987 = vrot.slane %v364, %v986
  %v988 = vsel %vm672, %v987, %v983
  %v989 = vlaneseq
  %v990 = vshrl.u32 %v989, 7
  %v991 = vsub.s32 %v662, %v990
  %v992 = vrot.slane %v367, %v991
  %v993 = vlaneseq
  %v994 = vshrl.u32 %v993, 7
  %v995 = vsub.s32 %v667, %v994
  %v996 = vrot.slane %v370, %v995
  %v997 = vsel %vm672, %v996, %v992
  %v998 = vlaneseq
  %v999 = vshrl.u32 %v998, 7
  %v1000 = vsub.s32 %v662, %v999
  %v1001 = vrot.slane %v373, %v1000
  %v1002 = vlaneseq
  %v1003 = vshrl.u32 %v1002, 7
  %v1004 = vsub.s32 %v667, %v1003
  %v1005 = vrot.slane %v376, %v1004
  %v1006 = vsel %vm672, %v1005, %v1001
  %v1007 = vlaneseq
  %v1008 = vshrl.u32 %v1007, 7
  %v1009 = vsub.s32 %v662, %v1008
  %v1010 = vrot.slane %v379, %v1009
  %v1011 = vlaneseq
  %v1012 = vshrl.u32 %v1011, 7
  %v1013 = vsub.s32 %v667, %v1012
  %v1014 = vrot.slane %v382, %v1013
  %v1015 = vsel %vm672, %v1014, %v1010
  %v1016 = vlaneseq
  %v1017 = vshrl.u32 %v1016, 7
  %v1018 = vsub.s32 %v662, %v1017
  %v1019 = vrot.slane %v385, %v1018
  %v1020 = vlaneseq
  %v1021 = vshrl.u32 %v1020, 7
  %v1022 = vsub.s32 %v667, %v1021
  %v1023 = vrot.slane %v388, %v1022
  %v1024 = vsel %vm672, %v1023, %v1019
  %v1025 = vlaneseq
  %v1026 = vshrl.u32 %v1025, 7
  %v1027 = vsub.s32 %v662, %v1026
  %v1028 = vrot.slane %v391, %v1027
  %v1029 = vlaneseq
  %v1030 = vshrl.u32 %v1029, 7
  %v1031 = vsub.s32 %v667, %v1030
  %v1032 = vrot.slane %v394, %v1031
  %v1033 = vsel %vm672, %v1032, %v1028
  %v1034 = vlaneseq
  %v1035 = vshrl.u32 %v1034, 7
  %v1036 = vsub.s32 %v662, %v1035
  %v1037 = vrot.slane %v397, %v1036
  %v1038 = vlaneseq
  %v1039 = vshrl.u32 %v1038, 7
  %v1040 = vsub.s32 %v667, %v1039
  %v1041 = vrot.slane %v400, %v1040
  %v1042 = vsel %vm672, %v1041, %v1037
  %v1043 = vlaneseq
  %v1044 = vshrl.u32 %v1043, 7
  %v1045 = vsub.s32 %v662, %v1044
  %v1046 = vrot.slane %v403, %v1045
  %v1047 = vlaneseq
  %v1048 = vshrl.u32 %v1047, 7
  %v1049 = vsub.s32 %v667, %v1048
  %v1050 = vrot.slane %v406, %v1049
  %v1051 = vsel %vm672, %v1050, %v1046
  %v1052 = vlaneseq
  %v1053 = vshrl.u32 %v1052, 7
  %v1054 = vsub.s32 %v662, %v1053
  %v1055 = vrot.slane %v409, %v1054
  %v1056 = vlaneseq
  %v1057 = vshrl.u32 %v1056, 7
  %v1058 = vsub.s32 %v667, %v1057
  %v1059 = vrot.slane %v412, %v1058
  %v1060 = vsel %vm672, %v1059, %v1055
  %v1061 = vlaneseq
  %v1062 = vshrl.u32 %v1061, 7
  %v1063 = vsub.s32 %v662, %v1062
  %v1064 = vrot.slane %v415, %v1063
  %v1065 = vlaneseq
  %v1066 = vshrl.u32 %v1065, 7
  %v1067 = vsub.s32 %v667, %v1066
  %v1068 = vrot.slane %v418, %v1067
  %v1069 = vsel %vm672, %v1068, %v1064
  %v1070 = vlaneseq
  %v1071 = vshrl.u32 %v1070, 7
  %v1072 = vsub.s32 %v662, %v1071
  %v1073 = vrot.slane %v421, %v1072
  %v1074 = vlaneseq
  %v1075 = vshrl.u32 %v1074, 7
  %v1076 = vsub.s32 %v667, %v1075
  %v1077 = vrot.slane %v424, %v1076
  %v1078 = vsel %vm672, %v1077, %v1073
  %v1079 = vlaneseq
  %v1080 = vshrl.u32 %v1079, 7
  %v1081 = vsub.s32 %v662, %v1080
  %v1082 = vrot.slane %v427, %v1081
  %v1083 = vlaneseq
  %v1084 = vshrl.u32 %v1083, 7
  %v1085 = vsub.s32 %v667, %v1084
  %v1086 = vrot.slane %v430, %v1085
  %v1087 = vsel %vm672, %v1086, %v1082
  %v1088 = vlaneseq
  %v1089 = vshrl.u32 %v1088, 7
  %v1090 = vsub.s32 %v662, %v1089
  %v1091 = vrot.slane %v433, %v1090
  %v1092 = vlaneseq
  %v1093 = vshrl.u32 %v1092, 7
  %v1094 = vsub.s32 %v667, %v1093
  %v1095 = vrot.slane %v436, %v1094
  %v1096 = vsel %vm672, %v1095, %v1091
  %v1097 = vlaneseq
  %v1098 = vshrl.u32 %v1097, 7
  %v1099 = vsub.s32 %v662, %v1098
  %v1100 = vrot.slane %v439, %v1099
  %v1101 = vlaneseq
  %v1102 = vshrl.u32 %v1101, 7
  %v1103 = vsub.s32 %v667, %v1102
  %v1104 = vrot.slane %v442, %v1103
  %v1105 = vsel %vm672, %v1104, %v1100
  %v1106 = vlaneseq
  %v1107 = vshrl.u32 %v1106, 7
  %v1108 = vsub.s32 %v662, %v1107
  %v1109 = vrot.slane %v445, %v1108
  %v1110 = vlaneseq
  %v1111 = vshrl.u32 %v1110, 7
  %v1112 = vsub.s32 %v667, %v1111
  %v1113 = vrot.slane %v448, %v1112
  %v1114 = vsel %vm672, %v1113, %v1109
  %v1115 = vlaneseq
  %v1116 = vshrl.u32 %v1115, 7
  %v1117 = vsub.s32 %v662, %v1116
  %v1118 = vrot.slane %v451, %v1117
  %v1119 = vlaneseq
  %v1120 = vshrl.u32 %v1119, 7
  %v1121 = vsub.s32 %v667, %v1120
  %v1122 = vrot.slane %v454, %v1121
  %v1123 = vsel %vm672, %v1122, %v1118
  %v1124 = vlaneseq
  %v1125 = vshrl.u32 %v1124, 7
  %v1126 = vsub.s32 %v662, %v1125
  %v1127 = vrot.slane %v457, %v1126
  %v1128 = vlaneseq
  %v1129 = vshrl.u32 %v1128, 7
  %v1130 = vsub.s32 %v667, %v1129
  %v1131 = vrot.slane %v460, %v1130
  %v1132 = vsel %vm672, %v1131, %v1127
  %v1133 = vlaneseq
  %v1134 = vshrl.u32 %v1133, 7
  %v1135 = vsub.s32 %v662, %v1134
  %v1136 = vrot.slane %v463, %v1135
  %v1137 = vlaneseq
  %v1138 = vshrl.u32 %v1137, 7
  %v1139 = vsub.s32 %v667, %v1138
  %v1140 = vrot.slane %v466, %v1139
  %v1141 = vsel %vm672, %v1140, %v1136
  %v1142 = vlaneseq
  %v1143 = vshrl.u32 %v1142, 7
  %v1144 = vsub.s32 %v662, %v1143
  %v1145 = vrot.slane %v469, %v1144
  %v1146 = vlaneseq
  %v1147 = vshrl.u32 %v1146, 7
  %v1148 = vsub.s32 %v667, %v1147
  %v1149 = vrot.slane %v472, %v1148
  %v1150 = vsel %vm672, %v1149, %v1145
  %v1151 = vlaneseq
  %v1152 = vshrl.u32 %v1151, 7
  %v1153 = vsub.s32 %v662, %v1152
  %v1154 = vrot.slane %v475, %v1153
  %v1155 = vlaneseq
  %v1156 = vshrl.u32 %v1155, 7
  %v1157 = vsub.s32 %v667, %v1156
  %v1158 = vrot.slane %v478, %v1157
  %v1159 = vsel %vm672, %v1158, %v1154
  %v1160 = vlaneseq
  %v1161 = vshrl.u32 %v1160, 7
  %v1162 = vsub.s32 %v662, %v1161
  %v1163 = vrot.slane %v481, %v1162
  %v1164 = vlaneseq
  %v1165 = vshrl.u32 %v1164, 7
  %v1166 = vsub.s32 %v667, %v1165
  %v1167 = vrot.slane %v484, %v1166
  %v1168 = vsel %vm672, %v1167, %v1163
  %v1169 = vlaneseq
  %v1170 = vshrl.u32 %v1169, 7
  %v1171 = vsub.s32 %v662, %v1170
  %v1172 = vrot.slane %v487, %v1171
  %v1173 = vlaneseq
  %v1174 = vshrl.u32 %v1173, 7
  %v1175 = vsub.s32 %v667, %v1174
  %v1176 = vrot.slane %v490, %v1175
  %v1177 = vsel %vm672, %v1176, %v1172
  %v1178 = vlaneseq
  %v1179 = vshrl.u32 %v1178, 7
  %v1180 = vsub.s32 %v662, %v1179
  %v1181 = vrot.slane %v493, %v1180
  %v1182 = vlaneseq
  %v1183 = vshrl.u32 %v1182, 7
  %v1184 = vsub.s32 %v667, %v1183
  %v1185 = vrot.slane %v496, %v1184
  %v1186 = vsel %vm672, %v1185, %v1181
  %v1187 = vlaneseq
  %v1188 = vshrl.u32 %v1187, 7
  %v1189 = vsub.s32 %v662, %v1188
  %v1190 = vrot.slane %v499, %v1189
  %v1191 = vlaneseq
  %v1192 = vshrl.u32 %v1191, 7
  %v1193 = vsub.s32 %v667, %v1192
  %v1194 = vrot.slane %v502, %v1193
  %v1195 = vsel %vm672, %v1194, %v1190
  %v1196 = vlaneseq
  %v1197 = vshrl.u32 %v1196, 7
  %v1198 = vsub.s32 %v662, %v1197
  %v1199 = vrot.slane %v505, %v1198
  %v1200 = vlaneseq
  %v1201 = vshrl.u32 %v1200, 7
  %v1202 = vsub.s32 %v667, %v1201
  %v1203 = vrot.slane %v508, %v1202
  %v1204 = vsel %vm672, %v1203, %v1199
  %v1205 = vlaneseq
  %v1206 = vshrl.u32 %v1205, 7
  %v1207 = vsub.s32 %v662, %v1206
  %v1208 = vrot.slane %v511, %v1207
  %v1209 = vlaneseq
  %v1210 = vshrl.u32 %v1209, 7
  %v1211 = vsub.s32 %v667, %v1210
  %v1212 = vrot.slane %v514, %v1211
  %v1213 = vsel %vm672, %v1212, %v1208
  %v1214 = vlaneseq
  %v1215 = vshrl.u32 %v1214, 7
  %v1216 = vsub.s32 %v662, %v1215
  %v1217 = vrot.slane %v517, %v1216
  %v1218 = vlaneseq
  %v1219 = vshrl.u32 %v1218, 7
  %v1220 = vsub.s32 %v667, %v1219
  %v1221 = vrot.slane %v520, %v1220
  %v1222 = vsel %vm672, %v1221, %v1217
  %v1223 = vlaneseq
  %v1224 = vshrl.u32 %v1223, 7
  %v1225 = vsub.s32 %v662, %v1224
  %v1226 = vrot.slane %v523, %v1225
  %v1227 = vlaneseq
  %v1228 = vshrl.u32 %v1227, 7
  %v1229 = vsub.s32 %v667, %v1228
  %v1230 = vrot.slane %v526, %v1229
  %v1231 = vsel %vm672, %v1230, %v1226
  %v1232 = vlaneseq
  %v1233 = vshrl.u32 %v1232, 7
  %v1234 = vsub.s32 %v662, %v1233
  %v1235 = vrot.slane %v529, %v1234
  %v1236 = vlaneseq
  %v1237 = vshrl.u32 %v1236, 7
  %v1238 = vsub.s32 %v667, %v1237
  %v1239 = vrot.slane %v532, %v1238
  %v1240 = vsel %vm672, %v1239, %v1235
  %vm1241 = vcmask 1041409
  %v1242 = vsel %vm1241, %v682, %v673
  %vm1243 = vcmask 1042434
  %v1244 = vsel %vm1243, %v691, %v1242
  %vm1245 = vcmask 1043459
  %v1246 = vsel %vm1245, %v700, %v1244
  %vm1247 = vcmask 1044484
  %v1248 = vsel %vm1247, %v709, %v1246
  %vm1249 = vcmask 1045509
  %v1250 = vsel %vm1249, %v718, %v1248
  %vm1251 = vcmask 1046534
  %v1252 = vsel %vm1251, %v727, %v1250
  %vm1253 = vcmask 1047559
  %v1254 = vsel %vm1253, %v736, %v1252
  %v1255 = vsel %vm1241, %v754, %v745
  %v1256 = vsel %vm1243, %v763, %v1255
  %v1257 = vsel %vm1245, %v772, %v1256
  %v1258 = vsel %vm1247, %v781, %v1257
  %v1259 = vsel %vm1249, %v790, %v1258
  %v1260 = vsel %vm1251, %v799, %v1259
  %v1261 = vsel %vm1253, %v808, %v1260
  %v1262 = vsel %vm1241, %v826, %v817
  %v1263 = vsel %vm1243, %v835, %v1262
  %v1264 = vsel %vm1245, %v844, %v1263
  %v1265 = vsel %vm1247, %v853, %v1264
  %v1266 = vsel %vm1249, %v862, %v1265
  %v1267 = vsel %vm1251, %v871, %v1266
  %v1268 = vsel %vm1253, %v880, %v1267
  %v1269 = vsel %vm1241, %v898, %v889
  %v1270 = vsel %vm1243, %v907, %v1269
  %v1271 = vsel %vm1245, %v916, %v1270
  %v1272 = vsel %vm1247, %v925, %v1271
  %v1273 = vsel %vm1249, %v934, %v1272
  %v1274 = vsel %vm1251, %v943, %v1273
  %v1275 = vsel %vm1253, %v952, %v1274
  %v1276 = vsel %vm1241, %v970, %v961
  %v1277 = vsel %vm1243, %v979, %v1276
  %v1278 = vsel %vm1245, %v988, %v1277
  %v1279 = vsel %vm1247, %v997, %v1278
  %v1280 = vsel %vm1249, %v1006, %v1279
  %v1281 = vsel %vm1251, %v1015, %v1280
  %v1282 = vsel %vm1253, %v1024, %v1281
  %v1283 = vsel %vm1241, %v1042, %v1033
  %v1284 = vsel %vm1243, %v1051, %v1283
  %v1285 = vsel %vm1245, %v1060, %v1284
  %v1286 = vsel %vm1247, %v1069, %v1285
  %v1287 = vsel %vm1249, %v1078, %v1286
  %v1288 = vsel %vm1251, %v1087, %v1287
  %v1289 = vsel %vm1253, %v1096, %v1288
  %v1290 = vsel %vm1241, %v1114, %v1105
  %v1291 = vsel %vm1243, %v1123, %v1290
  %v1292 = vsel %vm1245, %v1132, %v1291
  %v1293 = vsel %vm1247, %v1141, %v1292
  %v1294 = vsel %vm1249, %v1150, %v1293
  %v1295 = vsel %vm1251, %v1159, %v1294
  %v1296 = vsel %vm1253, %v1168, %v1295
  %v1297 = vsel %vm1241, %v1186, %v1177
  %v1298 = vsel %vm1243, %v1195, %v1297
  %v1299 = vsel %vm1245, %v1204, %v1298
  %v1300 = vsel %vm1247, %v1213, %v1299
  %v1301 = vsel %vm1249, %v1222, %v1300
  %v1302 = vsel %vm1251, %v1231, %v1301
  %v1303 = vsel %vm1253, %v1240, %v1302
  %v1312 = vsel %vm148, %v1254, 0.0
  %1313 = vadd.xlane.f32.xlu0 %v1312
  %v1314 = vpop.xlane.xlu0 %1313
  %v1315 = vsel %vm148, %v1261, 0.0
  %1316 = vadd.xlane.f32.xlu0 %v1315
  %v1317 = vpop.xlane.xlu0 %1316
  %v1318 = vsel %vm148, %v1268, 0.0
  %1319 = vadd.xlane.f32.xlu0 %v1318
  %v1320 = vpop.xlane.xlu0 %1319
  %v1321 = vsel %vm148, %v1275, 0.0
  %1322 = vadd.xlane.f32.xlu0 %v1321
  %v1323 = vpop.xlane.xlu0 %1322
  %v1324 = vsel %vm148, %v1282, 0.0
  %1325 = vadd.xlane.f32.xlu0 %v1324
  %v1326 = vpop.xlane.xlu0 %1325
  %v1327 = vsel %vm148, %v1289, 0.0
  %1328 = vadd.xlane.f32.xlu0 %v1327
  %v1329 = vpop.xlane.xlu0 %1328
  %v1330 = vsel %vm148, %v1296, 0.0
  %1331 = vadd.xlane.f32.xlu0 %v1330
  %v1332 = vpop.xlane.xlu0 %1331
  %v1333 = vsel %vm148, %v1303, 0.0
  %1334 = vadd.xlane.f32.xlu0 %v1333
  %v1335 = vpop.xlane.xlu0 %1334
  %v1336 = vsel %vm148, %v20, -inf
  %1337 = vmax.xlane.f32.xlu0 %v1336
  %v1338 = vpop.xlane.xlu0 %1337
  %v1339 = vsel %vm148, %v21, -inf
  %1340 = vmax.xlane.f32.xlu0 %v1339
  %v1341 = vpop.xlane.xlu0 %1340
  %v1342 = vsel %vm148, %v22, -inf
  %1343 = vmax.xlane.f32.xlu0 %v1342
  %v1344 = vpop.xlane.xlu0 %1343
  %v1345 = vsel %vm148, %v23, -inf
  %1346 = vmax.xlane.f32.xlu0 %v1345
  %v1347 = vpop.xlane.xlu0 %1346
  %v1348 = vsel %vm148, %v24, -inf
  %1349 = vmax.xlane.f32.xlu0 %v1348
  %v1350 = vpop.xlane.xlu0 %1349
  %v1351 = vsel %vm148, %v25, -inf
  %1352 = vmax.xlane.f32.xlu0 %v1351
  %v1353 = vpop.xlane.xlu0 %1352
  %v1354 = vsel %vm148, %v26, -inf
  %1355 = vmax.xlane.f32.xlu0 %v1354
  %v1356 = vpop.xlane.xlu0 %1355
  %v1357 = vsel %vm148, %v27, -inf
  %1358 = vmax.xlane.f32.xlu0 %v1357
  %v1359 = vpop.xlane.xlu0 %1358
  %v1360 = vsel %vm148, %v28, -inf
  %1361 = vmax.xlane.f32.xlu0 %v1360
  %v1362 = vpop.xlane.xlu0 %1361
  %v1363 = vsel %vm148, %v29, -inf
  %1364 = vmax.xlane.f32.xlu0 %v1363
  %v1365 = vpop.xlane.xlu0 %1364
  %v1366 = vsel %vm148, %v30, -inf
  %1367 = vmax.xlane.f32.xlu0 %v1366
  %v1368 = vpop.xlane.xlu0 %1367
  %v1369 = vsel %vm148, %v31, -inf
  %1370 = vmax.xlane.f32.xlu0 %v1369
  %v1371 = vpop.xlane.xlu0 %1370
  %v1372 = vsel %vm148, %v32, -inf
  %1373 = vmax.xlane.f32.xlu0 %v1372
  %v1374 = vpop.xlane.xlu0 %1373
  %v1375 = vsel %vm148, %v33, -inf
  %1376 = vmax.xlane.f32.xlu0 %v1375
  %v1377 = vpop.xlane.xlu0 %1376
  %v1378 = vsel %vm148, %v34, -inf
  %1379 = vmax.xlane.f32.xlu0 %v1378
  %v1380 = vpop.xlane.xlu0 %1379
  %v1381 = vsel %vm148, %v35, -inf
  %1382 = vmax.xlane.f32.xlu0 %v1381
  %v1383 = vpop.xlane.xlu0 %1382
  %v1384 = vsel %vm148, %v36, -inf
  %1385 = vmax.xlane.f32.xlu0 %v1384
  %v1386 = vpop.xlane.xlu0 %1385
  %v1387 = vsel %vm148, %v37, -inf
  %1388 = vmax.xlane.f32.xlu0 %v1387
  %v1389 = vpop.xlane.xlu0 %1388
  %v1390 = vsel %vm148, %v38, -inf
  %1391 = vmax.xlane.f32.xlu0 %v1390
  %v1392 = vpop.xlane.xlu0 %1391
  %v1393 = vsel %vm148, %v39, -inf
  %1394 = vmax.xlane.f32.xlu0 %v1393
  %v1395 = vpop.xlane.xlu0 %1394
  %v1396 = vsel %vm148, %v40, -inf
  %1397 = vmax.xlane.f32.xlu0 %v1396
  %v1398 = vpop.xlane.xlu0 %1397
  %v1399 = vsel %vm148, %v41, -inf
  %1400 = vmax.xlane.f32.xlu0 %v1399
  %v1401 = vpop.xlane.xlu0 %1400
  %v1402 = vsel %vm148, %v42, -inf
  %1403 = vmax.xlane.f32.xlu0 %v1402
  %v1404 = vpop.xlane.xlu0 %1403
  %v1405 = vsel %vm148, %v43, -inf
  %1406 = vmax.xlane.f32.xlu0 %v1405
  %v1407 = vpop.xlane.xlu0 %1406
  %v1408 = vsel %vm148, %v44, -inf
  %1409 = vmax.xlane.f32.xlu0 %v1408
  %v1410 = vpop.xlane.xlu0 %1409
  %v1411 = vsel %vm148, %v45, -inf
  %1412 = vmax.xlane.f32.xlu0 %v1411
  %v1413 = vpop.xlane.xlu0 %1412
  %v1414 = vsel %vm148, %v46, -inf
  %1415 = vmax.xlane.f32.xlu0 %v1414
  %v1416 = vpop.xlane.xlu0 %1415
  %v1417 = vsel %vm148, %v47, -inf
  %1418 = vmax.xlane.f32.xlu0 %v1417
  %v1419 = vpop.xlane.xlu0 %1418
  %v1420 = vsel %vm148, %v48, -inf
  %1421 = vmax.xlane.f32.xlu0 %v1420
  %v1422 = vpop.xlane.xlu0 %1421
  %v1423 = vsel %vm148, %v49, -inf
  %1424 = vmax.xlane.f32.xlu0 %v1423
  %v1425 = vpop.xlane.xlu0 %1424
  %v1426 = vsel %vm148, %v50, -inf
  %1427 = vmax.xlane.f32.xlu0 %v1426
  %v1428 = vpop.xlane.xlu0 %1427
  %v1429 = vsel %vm148, %v51, -inf
  %1430 = vmax.xlane.f32.xlu0 %v1429
  %v1431 = vpop.xlane.xlu0 %1430
  %v1432 = vsel %vm148, %v52, -inf
  %1433 = vmax.xlane.f32.xlu0 %v1432
  %v1434 = vpop.xlane.xlu0 %1433
  %v1435 = vsel %vm148, %v53, -inf
  %1436 = vmax.xlane.f32.xlu0 %v1435
  %v1437 = vpop.xlane.xlu0 %1436
  %v1438 = vsel %vm148, %v54, -inf
  %1439 = vmax.xlane.f32.xlu0 %v1438
  %v1440 = vpop.xlane.xlu0 %1439
  %v1441 = vsel %vm148, %v55, -inf
  %1442 = vmax.xlane.f32.xlu0 %v1441
  %v1443 = vpop.xlane.xlu0 %1442
  %v1444 = vsel %vm148, %v56, -inf
  %1445 = vmax.xlane.f32.xlu0 %v1444
  %v1446 = vpop.xlane.xlu0 %1445
  %v1447 = vsel %vm148, %v57, -inf
  %1448 = vmax.xlane.f32.xlu0 %v1447
  %v1449 = vpop.xlane.xlu0 %1448
  %v1450 = vsel %vm148, %v58, -inf
  %1451 = vmax.xlane.f32.xlu0 %v1450
  %v1452 = vpop.xlane.xlu0 %1451
  %v1453 = vsel %vm148, %v59, -inf
  %1454 = vmax.xlane.f32.xlu0 %v1453
  %v1455 = vpop.xlane.xlu0 %1454
  %v1456 = vsel %vm148, %v60, -inf
  %1457 = vmax.xlane.f32.xlu0 %v1456
  %v1458 = vpop.xlane.xlu0 %1457
  %v1459 = vsel %vm148, %v61, -inf
  %1460 = vmax.xlane.f32.xlu0 %v1459
  %v1461 = vpop.xlane.xlu0 %1460
  %v1462 = vsel %vm148, %v62, -inf
  %1463 = vmax.xlane.f32.xlu0 %v1462
  %v1464 = vpop.xlane.xlu0 %1463
  %v1465 = vsel %vm148, %v63, -inf
  %1466 = vmax.xlane.f32.xlu0 %v1465
  %v1467 = vpop.xlane.xlu0 %1466
  %v1468 = vsel %vm148, %v64, -inf
  %1469 = vmax.xlane.f32.xlu0 %v1468
  %v1470 = vpop.xlane.xlu0 %1469
  %v1471 = vsel %vm148, %v65, -inf
  %1472 = vmax.xlane.f32.xlu0 %v1471
  %v1473 = vpop.xlane.xlu0 %1472
  %v1474 = vsel %vm148, %v66, -inf
  %1475 = vmax.xlane.f32.xlu0 %v1474
  %v1476 = vpop.xlane.xlu0 %1475
  %v1477 = vsel %vm148, %v67, -inf
  %1478 = vmax.xlane.f32.xlu0 %v1477
  %v1479 = vpop.xlane.xlu0 %1478
  %v1480 = vsel %vm148, %v68, -inf
  %1481 = vmax.xlane.f32.xlu0 %v1480
  %v1482 = vpop.xlane.xlu0 %1481
  %v1483 = vsel %vm148, %v69, -inf
  %1484 = vmax.xlane.f32.xlu0 %v1483
  %v1485 = vpop.xlane.xlu0 %1484
  %v1486 = vsel %vm148, %v70, -inf
  %1487 = vmax.xlane.f32.xlu0 %v1486
  %v1488 = vpop.xlane.xlu0 %1487
  %v1489 = vsel %vm148, %v71, -inf
  %1490 = vmax.xlane.f32.xlu0 %v1489
  %v1491 = vpop.xlane.xlu0 %1490
  %v1492 = vsel %vm148, %v72, -inf
  %1493 = vmax.xlane.f32.xlu0 %v1492
  %v1494 = vpop.xlane.xlu0 %1493
  %v1495 = vsel %vm148, %v73, -inf
  %1496 = vmax.xlane.f32.xlu0 %v1495
  %v1497 = vpop.xlane.xlu0 %1496
  %v1498 = vsel %vm148, %v74, -inf
  %1499 = vmax.xlane.f32.xlu0 %v1498
  %v1500 = vpop.xlane.xlu0 %1499
  %v1501 = vsel %vm148, %v75, -inf
  %1502 = vmax.xlane.f32.xlu0 %v1501
  %v1503 = vpop.xlane.xlu0 %1502
  %v1504 = vsel %vm148, %v76, -inf
  %1505 = vmax.xlane.f32.xlu0 %v1504
  %v1506 = vpop.xlane.xlu0 %1505
  %v1507 = vsel %vm148, %v77, -inf
  %1508 = vmax.xlane.f32.xlu0 %v1507
  %v1509 = vpop.xlane.xlu0 %1508
  %v1510 = vsel %vm148, %v78, -inf
  %1511 = vmax.xlane.f32.xlu0 %v1510
  %v1512 = vpop.xlane.xlu0 %1511
  %v1513 = vsel %vm148, %v79, -inf
  %1514 = vmax.xlane.f32.xlu0 %v1513
  %v1515 = vpop.xlane.xlu0 %1514
  %v1516 = vsel %vm148, %v80, -inf
  %1517 = vmax.xlane.f32.xlu0 %v1516
  %v1518 = vpop.xlane.xlu0 %1517
  %v1519 = vsel %vm148, %v81, -inf
  %1520 = vmax.xlane.f32.xlu0 %v1519
  %v1521 = vpop.xlane.xlu0 %1520
  %v1522 = vsel %vm148, %v82, -inf
  %1523 = vmax.xlane.f32.xlu0 %v1522
  %v1524 = vpop.xlane.xlu0 %1523
  %v1525 = vsel %vm148, %v83, -inf
  %1526 = vmax.xlane.f32.xlu0 %v1525
  %v1527 = vpop.xlane.xlu0 %1526
  %v1528 = vsel %vm148, %v84, -inf
  %1529 = vmax.xlane.f32.xlu0 %v1528
  %v1530 = vpop.xlane.xlu0 %1529
  %v1531 = vsel %vm148, %v85, -inf
  %1532 = vmax.xlane.f32.xlu0 %v1531
  %v1533 = vpop.xlane.xlu0 %1532
  %v1534 = vsel %vm148, %v86, -inf
  %1535 = vmax.xlane.f32.xlu0 %v1534
  %v1536 = vpop.xlane.xlu0 %1535
  %v1537 = vsel %vm148, %v87, -inf
  %1538 = vmax.xlane.f32.xlu0 %v1537
  %v1539 = vpop.xlane.xlu0 %1538
  %v1540 = vsel %vm148, %v88, -inf
  %1541 = vmax.xlane.f32.xlu0 %v1540
  %v1542 = vpop.xlane.xlu0 %1541
  %v1543 = vsel %vm148, %v89, -inf
  %1544 = vmax.xlane.f32.xlu0 %v1543
  %v1545 = vpop.xlane.xlu0 %1544
  %v1546 = vsel %vm148, %v90, -inf
  %1547 = vmax.xlane.f32.xlu0 %v1546
  %v1548 = vpop.xlane.xlu0 %1547
  %v1549 = vsel %vm148, %v91, -inf
  %1550 = vmax.xlane.f32.xlu0 %v1549
  %v1551 = vpop.xlane.xlu0 %1550
  %v1552 = vsel %vm148, %v92, -inf
  %1553 = vmax.xlane.f32.xlu0 %v1552
  %v1554 = vpop.xlane.xlu0 %1553
  %v1555 = vsel %vm148, %v93, -inf
  %1556 = vmax.xlane.f32.xlu0 %v1555
  %v1557 = vpop.xlane.xlu0 %1556
  %v1558 = vsel %vm148, %v94, -inf
  %1559 = vmax.xlane.f32.xlu0 %v1558
  %v1560 = vpop.xlane.xlu0 %1559
  %v1561 = vsel %vm148, %v95, -inf
  %1562 = vmax.xlane.f32.xlu0 %v1561
  %v1563 = vpop.xlane.xlu0 %1562
  %v1564 = vsel %vm148, %v96, -inf
  %1565 = vmax.xlane.f32.xlu0 %v1564
  %v1566 = vpop.xlane.xlu0 %1565
  %v1567 = vsel %vm148, %v97, -inf
  %1568 = vmax.xlane.f32.xlu0 %v1567
  %v1569 = vpop.xlane.xlu0 %1568
  %v1570 = vsel %vm148, %v98, -inf
  %1571 = vmax.xlane.f32.xlu0 %v1570
  %v1572 = vpop.xlane.xlu0 %1571
  %v1573 = vsel %vm148, %v99, -inf
  %1574 = vmax.xlane.f32.xlu0 %v1573
  %v1575 = vpop.xlane.xlu0 %1574
  %v1576 = vsel %vm148, %v100, -inf
  %1577 = vmax.xlane.f32.xlu0 %v1576
  %v1578 = vpop.xlane.xlu0 %1577
  %v1579 = vsel %vm148, %v101, -inf
  %1580 = vmax.xlane.f32.xlu0 %v1579
  %v1581 = vpop.xlane.xlu0 %1580
  %v1582 = vsel %vm148, %v102, -inf
  %1583 = vmax.xlane.f32.xlu0 %v1582
  %v1584 = vpop.xlane.xlu0 %1583
  %v1585 = vsel %vm148, %v103, -inf
  %1586 = vmax.xlane.f32.xlu0 %v1585
  %v1587 = vpop.xlane.xlu0 %1586
  %v1588 = vsel %vm148, %v104, -inf
  %1589 = vmax.xlane.f32.xlu0 %v1588
  %v1590 = vpop.xlane.xlu0 %1589
  %v1591 = vsel %vm148, %v105, -inf
  %1592 = vmax.xlane.f32.xlu0 %v1591
  %v1593 = vpop.xlane.xlu0 %1592
  %v1594 = vsel %vm148, %v106, -inf
  %1595 = vmax.xlane.f32.xlu0 %v1594
  %v1596 = vpop.xlane.xlu0 %1595
  %v1597 = vsel %vm148, %v107, -inf
  %1598 = vmax.xlane.f32.xlu0 %v1597
  %v1599 = vpop.xlane.xlu0 %1598
  %v1600 = vsel %vm148, %v108, -inf
  %1601 = vmax.xlane.f32.xlu0 %v1600
  %v1602 = vpop.xlane.xlu0 %1601
  %v1603 = vsel %vm148, %v109, -inf
  %1604 = vmax.xlane.f32.xlu0 %v1603
  %v1605 = vpop.xlane.xlu0 %1604
  %v1606 = vsel %vm148, %v110, -inf
  %1607 = vmax.xlane.f32.xlu0 %v1606
  %v1608 = vpop.xlane.xlu0 %1607
  %v1609 = vsel %vm148, %v111, -inf
  %1610 = vmax.xlane.f32.xlu0 %v1609
  %v1611 = vpop.xlane.xlu0 %1610
  %v1612 = vsel %vm148, %v112, -inf
  %1613 = vmax.xlane.f32.xlu0 %v1612
  %v1614 = vpop.xlane.xlu0 %1613
  %v1615 = vsel %vm148, %v113, -inf
  %1616 = vmax.xlane.f32.xlu0 %v1615
  %v1617 = vpop.xlane.xlu0 %1616
  %v1618 = vsel %vm148, %v114, -inf
  %1619 = vmax.xlane.f32.xlu0 %v1618
  %v1620 = vpop.xlane.xlu0 %1619
  %v1621 = vsel %vm148, %v115, -inf
  %1622 = vmax.xlane.f32.xlu0 %v1621
  %v1623 = vpop.xlane.xlu0 %1622
  %v1624 = vsel %vm148, %v116, -inf
  %1625 = vmax.xlane.f32.xlu0 %v1624
  %v1626 = vpop.xlane.xlu0 %1625
  %v1627 = vsel %vm148, %v117, -inf
  %1628 = vmax.xlane.f32.xlu0 %v1627
  %v1629 = vpop.xlane.xlu0 %1628
  %v1630 = vsel %vm148, %v118, -inf
  %1631 = vmax.xlane.f32.xlu0 %v1630
  %v1632 = vpop.xlane.xlu0 %1631
  %v1633 = vsel %vm148, %v119, -inf
  %1634 = vmax.xlane.f32.xlu0 %v1633
  %v1635 = vpop.xlane.xlu0 %1634
  %v1636 = vsel %vm148, %v120, -inf
  %1637 = vmax.xlane.f32.xlu0 %v1636
  %v1638 = vpop.xlane.xlu0 %1637
  %v1639 = vsel %vm148, %v121, -inf
  %1640 = vmax.xlane.f32.xlu0 %v1639
  %v1641 = vpop.xlane.xlu0 %1640
  %v1642 = vsel %vm148, %v122, -inf
  %1643 = vmax.xlane.f32.xlu0 %v1642
  %v1644 = vpop.xlane.xlu0 %1643
  %v1645 = vsel %vm148, %v123, -inf
  %1646 = vmax.xlane.f32.xlu0 %v1645
  %v1647 = vpop.xlane.xlu0 %1646
  %v1648 = vsel %vm148, %v124, -inf
  %1649 = vmax.xlane.f32.xlu0 %v1648
  %v1650 = vpop.xlane.xlu0 %1649
  %v1651 = vsel %vm148, %v125, -inf
  %1652 = vmax.xlane.f32.xlu0 %v1651
  %v1653 = vpop.xlane.xlu0 %1652
  %v1654 = vsel %vm148, %v126, -inf
  %1655 = vmax.xlane.f32.xlu0 %v1654
  %v1656 = vpop.xlane.xlu0 %1655
  %v1657 = vsel %vm148, %v127, -inf
  %1658 = vmax.xlane.f32.xlu0 %v1657
  %v1659 = vpop.xlane.xlu0 %1658
  %v1660 = vsel %vm148, %v128, -inf
  %1661 = vmax.xlane.f32.xlu0 %v1660
  %v1662 = vpop.xlane.xlu0 %1661
  %v1663 = vsel %vm148, %v129, -inf
  %1664 = vmax.xlane.f32.xlu0 %v1663
  %v1665 = vpop.xlane.xlu0 %1664
  %v1666 = vsel %vm148, %v130, -inf
  %1667 = vmax.xlane.f32.xlu0 %v1666
  %v1668 = vpop.xlane.xlu0 %1667
  %v1669 = vsel %vm148, %v131, -inf
  %1670 = vmax.xlane.f32.xlu0 %v1669
  %v1671 = vpop.xlane.xlu0 %1670
  %v1672 = vsel %vm148, %v132, -inf
  %1673 = vmax.xlane.f32.xlu0 %v1672
  %v1674 = vpop.xlane.xlu0 %1673
  %v1675 = vsel %vm148, %v133, -inf
  %1676 = vmax.xlane.f32.xlu0 %v1675
  %v1677 = vpop.xlane.xlu0 %1676
  %v1678 = vsel %vm148, %v134, -inf
  %1679 = vmax.xlane.f32.xlu0 %v1678
  %v1680 = vpop.xlane.xlu0 %1679
  %v1681 = vsel %vm148, %v135, -inf
  %1682 = vmax.xlane.f32.xlu0 %v1681
  %v1683 = vpop.xlane.xlu0 %1682
  %v1684 = vsel %vm148, %v136, -inf
  %1685 = vmax.xlane.f32.xlu0 %v1684
  %v1686 = vpop.xlane.xlu0 %1685
  %v1687 = vsel %vm148, %v137, -inf
  %1688 = vmax.xlane.f32.xlu0 %v1687
  %v1689 = vpop.xlane.xlu0 %1688
  %v1690 = vsel %vm148, %v138, -inf
  %1691 = vmax.xlane.f32.xlu0 %v1690
  %v1692 = vpop.xlane.xlu0 %1691
  %v1693 = vsel %vm148, %v139, -inf
  %1694 = vmax.xlane.f32.xlu0 %v1693
  %v1695 = vpop.xlane.xlu0 %1694
  %v1696 = vsel %vm148, %v140, -inf
  %1697 = vmax.xlane.f32.xlu0 %v1696
  %v1698 = vpop.xlane.xlu0 %1697
  %v1699 = vsel %vm148, %v141, -inf
  %1700 = vmax.xlane.f32.xlu0 %v1699
  %v1701 = vpop.xlane.xlu0 %1700
  %v1702 = vsel %vm148, %v142, -inf
  %1703 = vmax.xlane.f32.xlu0 %v1702
  %v1704 = vpop.xlane.xlu0 %1703
  %v1705 = vsel %vm148, %v143, -inf
  %1706 = vmax.xlane.f32.xlu0 %v1705
  %v1707 = vpop.xlane.xlu0 %1706
  %v1708 = vsel %vm148, %v144, -inf
  %1709 = vmax.xlane.f32.xlu0 %v1708
  %v1710 = vpop.xlane.xlu0 %1709
  %v1711 = vsel %vm148, %v145, -inf
  %1712 = vmax.xlane.f32.xlu0 %v1711
  %v1713 = vpop.xlane.xlu0 %1712
  %v1714 = vsel %vm148, %v146, -inf
  %1715 = vmax.xlane.f32.xlu0 %v1714
  %v1716 = vpop.xlane.xlu0 %1715
  %v1717 = vsel %vm148, %v147, -inf
  %1718 = vmax.xlane.f32.xlu0 %v1717
  %v1719 = vpop.xlane.xlu0 %1718
  %v1848 = vlaneseq
  %v1849 = vshrl.u32 %v1848, 7
  %v1850 = vsub.s32 %v662, %v1849
  %v1851 = vrot.slane %v1338, %v1850
  %v1852 = vlaneseq
  %v1853 = vshrl.u32 %v1852, 7
  %v1854 = vsub.s32 %v667, %v1853
  %v1855 = vrot.slane %v1341, %v1854
  %v1856 = vsel %vm672, %v1855, %v1851
  %v1857 = vlaneseq
  %v1858 = vshrl.u32 %v1857, 7
  %v1859 = vsub.s32 %v662, %v1858
  %v1860 = vrot.slane %v1344, %v1859
  %v1861 = vlaneseq
  %v1862 = vshrl.u32 %v1861, 7
  %v1863 = vsub.s32 %v667, %v1862
  %v1864 = vrot.slane %v1347, %v1863
  %v1865 = vsel %vm672, %v1864, %v1860
  %v1866 = vlaneseq
  %v1867 = vshrl.u32 %v1866, 7
  %v1868 = vsub.s32 %v662, %v1867
  %v1869 = vrot.slane %v1350, %v1868
  %v1870 = vlaneseq
  %v1871 = vshrl.u32 %v1870, 7
  %v1872 = vsub.s32 %v667, %v1871
  %v1873 = vrot.slane %v1353, %v1872
  %v1874 = vsel %vm672, %v1873, %v1869
  %v1875 = vlaneseq
  %v1876 = vshrl.u32 %v1875, 7
  %v1877 = vsub.s32 %v662, %v1876
  %v1878 = vrot.slane %v1356, %v1877
  %v1879 = vlaneseq
  %v1880 = vshrl.u32 %v1879, 7
  %v1881 = vsub.s32 %v667, %v1880
  %v1882 = vrot.slane %v1359, %v1881
  %v1883 = vsel %vm672, %v1882, %v1878
  %v1884 = vlaneseq
  %v1885 = vshrl.u32 %v1884, 7
  %v1886 = vsub.s32 %v662, %v1885
  %v1887 = vrot.slane %v1362, %v1886
  %v1888 = vlaneseq
  %v1889 = vshrl.u32 %v1888, 7
  %v1890 = vsub.s32 %v667, %v1889
  %v1891 = vrot.slane %v1365, %v1890
  %v1892 = vsel %vm672, %v1891, %v1887
  %v1893 = vlaneseq
  %v1894 = vshrl.u32 %v1893, 7
  %v1895 = vsub.s32 %v662, %v1894
  %v1896 = vrot.slane %v1368, %v1895
  %v1897 = vlaneseq
  %v1898 = vshrl.u32 %v1897, 7
  %v1899 = vsub.s32 %v667, %v1898
  %v1900 = vrot.slane %v1371, %v1899
  %v1901 = vsel %vm672, %v1900, %v1896
  %v1902 = vlaneseq
  %v1903 = vshrl.u32 %v1902, 7
  %v1904 = vsub.s32 %v662, %v1903
  %v1905 = vrot.slane %v1374, %v1904
  %v1906 = vlaneseq
  %v1907 = vshrl.u32 %v1906, 7
  %v1908 = vsub.s32 %v667, %v1907
  %v1909 = vrot.slane %v1377, %v1908
  %v1910 = vsel %vm672, %v1909, %v1905
  %v1911 = vlaneseq
  %v1912 = vshrl.u32 %v1911, 7
  %v1913 = vsub.s32 %v662, %v1912
  %v1914 = vrot.slane %v1380, %v1913
  %v1915 = vlaneseq
  %v1916 = vshrl.u32 %v1915, 7
  %v1917 = vsub.s32 %v667, %v1916
  %v1918 = vrot.slane %v1383, %v1917
  %v1919 = vsel %vm672, %v1918, %v1914
  %v1920 = vlaneseq
  %v1921 = vshrl.u32 %v1920, 7
  %v1922 = vsub.s32 %v662, %v1921
  %v1923 = vrot.slane %v1386, %v1922
  %v1924 = vlaneseq
  %v1925 = vshrl.u32 %v1924, 7
  %v1926 = vsub.s32 %v667, %v1925
  %v1927 = vrot.slane %v1389, %v1926
  %v1928 = vsel %vm672, %v1927, %v1923
  %v1929 = vlaneseq
  %v1930 = vshrl.u32 %v1929, 7
  %v1931 = vsub.s32 %v662, %v1930
  %v1932 = vrot.slane %v1392, %v1931
  %v1933 = vlaneseq
  %v1934 = vshrl.u32 %v1933, 7
  %v1935 = vsub.s32 %v667, %v1934
  %v1936 = vrot.slane %v1395, %v1935
  %v1937 = vsel %vm672, %v1936, %v1932
  %v1938 = vlaneseq
  %v1939 = vshrl.u32 %v1938, 7
  %v1940 = vsub.s32 %v662, %v1939
  %v1941 = vrot.slane %v1398, %v1940
  %v1942 = vlaneseq
  %v1943 = vshrl.u32 %v1942, 7
  %v1944 = vsub.s32 %v667, %v1943
  %v1945 = vrot.slane %v1401, %v1944
  %v1946 = vsel %vm672, %v1945, %v1941
  %v1947 = vlaneseq
  %v1948 = vshrl.u32 %v1947, 7
  %v1949 = vsub.s32 %v662, %v1948
  %v1950 = vrot.slane %v1404, %v1949
  %v1951 = vlaneseq
  %v1952 = vshrl.u32 %v1951, 7
  %v1953 = vsub.s32 %v667, %v1952
  %v1954 = vrot.slane %v1407, %v1953
  %v1955 = vsel %vm672, %v1954, %v1950
  %v1956 = vlaneseq
  %v1957 = vshrl.u32 %v1956, 7
  %v1958 = vsub.s32 %v662, %v1957
  %v1959 = vrot.slane %v1410, %v1958
  %v1960 = vlaneseq
  %v1961 = vshrl.u32 %v1960, 7
  %v1962 = vsub.s32 %v667, %v1961
  %v1963 = vrot.slane %v1413, %v1962
  %v1964 = vsel %vm672, %v1963, %v1959
  %v1965 = vlaneseq
  %v1966 = vshrl.u32 %v1965, 7
  %v1967 = vsub.s32 %v662, %v1966
  %v1968 = vrot.slane %v1416, %v1967
  %v1969 = vlaneseq
  %v1970 = vshrl.u32 %v1969, 7
  %v1971 = vsub.s32 %v667, %v1970
  %v1972 = vrot.slane %v1419, %v1971
  %v1973 = vsel %vm672, %v1972, %v1968
  %v1974 = vlaneseq
  %v1975 = vshrl.u32 %v1974, 7
  %v1976 = vsub.s32 %v662, %v1975
  %v1977 = vrot.slane %v1422, %v1976
  %v1978 = vlaneseq
  %v1979 = vshrl.u32 %v1978, 7
  %v1980 = vsub.s32 %v667, %v1979
  %v1981 = vrot.slane %v1425, %v1980
  %v1982 = vsel %vm672, %v1981, %v1977
  %v1983 = vlaneseq
  %v1984 = vshrl.u32 %v1983, 7
  %v1985 = vsub.s32 %v662, %v1984
  %v1986 = vrot.slane %v1428, %v1985
  %v1987 = vlaneseq
  %v1988 = vshrl.u32 %v1987, 7
  %v1989 = vsub.s32 %v667, %v1988
  %v1990 = vrot.slane %v1431, %v1989
  %v1991 = vsel %vm672, %v1990, %v1986
  %v1992 = vlaneseq
  %v1993 = vshrl.u32 %v1992, 7
  %v1994 = vsub.s32 %v662, %v1993
  %v1995 = vrot.slane %v1434, %v1994
  %v1996 = vlaneseq
  %v1997 = vshrl.u32 %v1996, 7
  %v1998 = vsub.s32 %v667, %v1997
  %v1999 = vrot.slane %v1437, %v1998
  %v2000 = vsel %vm672, %v1999, %v1995
  %v2001 = vlaneseq
  %v2002 = vshrl.u32 %v2001, 7
  %v2003 = vsub.s32 %v662, %v2002
  %v2004 = vrot.slane %v1440, %v2003
  %v2005 = vlaneseq
  %v2006 = vshrl.u32 %v2005, 7
  %v2007 = vsub.s32 %v667, %v2006
  %v2008 = vrot.slane %v1443, %v2007
  %v2009 = vsel %vm672, %v2008, %v2004
  %v2010 = vlaneseq
  %v2011 = vshrl.u32 %v2010, 7
  %v2012 = vsub.s32 %v662, %v2011
  %v2013 = vrot.slane %v1446, %v2012
  %v2014 = vlaneseq
  %v2015 = vshrl.u32 %v2014, 7
  %v2016 = vsub.s32 %v667, %v2015
  %v2017 = vrot.slane %v1449, %v2016
  %v2018 = vsel %vm672, %v2017, %v2013
  %v2019 = vlaneseq
  %v2020 = vshrl.u32 %v2019, 7
  %v2021 = vsub.s32 %v662, %v2020
  %v2022 = vrot.slane %v1452, %v2021
  %v2023 = vlaneseq
  %v2024 = vshrl.u32 %v2023, 7
  %v2025 = vsub.s32 %v667, %v2024
  %v2026 = vrot.slane %v1455, %v2025
  %v2027 = vsel %vm672, %v2026, %v2022
  %v2028 = vlaneseq
  %v2029 = vshrl.u32 %v2028, 7
  %v2030 = vsub.s32 %v662, %v2029
  %v2031 = vrot.slane %v1458, %v2030
  %v2032 = vlaneseq
  %v2033 = vshrl.u32 %v2032, 7
  %v2034 = vsub.s32 %v667, %v2033
  %v2035 = vrot.slane %v1461, %v2034
  %v2036 = vsel %vm672, %v2035, %v2031
  %v2037 = vlaneseq
  %v2038 = vshrl.u32 %v2037, 7
  %v2039 = vsub.s32 %v662, %v2038
  %v2040 = vrot.slane %v1464, %v2039
  %v2041 = vlaneseq
  %v2042 = vshrl.u32 %v2041, 7
  %v2043 = vsub.s32 %v667, %v2042
  %v2044 = vrot.slane %v1467, %v2043
  %v2045 = vsel %vm672, %v2044, %v2040
  %v2046 = vlaneseq
  %v2047 = vshrl.u32 %v2046, 7
  %v2048 = vsub.s32 %v662, %v2047
  %v2049 = vrot.slane %v1470, %v2048
  %v2050 = vlaneseq
  %v2051 = vshrl.u32 %v2050, 7
  %v2052 = vsub.s32 %v667, %v2051
  %v2053 = vrot.slane %v1473, %v2052
  %v2054 = vsel %vm672, %v2053, %v2049
  %v2055 = vlaneseq
  %v2056 = vshrl.u32 %v2055, 7
  %v2057 = vsub.s32 %v662, %v2056
  %v2058 = vrot.slane %v1476, %v2057
  %v2059 = vlaneseq
  %v2060 = vshrl.u32 %v2059, 7
  %v2061 = vsub.s32 %v667, %v2060
  %v2062 = vrot.slane %v1479, %v2061
  %v2063 = vsel %vm672, %v2062, %v2058
  %v2064 = vlaneseq
  %v2065 = vshrl.u32 %v2064, 7
  %v2066 = vsub.s32 %v662, %v2065
  %v2067 = vrot.slane %v1482, %v2066
  %v2068 = vlaneseq
  %v2069 = vshrl.u32 %v2068, 7
  %v2070 = vsub.s32 %v667, %v2069
  %v2071 = vrot.slane %v1485, %v2070
  %v2072 = vsel %vm672, %v2071, %v2067
  %v2073 = vlaneseq
  %v2074 = vshrl.u32 %v2073, 7
  %v2075 = vsub.s32 %v662, %v2074
  %v2076 = vrot.slane %v1488, %v2075
  %v2077 = vlaneseq
  %v2078 = vshrl.u32 %v2077, 7
  %v2079 = vsub.s32 %v667, %v2078
  %v2080 = vrot.slane %v1491, %v2079
  %v2081 = vsel %vm672, %v2080, %v2076
  %v2082 = vlaneseq
  %v2083 = vshrl.u32 %v2082, 7
  %v2084 = vsub.s32 %v662, %v2083
  %v2085 = vrot.slane %v1494, %v2084
  %v2086 = vlaneseq
  %v2087 = vshrl.u32 %v2086, 7
  %v2088 = vsub.s32 %v667, %v2087
  %v2089 = vrot.slane %v1497, %v2088
  %v2090 = vsel %vm672, %v2089, %v2085
  %v2091 = vlaneseq
  %v2092 = vshrl.u32 %v2091, 7
  %v2093 = vsub.s32 %v662, %v2092
  %v2094 = vrot.slane %v1500, %v2093
  %v2095 = vlaneseq
  %v2096 = vshrl.u32 %v2095, 7
  %v2097 = vsub.s32 %v667, %v2096
  %v2098 = vrot.slane %v1503, %v2097
  %v2099 = vsel %vm672, %v2098, %v2094
  %v2100 = vlaneseq
  %v2101 = vshrl.u32 %v2100, 7
  %v2102 = vsub.s32 %v662, %v2101
  %v2103 = vrot.slane %v1506, %v2102
  %v2104 = vlaneseq
  %v2105 = vshrl.u32 %v2104, 7
  %v2106 = vsub.s32 %v667, %v2105
  %v2107 = vrot.slane %v1509, %v2106
  %v2108 = vsel %vm672, %v2107, %v2103
  %v2109 = vlaneseq
  %v2110 = vshrl.u32 %v2109, 7
  %v2111 = vsub.s32 %v662, %v2110
  %v2112 = vrot.slane %v1512, %v2111
  %v2113 = vlaneseq
  %v2114 = vshrl.u32 %v2113, 7
  %v2115 = vsub.s32 %v667, %v2114
  %v2116 = vrot.slane %v1515, %v2115
  %v2117 = vsel %vm672, %v2116, %v2112
  %v2118 = vlaneseq
  %v2119 = vshrl.u32 %v2118, 7
  %v2120 = vsub.s32 %v662, %v2119
  %v2121 = vrot.slane %v1518, %v2120
  %v2122 = vlaneseq
  %v2123 = vshrl.u32 %v2122, 7
  %v2124 = vsub.s32 %v667, %v2123
  %v2125 = vrot.slane %v1521, %v2124
  %v2126 = vsel %vm672, %v2125, %v2121
  %v2127 = vlaneseq
  %v2128 = vshrl.u32 %v2127, 7
  %v2129 = vsub.s32 %v662, %v2128
  %v2130 = vrot.slane %v1524, %v2129
  %v2131 = vlaneseq
  %v2132 = vshrl.u32 %v2131, 7
  %v2133 = vsub.s32 %v667, %v2132
  %v2134 = vrot.slane %v1527, %v2133
  %v2135 = vsel %vm672, %v2134, %v2130
  %v2136 = vlaneseq
  %v2137 = vshrl.u32 %v2136, 7
  %v2138 = vsub.s32 %v662, %v2137
  %v2139 = vrot.slane %v1530, %v2138
  %v2140 = vlaneseq
  %v2141 = vshrl.u32 %v2140, 7
  %v2142 = vsub.s32 %v667, %v2141
  %v2143 = vrot.slane %v1533, %v2142
  %v2144 = vsel %vm672, %v2143, %v2139
  %v2145 = vlaneseq
  %v2146 = vshrl.u32 %v2145, 7
  %v2147 = vsub.s32 %v662, %v2146
  %v2148 = vrot.slane %v1536, %v2147
  %v2149 = vlaneseq
  %v2150 = vshrl.u32 %v2149, 7
  %v2151 = vsub.s32 %v667, %v2150
  %v2152 = vrot.slane %v1539, %v2151
  %v2153 = vsel %vm672, %v2152, %v2148
  %v2154 = vlaneseq
  %v2155 = vshrl.u32 %v2154, 7
  %v2156 = vsub.s32 %v662, %v2155
  %v2157 = vrot.slane %v1542, %v2156
  %v2158 = vlaneseq
  %v2159 = vshrl.u32 %v2158, 7
  %v2160 = vsub.s32 %v667, %v2159
  %v2161 = vrot.slane %v1545, %v2160
  %v2162 = vsel %vm672, %v2161, %v2157
  %v2163 = vlaneseq
  %v2164 = vshrl.u32 %v2163, 7
  %v2165 = vsub.s32 %v662, %v2164
  %v2166 = vrot.slane %v1548, %v2165
  %v2167 = vlaneseq
  %v2168 = vshrl.u32 %v2167, 7
  %v2169 = vsub.s32 %v667, %v2168
  %v2170 = vrot.slane %v1551, %v2169
  %v2171 = vsel %vm672, %v2170, %v2166
  %v2172 = vlaneseq
  %v2173 = vshrl.u32 %v2172, 7
  %v2174 = vsub.s32 %v662, %v2173
  %v2175 = vrot.slane %v1554, %v2174
  %v2176 = vlaneseq
  %v2177 = vshrl.u32 %v2176, 7
  %v2178 = vsub.s32 %v667, %v2177
  %v2179 = vrot.slane %v1557, %v2178
  %v2180 = vsel %vm672, %v2179, %v2175
  %v2181 = vlaneseq
  %v2182 = vshrl.u32 %v2181, 7
  %v2183 = vsub.s32 %v662, %v2182
  %v2184 = vrot.slane %v1560, %v2183
  %v2185 = vlaneseq
  %v2186 = vshrl.u32 %v2185, 7
  %v2187 = vsub.s32 %v667, %v2186
  %v2188 = vrot.slane %v1563, %v2187
  %v2189 = vsel %vm672, %v2188, %v2184
  %v2190 = vlaneseq
  %v2191 = vshrl.u32 %v2190, 7
  %v2192 = vsub.s32 %v662, %v2191
  %v2193 = vrot.slane %v1566, %v2192
  %v2194 = vlaneseq
  %v2195 = vshrl.u32 %v2194, 7
  %v2196 = vsub.s32 %v667, %v2195
  %v2197 = vrot.slane %v1569, %v2196
  %v2198 = vsel %vm672, %v2197, %v2193
  %v2199 = vlaneseq
  %v2200 = vshrl.u32 %v2199, 7
  %v2201 = vsub.s32 %v662, %v2200
  %v2202 = vrot.slane %v1572, %v2201
  %v2203 = vlaneseq
  %v2204 = vshrl.u32 %v2203, 7
  %v2205 = vsub.s32 %v667, %v2204
  %v2206 = vrot.slane %v1575, %v2205
  %v2207 = vsel %vm672, %v2206, %v2202
  %v2208 = vlaneseq
  %v2209 = vshrl.u32 %v2208, 7
  %v2210 = vsub.s32 %v662, %v2209
  %v2211 = vrot.slane %v1578, %v2210
  %v2212 = vlaneseq
  %v2213 = vshrl.u32 %v2212, 7
  %v2214 = vsub.s32 %v667, %v2213
  %v2215 = vrot.slane %v1581, %v2214
  %v2216 = vsel %vm672, %v2215, %v2211
  %v2217 = vlaneseq
  %v2218 = vshrl.u32 %v2217, 7
  %v2219 = vsub.s32 %v662, %v2218
  %v2220 = vrot.slane %v1584, %v2219
  %v2221 = vlaneseq
  %v2222 = vshrl.u32 %v2221, 7
  %v2223 = vsub.s32 %v667, %v2222
  %v2224 = vrot.slane %v1587, %v2223
  %v2225 = vsel %vm672, %v2224, %v2220
  %v2226 = vlaneseq
  %v2227 = vshrl.u32 %v2226, 7
  %v2228 = vsub.s32 %v662, %v2227
  %v2229 = vrot.slane %v1590, %v2228
  %v2230 = vlaneseq
  %v2231 = vshrl.u32 %v2230, 7
  %v2232 = vsub.s32 %v667, %v2231
  %v2233 = vrot.slane %v1593, %v2232
  %v2234 = vsel %vm672, %v2233, %v2229
  %v2235 = vlaneseq
  %v2236 = vshrl.u32 %v2235, 7
  %v2237 = vsub.s32 %v662, %v2236
  %v2238 = vrot.slane %v1596, %v2237
  %v2239 = vlaneseq
  %v2240 = vshrl.u32 %v2239, 7
  %v2241 = vsub.s32 %v667, %v2240
  %v2242 = vrot.slane %v1599, %v2241
  %v2243 = vsel %vm672, %v2242, %v2238
  %v2244 = vlaneseq
  %v2245 = vshrl.u32 %v2244, 7
  %v2246 = vsub.s32 %v662, %v2245
  %v2247 = vrot.slane %v1602, %v2246
  %v2248 = vlaneseq
  %v2249 = vshrl.u32 %v2248, 7
  %v2250 = vsub.s32 %v667, %v2249
  %v2251 = vrot.slane %v1605, %v2250
  %v2252 = vsel %vm672, %v2251, %v2247
  %v2253 = vlaneseq
  %v2254 = vshrl.u32 %v2253, 7
  %v2255 = vsub.s32 %v662, %v2254
  %v2256 = vrot.slane %v1608, %v2255
  %v2257 = vlaneseq
  %v2258 = vshrl.u32 %v2257, 7
  %v2259 = vsub.s32 %v667, %v2258
  %v2260 = vrot.slane %v1611, %v2259
  %v2261 = vsel %vm672, %v2260, %v2256
  %v2262 = vlaneseq
  %v2263 = vshrl.u32 %v2262, 7
  %v2264 = vsub.s32 %v662, %v2263
  %v2265 = vrot.slane %v1614, %v2264
  %v2266 = vlaneseq
  %v2267 = vshrl.u32 %v2266, 7
  %v2268 = vsub.s32 %v667, %v2267
  %v2269 = vrot.slane %v1617, %v2268
  %v2270 = vsel %vm672, %v2269, %v2265
  %v2271 = vlaneseq
  %v2272 = vshrl.u32 %v2271, 7
  %v2273 = vsub.s32 %v662, %v2272
  %v2274 = vrot.slane %v1620, %v2273
  %v2275 = vlaneseq
  %v2276 = vshrl.u32 %v2275, 7
  %v2277 = vsub.s32 %v667, %v2276
  %v2278 = vrot.slane %v1623, %v2277
  %v2279 = vsel %vm672, %v2278, %v2274
  %v2280 = vlaneseq
  %v2281 = vshrl.u32 %v2280, 7
  %v2282 = vsub.s32 %v662, %v2281
  %v2283 = vrot.slane %v1626, %v2282
  %v2284 = vlaneseq
  %v2285 = vshrl.u32 %v2284, 7
  %v2286 = vsub.s32 %v667, %v2285
  %v2287 = vrot.slane %v1629, %v2286
  %v2288 = vsel %vm672, %v2287, %v2283
  %v2289 = vlaneseq
  %v2290 = vshrl.u32 %v2289, 7
  %v2291 = vsub.s32 %v662, %v2290
  %v2292 = vrot.slane %v1632, %v2291
  %v2293 = vlaneseq
  %v2294 = vshrl.u32 %v2293, 7
  %v2295 = vsub.s32 %v667, %v2294
  %v2296 = vrot.slane %v1635, %v2295
  %v2297 = vsel %vm672, %v2296, %v2292
  %v2298 = vlaneseq
  %v2299 = vshrl.u32 %v2298, 7
  %v2300 = vsub.s32 %v662, %v2299
  %v2301 = vrot.slane %v1638, %v2300
  %v2302 = vlaneseq
  %v2303 = vshrl.u32 %v2302, 7
  %v2304 = vsub.s32 %v667, %v2303
  %v2305 = vrot.slane %v1641, %v2304
  %v2306 = vsel %vm672, %v2305, %v2301
  %v2307 = vlaneseq
  %v2308 = vshrl.u32 %v2307, 7
  %v2309 = vsub.s32 %v662, %v2308
  %v2310 = vrot.slane %v1644, %v2309
  %v2311 = vlaneseq
  %v2312 = vshrl.u32 %v2311, 7
  %v2313 = vsub.s32 %v667, %v2312
  %v2314 = vrot.slane %v1647, %v2313
  %v2315 = vsel %vm672, %v2314, %v2310
  %v2316 = vlaneseq
  %v2317 = vshrl.u32 %v2316, 7
  %v2318 = vsub.s32 %v662, %v2317
  %v2319 = vrot.slane %v1650, %v2318
  %v2320 = vlaneseq
  %v2321 = vshrl.u32 %v2320, 7
  %v2322 = vsub.s32 %v667, %v2321
  %v2323 = vrot.slane %v1653, %v2322
  %v2324 = vsel %vm672, %v2323, %v2319
  %v2325 = vlaneseq
  %v2326 = vshrl.u32 %v2325, 7
  %v2327 = vsub.s32 %v662, %v2326
  %v2328 = vrot.slane %v1656, %v2327
  %v2329 = vlaneseq
  %v2330 = vshrl.u32 %v2329, 7
  %v2331 = vsub.s32 %v667, %v2330
  %v2332 = vrot.slane %v1659, %v2331
  %v2333 = vsel %vm672, %v2332, %v2328
  %v2334 = vlaneseq
  %v2335 = vshrl.u32 %v2334, 7
  %v2336 = vsub.s32 %v662, %v2335
  %v2337 = vrot.slane %v1662, %v2336
  %v2338 = vlaneseq
  %v2339 = vshrl.u32 %v2338, 7
  %v2340 = vsub.s32 %v667, %v2339
  %v2341 = vrot.slane %v1665, %v2340
  %v2342 = vsel %vm672, %v2341, %v2337
  %v2343 = vlaneseq
  %v2344 = vshrl.u32 %v2343, 7
  %v2345 = vsub.s32 %v662, %v2344
  %v2346 = vrot.slane %v1668, %v2345
  %v2347 = vlaneseq
  %v2348 = vshrl.u32 %v2347, 7
  %v2349 = vsub.s32 %v667, %v2348
  %v2350 = vrot.slane %v1671, %v2349
  %v2351 = vsel %vm672, %v2350, %v2346
  %v2352 = vlaneseq
  %v2353 = vshrl.u32 %v2352, 7
  %v2354 = vsub.s32 %v662, %v2353
  %v2355 = vrot.slane %v1674, %v2354
  %v2356 = vlaneseq
  %v2357 = vshrl.u32 %v2356, 7
  %v2358 = vsub.s32 %v667, %v2357
  %v2359 = vrot.slane %v1677, %v2358
  %v2360 = vsel %vm672, %v2359, %v2355
  %v2361 = vlaneseq
  %v2362 = vshrl.u32 %v2361, 7
  %v2363 = vsub.s32 %v662, %v2362
  %v2364 = vrot.slane %v1680, %v2363
  %v2365 = vlaneseq
  %v2366 = vshrl.u32 %v2365, 7
  %v2367 = vsub.s32 %v667, %v2366
  %v2368 = vrot.slane %v1683, %v2367
  %v2369 = vsel %vm672, %v2368, %v2364
  %v2370 = vlaneseq
  %v2371 = vshrl.u32 %v2370, 7
  %v2372 = vsub.s32 %v662, %v2371
  %v2373 = vrot.slane %v1686, %v2372
  %v2374 = vlaneseq
  %v2375 = vshrl.u32 %v2374, 7
  %v2376 = vsub.s32 %v667, %v2375
  %v2377 = vrot.slane %v1689, %v2376
  %v2378 = vsel %vm672, %v2377, %v2373
  %v2379 = vlaneseq
  %v2380 = vshrl.u32 %v2379, 7
  %v2381 = vsub.s32 %v662, %v2380
  %v2382 = vrot.slane %v1692, %v2381
  %v2383 = vlaneseq
  %v2384 = vshrl.u32 %v2383, 7
  %v2385 = vsub.s32 %v667, %v2384
  %v2386 = vrot.slane %v1695, %v2385
  %v2387 = vsel %vm672, %v2386, %v2382
  %v2388 = vlaneseq
  %v2389 = vshrl.u32 %v2388, 7
  %v2390 = vsub.s32 %v662, %v2389
  %v2391 = vrot.slane %v1698, %v2390
  %v2392 = vlaneseq
  %v2393 = vshrl.u32 %v2392, 7
  %v2394 = vsub.s32 %v667, %v2393
  %v2395 = vrot.slane %v1701, %v2394
  %v2396 = vsel %vm672, %v2395, %v2391
  %v2397 = vlaneseq
  %v2398 = vshrl.u32 %v2397, 7
  %v2399 = vsub.s32 %v662, %v2398
  %v2400 = vrot.slane %v1704, %v2399
  %v2401 = vlaneseq
  %v2402 = vshrl.u32 %v2401, 7
  %v2403 = vsub.s32 %v667, %v2402
  %v2404 = vrot.slane %v1707, %v2403
  %v2405 = vsel %vm672, %v2404, %v2400
  %v2406 = vlaneseq
  %v2407 = vshrl.u32 %v2406, 7
  %v2408 = vsub.s32 %v662, %v2407
  %v2409 = vrot.slane %v1710, %v2408
  %v2410 = vlaneseq
  %v2411 = vshrl.u32 %v2410, 7
  %v2412 = vsub.s32 %v667, %v2411
  %v2413 = vrot.slane %v1713, %v2412
  %v2414 = vsel %vm672, %v2413, %v2409
  %v2415 = vlaneseq
  %v2416 = vshrl.u32 %v2415, 7
  %v2417 = vsub.s32 %v662, %v2416
  %v2418 = vrot.slane %v1716, %v2417
  %v2419 = vlaneseq
  %v2420 = vshrl.u32 %v2419, 7
  %v2421 = vsub.s32 %v667, %v2420
  %v2422 = vrot.slane %v1719, %v2421
  %v2423 = vsel %vm672, %v2422, %v2418
  %v2424 = vsel %vm1241, %v1865, %v1856
  %v2425 = vsel %vm1243, %v1874, %v2424
  %v2426 = vsel %vm1245, %v1883, %v2425
  %v2427 = vsel %vm1247, %v1892, %v2426
  %v2428 = vsel %vm1249, %v1901, %v2427
  %v2429 = vsel %vm1251, %v1910, %v2428
  %v2430 = vsel %vm1253, %v1919, %v2429
  %v2431 = vsel %vm1241, %v1937, %v1928
  %v2432 = vsel %vm1243, %v1946, %v2431
  %v2433 = vsel %vm1245, %v1955, %v2432
  %v2434 = vsel %vm1247, %v1964, %v2433
  %v2435 = vsel %vm1249, %v1973, %v2434
  %v2436 = vsel %vm1251, %v1982, %v2435
  %v2437 = vsel %vm1253, %v1991, %v2436
  %v2438 = vsel %vm1241, %v2009, %v2000
  %v2439 = vsel %vm1243, %v2018, %v2438
  %v2440 = vsel %vm1245, %v2027, %v2439
  %v2441 = vsel %vm1247, %v2036, %v2440
  %v2442 = vsel %vm1249, %v2045, %v2441
  %v2443 = vsel %vm1251, %v2054, %v2442
  %v2444 = vsel %vm1253, %v2063, %v2443
  %v2445 = vsel %vm1241, %v2081, %v2072
  %v2446 = vsel %vm1243, %v2090, %v2445
  %v2447 = vsel %vm1245, %v2099, %v2446
  %v2448 = vsel %vm1247, %v2108, %v2447
  %v2449 = vsel %vm1249, %v2117, %v2448
  %v2450 = vsel %vm1251, %v2126, %v2449
  %v2451 = vsel %vm1253, %v2135, %v2450
  %v2452 = vsel %vm1241, %v2153, %v2144
  %v2453 = vsel %vm1243, %v2162, %v2452
  %v2454 = vsel %vm1245, %v2171, %v2453
  %v2455 = vsel %vm1247, %v2180, %v2454
  %v2456 = vsel %vm1249, %v2189, %v2455
  %v2457 = vsel %vm1251, %v2198, %v2456
  %v2458 = vsel %vm1253, %v2207, %v2457
  %v2459 = vsel %vm1241, %v2225, %v2216
  %v2460 = vsel %vm1243, %v2234, %v2459
  %v2461 = vsel %vm1245, %v2243, %v2460
  %v2462 = vsel %vm1247, %v2252, %v2461
  %v2463 = vsel %vm1249, %v2261, %v2462
  %v2464 = vsel %vm1251, %v2270, %v2463
  %v2465 = vsel %vm1253, %v2279, %v2464
  %v2466 = vsel %vm1241, %v2297, %v2288
  %v2467 = vsel %vm1243, %v2306, %v2466
  %v2468 = vsel %vm1245, %v2315, %v2467
  %v2469 = vsel %vm1247, %v2324, %v2468
  %v2470 = vsel %vm1249, %v2333, %v2469
  %v2471 = vsel %vm1251, %v2342, %v2470
  %v2472 = vsel %vm1253, %v2351, %v2471
  %v2473 = vsel %vm1241, %v2369, %v2360
  %v2474 = vsel %vm1243, %v2378, %v2473
  %v2475 = vsel %vm1245, %v2387, %v2474
  %v2476 = vsel %vm1247, %v2396, %v2475
  %v2477 = vsel %vm1249, %v2405, %v2476
  %v2478 = vsel %vm1251, %v2414, %v2477
  %v2479 = vsel %vm1253, %v2423, %v2478
  %v2488 = vsel %vm148, %v2430, -inf
  %2489 = vmax.xlane.f32.xlu0 %v2488
  %v2490 = vpop.xlane.xlu0 %2489
  %v2491 = vsel %vm148, %v2437, -inf
  %2492 = vmax.xlane.f32.xlu0 %v2491
  %v2493 = vpop.xlane.xlu0 %2492
  %v2494 = vsel %vm148, %v2444, -inf
  %2495 = vmax.xlane.f32.xlu0 %v2494
  %v2496 = vpop.xlane.xlu0 %2495
  %v2497 = vsel %vm148, %v2451, -inf
  %2498 = vmax.xlane.f32.xlu0 %v2497
  %v2499 = vpop.xlane.xlu0 %2498
  %v2500 = vsel %vm148, %v2458, -inf
  %2501 = vmax.xlane.f32.xlu0 %v2500
  %v2502 = vpop.xlane.xlu0 %2501
  %v2503 = vsel %vm148, %v2465, -inf
  %2504 = vmax.xlane.f32.xlu0 %v2503
  %v2505 = vpop.xlane.xlu0 %2504
  %v2506 = vsel %vm148, %v2472, -inf
  %2507 = vmax.xlane.f32.xlu0 %v2506
  %v2508 = vpop.xlane.xlu0 %2507
  %v2509 = vsel %vm148, %v2479, -inf
  %2510 = vmax.xlane.f32.xlu0 %v2509
  %v2511 = vpop.xlane.xlu0 %2510
  %v2512 = vmul.f32 %v1314, 0.00390625
  %v2513 = vmul.f32 %v1317, 0.00390625
  %v2514 = vmul.f32 %v1320, 0.00390625
  %v2515 = vmul.f32 %v1323, 0.00390625
  %v2516 = vmul.f32 %v1326, 0.00390625
  %v2517 = vmul.f32 %v1329, 0.00390625
  %v2518 = vmul.f32 %v1332, 0.00390625
  %v2519 = vmul.f32 %v1335, 0.00390625
  %v2520 = vld [vmem:[%s1] sm:$0xff]
  %v2521 = vld [vmem:[%s1 + $0x8] sm:$0xff]
  %v2522 = vld [vmem:[%s1 + $0x10] sm:$0xff]
  %v2523 = vld [vmem:[%s1 + $0x18] sm:$0xff]
  %v2524 = vld [vmem:[%s2] sm:$0x1]
  %v2525 = vld [vmem:[%s3] sm:$0x3]
  %v2526 = vld [vmem:[%s4] sm:$0x1]
  %v2528 = vlaneseq
  %v2529 = vshrl.u32 %v2528, 7
  %v2530 = vsub.s32 0, %v2529
  %v2531 = vrot.slane %v2524, %v2530
  %v2541 = vlaneseq
  %v2542 = vshrl.u32 %v2541, 7
  %v2543 = vsub.s32 %v662, %v2542
  %v2544 = vrot.slane %v2512, %v2543
  %v2545 = vlaneseq
  %v2546 = vshrl.u32 %v2545, 7
  %v2547 = vsub.s32 %v667, %v2546
  %v2548 = vrot.slane %v2513, %v2547
  %v2549 = vsel %vm672, %v2548, %v2544
  %v2550 = vadd.s32 %v662, 4294967280
  %v2551 = vlaneseq
  %v2552 = vshrl.u32 %v2551, 7
  %v2553 = vsub.s32 %v2550, %v2552
  %v2554 = vrot.slane %v2514, %v2553
  %vm2555 = vcmask 195712
  %v2556 = vsel %vm2555, %v2554, %v2549
  %v2557 = vadd.s32 %v662, 4294967272
  %v2558 = vlaneseq
  %v2559 = vshrl.u32 %v2558, 7
  %v2560 = vsub.s32 %v2557, %v2559
  %v2561 = vrot.slane %v2515, %v2560
  %vm2562 = vcmask 261312
  %v2563 = vsel %vm2562, %v2561, %v2556
  %v2564 = vlaneseq
  %v2565 = vshrl.u32 %v2564, 7
  %v2566 = vsub.s32 %v662, %v2565
  %v2567 = vrot.slane %v2516, %v2566
  %v2568 = vlaneseq
  %v2569 = vshrl.u32 %v2568, 7
  %v2570 = vsub.s32 %v667, %v2569
  %v2571 = vrot.slane %v2517, %v2570
  %v2572 = vsel %vm672, %v2571, %v2567
  %v2573 = vlaneseq
  %v2574 = vshrl.u32 %v2573, 7
  %v2575 = vsub.s32 %v2550, %v2574
  %v2576 = vrot.slane %v2518, %v2575
  %v2577 = vsel %vm2555, %v2576, %v2572
  %v2578 = vlaneseq
  %v2579 = vshrl.u32 %v2578, 7
  %v2580 = vsub.s32 %v2557, %v2579
  %v2581 = vrot.slane %v2519, %v2580
  %v2582 = vsel %vm2562, %v2581, %v2577
  %v2583 = vsel %vm1241, %v2582, %v2563
  %vm2584 = vcmask 261120
  %v2585 = vsel %vm2584, %v2583, 0
  %2587 = vmatprep.subr.mxu0 0.0
  %2588 = vmatpush1.msra.mxu0 0.0
  %2589 = vmatprep.subr.mxu0 0.0
  %2590 = vmatpush1.msra.mxu0 0.0
  %2591 = vmatprep.subr.mxu0 0.0
  %2592 = vmatpush1.msra.mxu0 0.0
  %2593 = vmatprep.subr.mxu0 0.0
  %2594 = vmatpush1.msra.mxu0 0.0
  %2595 = vmatprep.subr.mxu0 0.0
  %2596 = vmatpush1.msra.mxu0 0.0
  %2597 = vmatprep.subr.mxu0 0.0
  %2598 = vmatpush1.msra.mxu0 0.0
  %2599 = vmatprep.subr.mxu0 0.0
  %2600 = vmatpush1.msra.mxu0 0.0
  %2601 = vmatprep.subr.mxu0 0.0
  %2602 = vmatpush1.msra.mxu0 0.0
  %2603 = vmatprep.subr.mxu0 0.0
  %2604 = vmatpush1.msra.mxu0 0.0
  %2605 = vmatprep.subr.mxu0 0.0
  %2606 = vmatpush1.msra.mxu0 0.0
  %2607 = vmatprep.subr.mxu0 0.0
  %2608 = vmatpush1.msra.mxu0 0.0
  %2609 = vmatprep.subr.mxu0 0.0
  %2610 = vmatpush1.msra.mxu0 0.0
  %2611 = vmatprep.subr.mxu0 0.0
  %2612 = vmatpush1.msra.mxu0 %v2523
  %2613 = vmatprep.subr.mxu0 0.0
  %2614 = vmatpush1.msra.mxu0 %v2522
  %2615 = vmatprep.subr.mxu0 0.0
  %2616 = vmatpush1.msra.mxu0 %v2521
  %2617 = vmatprep.subr.mxu0 0.0
  %2618 = vmatpush1.msra.mxu0 %v2520
  %2619 = vmatprep.subr.mxu0 0.0
  %2620 = vmatpush2.msra.mxu0 0.0
  %2621 = vmatprep.subr.mxu0 0.0
  %2622 = vmatpush2.msra.mxu0 0.0
  %2623 = vmatprep.subr.mxu0 0.0
  %2624 = vmatpush2.msra.mxu0 0.0
  %2625 = vmatprep.subr.mxu0 0.0
  %2626 = vmatpush2.msra.mxu0 0.0
  %2627 = vmatprep.subr.mxu0 0.0
  %2628 = vmatpush2.msra.mxu0 0.0
  %2629 = vmatprep.subr.mxu0 0.0
  %2630 = vmatpush2.msra.mxu0 0.0
  %2631 = vmatprep.subr.mxu0 0.0
  %2632 = vmatpush2.msra.mxu0 0.0
  %2633 = vmatprep.subr.mxu0 0.0
  %2634 = vmatpush2.msra.mxu0 0.0
  %2635 = vmatprep.subr.mxu0 0.0
  %2636 = vmatpush2.msra.mxu0 0.0
  %2637 = vmatprep.subr.mxu0 0.0
  %2638 = vmatpush2.msra.mxu0 0.0
  %2639 = vmatprep.subr.mxu0 0.0
  %2640 = vmatpush2.msra.mxu0 0.0
  %2641 = vmatprep.subr.mxu0 0.0
  %2642 = vmatpush2.msra.mxu0 0.0
  %2643 = vmatprep.subr.mxu0 0.0
  %2644 = vmatpush2.msra.mxu0 0.0
  %2645 = vmatprep.subr.mxu0 0.0
  %2646 = vmatpush2.msra.mxu0 0.0
  %2647 = vmatprep.subr.mxu0 0.0
  %2648 = vmatpush2.msra.mxu0 0.0
  %2649 = vmatprep.subr.mxu0 0.0
  %2650 = vmatpush2.msra.mxu0 0.0
  %2651 = vmatprep.mubr.f32.mxu0 0.0
  %2652 = vmatmul.mubr.f32.gmra.mxu0 %v2585
  %v2653 = vpop.f32.mrf.mxu0
  %v2654 = vadd.f32 %v2531, %v2653
  %v2655 = vpop.f32.mrf.mxu0
  %2656 = vdwg.mxu0
  %v2657 = vmax.f32 %v2654, 0.0
  %v2659 = vlaneseq
  %v2660 = vshrl.u32 %v2659, 7
  %v2661 = vsub.s32 0, %v2660
  %v2662 = vrot.slane %v2526, %v2661
  %vm2664 = vcmask 15360
  %v2666 = vsel %vm2664, %v2657, 0
  %vm2668 = vcmask 1041408
  %v2670 = vsel %vm2668, %v2525, 0
  %2672 = vmatprep.subr.mxu0 0.0
  %2673 = vmatpush1.msra.mxu0 0.0
  %2674 = vmatprep.subr.mxu0 0.0
  %2675 = vmatpush1.msra.mxu0 0.0
  %2676 = vmatprep.subr.mxu0 0.0
  %2677 = vmatpush1.msra.mxu0 0.0
  %2678 = vmatprep.subr.mxu0 0.0
  %2679 = vmatpush1.msra.mxu0 0.0
  %2680 = vmatprep.subr.mxu0 0.0
  %2681 = vmatpush1.msra.mxu0 0.0
  %2682 = vmatprep.subr.mxu0 0.0
  %2683 = vmatpush1.msra.mxu0 0.0
  %2684 = vmatprep.subr.mxu0 0.0
  %2685 = vmatpush1.msra.mxu0 0.0
  %2686 = vmatprep.subr.mxu0 0.0
  %2687 = vmatpush1.msra.mxu0 0.0
  %2688 = vmatprep.subr.mxu0 0.0
  %2689 = vmatpush1.msra.mxu0 0.0
  %2690 = vmatprep.subr.mxu0 0.0
  %2691 = vmatpush1.msra.mxu0 0.0
  %2692 = vmatprep.subr.mxu0 0.0
  %2693 = vmatpush1.msra.mxu0 0.0
  %2694 = vmatprep.subr.mxu0 0.0
  %2695 = vmatpush1.msra.mxu0 0.0
  %2696 = vmatprep.subr.mxu0 0.0
  %2697 = vmatpush1.msra.mxu0 0.0
  %2698 = vmatprep.subr.mxu0 0.0
  %2699 = vmatpush1.msra.mxu0 0.0
  %2700 = vmatprep.subr.mxu0 0.0
  %2701 = vmatpush1.msra.mxu0 0.0
  %2702 = vmatprep.subr.mxu0 0.0
  %2703 = vmatpush1.msra.mxu0 %v2670
  %2704 = vmatprep.subr.mxu0 0.0
  %2705 = vmatpush2.msra.mxu0 0.0
  %2706 = vmatprep.subr.mxu0 0.0
  %2707 = vmatpush2.msra.mxu0 0.0
  %2708 = vmatprep.subr.mxu0 0.0
  %2709 = vmatpush2.msra.mxu0 0.0
  %2710 = vmatprep.subr.mxu0 0.0
  %2711 = vmatpush2.msra.mxu0 0.0
  %2712 = vmatprep.subr.mxu0 0.0
  %2713 = vmatpush2.msra.mxu0 0.0
  %2714 = vmatprep.subr.mxu0 0.0
  %2715 = vmatpush2.msra.mxu0 0.0
  %2716 = vmatprep.subr.mxu0 0.0
  %2717 = vmatpush2.msra.mxu0 0.0
  %2718 = vmatprep.subr.mxu0 0.0
  %2719 = vmatpush2.msra.mxu0 0.0
  %2720 = vmatprep.subr.mxu0 0.0
  %2721 = vmatpush2.msra.mxu0 0.0
  %2722 = vmatprep.subr.mxu0 0.0
  %2723 = vmatpush2.msra.mxu0 0.0
  %2724 = vmatprep.subr.mxu0 0.0
  %2725 = vmatpush2.msra.mxu0 0.0
  %2726 = vmatprep.subr.mxu0 0.0
  %2727 = vmatpush2.msra.mxu0 0.0
  %2728 = vmatprep.subr.mxu0 0.0
  %2729 = vmatpush2.msra.mxu0 0.0
  %2730 = vmatprep.subr.mxu0 0.0
  %2731 = vmatpush2.msra.mxu0 0.0
  %2732 = vmatprep.subr.mxu0 0.0
  %2733 = vmatpush2.msra.mxu0 0.0
  %2734 = vmatprep.subr.mxu0 0.0
  %2735 = vmatpush2.msra.mxu0 0.0
  %2736 = vmatprep.mubr.f32.mxu0 0.0
  %2737 = vmatmul.mubr.f32.gmra.mxu0 %v2666
  %v2738 = vpop.f32.mrf.mxu0
  %v2739 = vadd.f32 %v2662, %v2738
  %v2740 = vpop.f32.mrf.mxu0
  %2741 = vdwg.mxu0
  %v2742 = vxor.u32 %v2739, 2147483648
  %v2743 = vmul.f32 %v2742, 1.442695
  %v2744 = vpow.pop %v2743
  %v2745 = vadd.f32 %v2744, 1.0
  %v2746 = vrcp.pop %v2745
  %v2747 = vmul.f32 1.0, %v2746
  %v2756 = vlaneseq
  %v2757 = vshrl.u32 %v2756, 7
  %v2758 = vsub.s32 %v662, %v2757
  %v2759 = vrot.slane %v2490, %v2758
  %v2760 = vlaneseq
  %v2761 = vshrl.u32 %v2760, 7
  %v2762 = vsub.s32 %v667, %v2761
  %v2763 = vrot.slane %v2493, %v2762
  %v2764 = vsel %vm672, %v2763, %v2759
  %v2765 = vlaneseq
  %v2766 = vshrl.u32 %v2765, 7
  %v2767 = vsub.s32 %v2550, %v2766
  %v2768 = vrot.slane %v2496, %v2767
  %v2769 = vsel %vm2555, %v2768, %v2764
  %v2770 = vlaneseq
  %v2771 = vshrl.u32 %v2770, 7
  %v2772 = vsub.s32 %v2557, %v2771
  %v2773 = vrot.slane %v2499, %v2772
  %v2774 = vsel %vm2562, %v2773, %v2769
  %v2775 = vlaneseq
  %v2776 = vshrl.u32 %v2775, 7
  %v2777 = vsub.s32 %v662, %v2776
  %v2778 = vrot.slane %v2502, %v2777
  %v2779 = vlaneseq
  %v2780 = vshrl.u32 %v2779, 7
  %v2781 = vsub.s32 %v667, %v2780
  %v2782 = vrot.slane %v2505, %v2781
  %v2783 = vsel %vm672, %v2782, %v2778
  %v2784 = vlaneseq
  %v2785 = vshrl.u32 %v2784, 7
  %v2786 = vsub.s32 %v2550, %v2785
  %v2787 = vrot.slane %v2508, %v2786
  %v2788 = vsel %vm2555, %v2787, %v2783
  %v2789 = vlaneseq
  %v2790 = vshrl.u32 %v2789, 7
  %v2791 = vsub.s32 %v2557, %v2790
  %v2792 = vrot.slane %v2511, %v2791
  %v2793 = vsel %vm2562, %v2792, %v2788
  %v2794 = vsel %vm1241, %v2793, %v2774
  %v2795 = vsel %vm2584, %v2794, 0
  %2797 = vmatprep.subr.mxu0 0.0
  %2798 = vmatpush1.msra.mxu0 0.0
  %2799 = vmatprep.subr.mxu0 0.0
  %2800 = vmatpush1.msra.mxu0 0.0
  %2801 = vmatprep.subr.mxu0 0.0
  %2802 = vmatpush1.msra.mxu0 0.0
  %2803 = vmatprep.subr.mxu0 0.0
  %2804 = vmatpush1.msra.mxu0 0.0
  %2805 = vmatprep.subr.mxu0 0.0
  %2806 = vmatpush1.msra.mxu0 0.0
  %2807 = vmatprep.subr.mxu0 0.0
  %2808 = vmatpush1.msra.mxu0 0.0
  %2809 = vmatprep.subr.mxu0 0.0
  %2810 = vmatpush1.msra.mxu0 0.0
  %2811 = vmatprep.subr.mxu0 0.0
  %2812 = vmatpush1.msra.mxu0 0.0
  %2813 = vmatprep.subr.mxu0 0.0
  %2814 = vmatpush1.msra.mxu0 0.0
  %2815 = vmatprep.subr.mxu0 0.0
  %2816 = vmatpush1.msra.mxu0 0.0
  %2817 = vmatprep.subr.mxu0 0.0
  %2818 = vmatpush1.msra.mxu0 0.0
  %2819 = vmatprep.subr.mxu0 0.0
  %2820 = vmatpush1.msra.mxu0 0.0
  %2821 = vmatprep.subr.mxu0 0.0
  %2822 = vmatpush1.msra.mxu0 %v2523
  %2823 = vmatprep.subr.mxu0 0.0
  %2824 = vmatpush1.msra.mxu0 %v2522
  %2825 = vmatprep.subr.mxu0 0.0
  %2826 = vmatpush1.msra.mxu0 %v2521
  %2827 = vmatprep.subr.mxu0 0.0
  %2828 = vmatpush1.msra.mxu0 %v2520
  %2829 = vmatprep.subr.mxu0 0.0
  %2830 = vmatpush2.msra.mxu0 0.0
  %2831 = vmatprep.subr.mxu0 0.0
  %2832 = vmatpush2.msra.mxu0 0.0
  %2833 = vmatprep.subr.mxu0 0.0
  %2834 = vmatpush2.msra.mxu0 0.0
  %2835 = vmatprep.subr.mxu0 0.0
  %2836 = vmatpush2.msra.mxu0 0.0
  %2837 = vmatprep.subr.mxu0 0.0
  %2838 = vmatpush2.msra.mxu0 0.0
  %2839 = vmatprep.subr.mxu0 0.0
  %2840 = vmatpush2.msra.mxu0 0.0
  %2841 = vmatprep.subr.mxu0 0.0
  %2842 = vmatpush2.msra.mxu0 0.0
  %2843 = vmatprep.subr.mxu0 0.0
  %2844 = vmatpush2.msra.mxu0 0.0
  %2845 = vmatprep.subr.mxu0 0.0
  %2846 = vmatpush2.msra.mxu0 0.0
  %2847 = vmatprep.subr.mxu0 0.0
  %2848 = vmatpush2.msra.mxu0 0.0
  %2849 = vmatprep.subr.mxu0 0.0
  %2850 = vmatpush2.msra.mxu0 0.0
  %2851 = vmatprep.subr.mxu0 0.0
  %2852 = vmatpush2.msra.mxu0 0.0
  %2853 = vmatprep.subr.mxu0 0.0
  %2854 = vmatpush2.msra.mxu0 0.0
  %2855 = vmatprep.subr.mxu0 0.0
  %2856 = vmatpush2.msra.mxu0 0.0
  %2857 = vmatprep.subr.mxu0 0.0
  %2858 = vmatpush2.msra.mxu0 0.0
  %2859 = vmatprep.subr.mxu0 0.0
  %2860 = vmatpush2.msra.mxu0 0.0
  %2861 = vmatprep.mubr.f32.mxu0 0.0
  %2862 = vmatmul.mubr.f32.gmra.mxu0 %v2795
  %v2863 = vpop.f32.mrf.mxu0
  %v2864 = vadd.f32 %v2531, %v2863
  %v2865 = vpop.f32.mrf.mxu0
  %2866 = vdwg.mxu0
  %v2867 = vmax.f32 %v2864, 0.0
  %v2869 = vsel %vm2664, %v2867, 0
  %2871 = vmatprep.subr.mxu0 0.0
  %2872 = vmatpush1.msra.mxu0 0.0
  %2873 = vmatprep.subr.mxu0 0.0
  %2874 = vmatpush1.msra.mxu0 0.0
  %2875 = vmatprep.subr.mxu0 0.0
  %2876 = vmatpush1.msra.mxu0 0.0
  %2877 = vmatprep.subr.mxu0 0.0
  %2878 = vmatpush1.msra.mxu0 0.0
  %2879 = vmatprep.subr.mxu0 0.0
  %2880 = vmatpush1.msra.mxu0 0.0
  %2881 = vmatprep.subr.mxu0 0.0
  %2882 = vmatpush1.msra.mxu0 0.0
  %2883 = vmatprep.subr.mxu0 0.0
  %2884 = vmatpush1.msra.mxu0 0.0
  %2885 = vmatprep.subr.mxu0 0.0
  %2886 = vmatpush1.msra.mxu0 0.0
  %2887 = vmatprep.subr.mxu0 0.0
  %2888 = vmatpush1.msra.mxu0 0.0
  %2889 = vmatprep.subr.mxu0 0.0
  %2890 = vmatpush1.msra.mxu0 0.0
  %2891 = vmatprep.subr.mxu0 0.0
  %2892 = vmatpush1.msra.mxu0 0.0
  %2893 = vmatprep.subr.mxu0 0.0
  %2894 = vmatpush1.msra.mxu0 0.0
  %2895 = vmatprep.subr.mxu0 0.0
  %2896 = vmatpush1.msra.mxu0 0.0
  %2897 = vmatprep.subr.mxu0 0.0
  %2898 = vmatpush1.msra.mxu0 0.0
  %2899 = vmatprep.subr.mxu0 0.0
  %2900 = vmatpush1.msra.mxu0 0.0
  %2901 = vmatprep.subr.mxu0 0.0
  %2902 = vmatpush1.msra.mxu0 %v2670
  %2903 = vmatprep.subr.mxu0 0.0
  %2904 = vmatpush2.msra.mxu0 0.0
  %2905 = vmatprep.subr.mxu0 0.0
  %2906 = vmatpush2.msra.mxu0 0.0
  %2907 = vmatprep.subr.mxu0 0.0
  %2908 = vmatpush2.msra.mxu0 0.0
  %2909 = vmatprep.subr.mxu0 0.0
  %2910 = vmatpush2.msra.mxu0 0.0
  %2911 = vmatprep.subr.mxu0 0.0
  %2912 = vmatpush2.msra.mxu0 0.0
  %2913 = vmatprep.subr.mxu0 0.0
  %2914 = vmatpush2.msra.mxu0 0.0
  %2915 = vmatprep.subr.mxu0 0.0
  %2916 = vmatpush2.msra.mxu0 0.0
  %2917 = vmatprep.subr.mxu0 0.0
  %2918 = vmatpush2.msra.mxu0 0.0
  %2919 = vmatprep.subr.mxu0 0.0
  %2920 = vmatpush2.msra.mxu0 0.0
  %2921 = vmatprep.subr.mxu0 0.0
  %2922 = vmatpush2.msra.mxu0 0.0
  %2923 = vmatprep.subr.mxu0 0.0
  %2924 = vmatpush2.msra.mxu0 0.0
  %2925 = vmatprep.subr.mxu0 0.0
  %2926 = vmatpush2.msra.mxu0 0.0
  %2927 = vmatprep.subr.mxu0 0.0
  %2928 = vmatpush2.msra.mxu0 0.0
  %2929 = vmatprep.subr.mxu0 0.0
  %2930 = vmatpush2.msra.mxu0 0.0
  %2931 = vmatprep.subr.mxu0 0.0
  %2932 = vmatpush2.msra.mxu0 0.0
  %2933 = vmatprep.subr.mxu0 0.0
  %2934 = vmatpush2.msra.mxu0 0.0
  %2935 = vmatprep.mubr.f32.mxu0 0.0
  %2936 = vmatmul.mubr.f32.gmra.mxu0 %v2869
  %v2937 = vpop.f32.mrf.mxu0
  %v2938 = vadd.f32 %v2662, %v2937
  %v2939 = vpop.f32.mrf.mxu0
  %2940 = vdwg.mxu0
  %v2941 = vxor.u32 %v2938, 2147483648
  %v2942 = vmul.f32 %v2941, 1.442695
  %v2943 = vpow.pop %v2942
  %v2944 = vadd.f32 %v2943, 1.0
  %v2945 = vrcp.pop %v2944
  %v2946 = vmul.f32 1.0, %v2945
  %v2947 = vadd.f32 %v2747, %v2946
  %v2948 = vlaneseq
  %v2949 = vshrl.u32 %v2948, 7
  %v2950 = vsub.s32 0, %v2949
  %v2951 = vrot.slane %v2947, %v2950
  %2953 = vbcast.lane.b32.xlu0 %v2951, 256
  %v2954 = vpop.permute.xlu0 %2953
  %s2956 = sor.u32 256, 8
  %2957 = vbcast.lane.b32.xlu0 %v2951, %s2956
  %v2958 = vpop.permute.xlu0 %2957
  %s2960 = sor.u32 256, 16
  %2961 = vbcast.lane.b32.xlu0 %v2951, %s2960
  %v2962 = vpop.permute.xlu0 %2961
  %s2964 = sor.u32 256, 24
  %2965 = vbcast.lane.b32.xlu0 %v2951, %s2964
  %v2966 = vpop.permute.xlu0 %2965
  %v2967 = vlaneseq
  %v2968 = vshrl.u32 %v2967, 7
  %v2969 = vsub.s32 1, %v2968
  %v2970 = vrot.slane %v2947, %v2969
  %2972 = vbcast.lane.b32.xlu0 %v2970, 256
  %v2973 = vpop.permute.xlu0 %2972
  %s2975 = sor.u32 256, 8
  %2976 = vbcast.lane.b32.xlu0 %v2970, %s2975
  %v2977 = vpop.permute.xlu0 %2976
  %s2979 = sor.u32 256, 16
  %2980 = vbcast.lane.b32.xlu0 %v2970, %s2979
  %v2981 = vpop.permute.xlu0 %2980
  %s2983 = sor.u32 256, 24
  %2984 = vbcast.lane.b32.xlu0 %v2970, %s2983
  %v2985 = vpop.permute.xlu0 %2984
  %v2986 = vlaneseq
  %v2987 = vshrl.u32 %v2986, 7
  %v2988 = vsub.s32 0, %v2987
  %v2989 = vrot.slane %v2954, %v2988
  %v2990 = vlaneseq
  %v2991 = vshrl.u32 %v2990, 7
  %v2992 = vsub.s32 1, %v2991
  %v2993 = vrot.slane %v2954, %v2992
  %v2994 = vlaneseq
  %v2995 = vshrl.u32 %v2994, 7
  %v2996 = vsub.s32 2, %v2995
  %v2997 = vrot.slane %v2954, %v2996
  %v2998 = vlaneseq
  %v2999 = vshrl.u32 %v2998, 7
  %v3000 = vsub.s32 3, %v2999
  %v3001 = vrot.slane %v2954, %v3000
  %v3002 = vlaneseq
  %v3003 = vshrl.u32 %v3002, 7
  %v3004 = vsub.s32 4, %v3003
  %v3005 = vrot.slane %v2954, %v3004
  %v3006 = vlaneseq
  %v3007 = vshrl.u32 %v3006, 7
  %v3008 = vsub.s32 5, %v3007
  %v3009 = vrot.slane %v2954, %v3008
  %v3010 = vlaneseq
  %v3011 = vshrl.u32 %v3010, 7
  %v3012 = vsub.s32 6, %v3011
  %v3013 = vrot.slane %v2954, %v3012
  %v3014 = vlaneseq
  %v3015 = vshrl.u32 %v3014, 7
  %v3016 = vsub.s32 7, %v3015
  %v3017 = vrot.slane %v2954, %v3016
  %v3018 = vlaneseq
  %v3019 = vshrl.u32 %v3018, 7
  %v3020 = vsub.s32 0, %v3019
  %v3021 = vrot.slane %v2958, %v3020
  %v3022 = vlaneseq
  %v3023 = vshrl.u32 %v3022, 7
  %v3024 = vsub.s32 1, %v3023
  %v3025 = vrot.slane %v2958, %v3024
  %v3026 = vlaneseq
  %v3027 = vshrl.u32 %v3026, 7
  %v3028 = vsub.s32 2, %v3027
  %v3029 = vrot.slane %v2958, %v3028
  %v3030 = vlaneseq
  %v3031 = vshrl.u32 %v3030, 7
  %v3032 = vsub.s32 3, %v3031
  %v3033 = vrot.slane %v2958, %v3032
  %v3034 = vlaneseq
  %v3035 = vshrl.u32 %v3034, 7
  %v3036 = vsub.s32 4, %v3035
  %v3037 = vrot.slane %v2958, %v3036
  %v3038 = vlaneseq
  %v3039 = vshrl.u32 %v3038, 7
  %v3040 = vsub.s32 5, %v3039
  %v3041 = vrot.slane %v2958, %v3040
  %v3042 = vlaneseq
  %v3043 = vshrl.u32 %v3042, 7
  %v3044 = vsub.s32 6, %v3043
  %v3045 = vrot.slane %v2958, %v3044
  %v3046 = vlaneseq
  %v3047 = vshrl.u32 %v3046, 7
  %v3048 = vsub.s32 7, %v3047
  %v3049 = vrot.slane %v2958, %v3048
  %v3050 = vlaneseq
  %v3051 = vshrl.u32 %v3050, 7
  %v3052 = vsub.s32 0, %v3051
  %v3053 = vrot.slane %v2962, %v3052
  %v3054 = vlaneseq
  %v3055 = vshrl.u32 %v3054, 7
  %v3056 = vsub.s32 1, %v3055
  %v3057 = vrot.slane %v2962, %v3056
  %v3058 = vlaneseq
  %v3059 = vshrl.u32 %v3058, 7
  %v3060 = vsub.s32 2, %v3059
  %v3061 = vrot.slane %v2962, %v3060
  %v3062 = vlaneseq
  %v3063 = vshrl.u32 %v3062, 7
  %v3064 = vsub.s32 3, %v3063
  %v3065 = vrot.slane %v2962, %v3064
  %v3066 = vlaneseq
  %v3067 = vshrl.u32 %v3066, 7
  %v3068 = vsub.s32 4, %v3067
  %v3069 = vrot.slane %v2962, %v3068
  %v3070 = vlaneseq
  %v3071 = vshrl.u32 %v3070, 7
  %v3072 = vsub.s32 5, %v3071
  %v3073 = vrot.slane %v2962, %v3072
  %v3074 = vlaneseq
  %v3075 = vshrl.u32 %v3074, 7
  %v3076 = vsub.s32 6, %v3075
  %v3077 = vrot.slane %v2962, %v3076
  %v3078 = vlaneseq
  %v3079 = vshrl.u32 %v3078, 7
  %v3080 = vsub.s32 7, %v3079
  %v3081 = vrot.slane %v2962, %v3080
  %v3082 = vlaneseq
  %v3083 = vshrl.u32 %v3082, 7
  %v3084 = vsub.s32 0, %v3083
  %v3085 = vrot.slane %v2966, %v3084
  %v3086 = vlaneseq
  %v3087 = vshrl.u32 %v3086, 7
  %v3088 = vsub.s32 1, %v3087
  %v3089 = vrot.slane %v2966, %v3088
  %v3090 = vlaneseq
  %v3091 = vshrl.u32 %v3090, 7
  %v3092 = vsub.s32 2, %v3091
  %v3093 = vrot.slane %v2966, %v3092
  %v3094 = vlaneseq
  %v3095 = vshrl.u32 %v3094, 7
  %v3096 = vsub.s32 3, %v3095
  %v3097 = vrot.slane %v2966, %v3096
  %v3098 = vlaneseq
  %v3099 = vshrl.u32 %v3098, 7
  %v3100 = vsub.s32 4, %v3099
  %v3101 = vrot.slane %v2966, %v3100
  %v3102 = vlaneseq
  %v3103 = vshrl.u32 %v3102, 7
  %v3104 = vsub.s32 5, %v3103
  %v3105 = vrot.slane %v2966, %v3104
  %v3106 = vlaneseq
  %v3107 = vshrl.u32 %v3106, 7
  %v3108 = vsub.s32 6, %v3107
  %v3109 = vrot.slane %v2966, %v3108
  %v3110 = vlaneseq
  %v3111 = vshrl.u32 %v3110, 7
  %v3112 = vsub.s32 7, %v3111
  %v3113 = vrot.slane %v2966, %v3112
  %v3114 = vlaneseq
  %v3115 = vshrl.u32 %v3114, 7
  %v3116 = vsub.s32 0, %v3115
  %v3117 = vrot.slane %v2973, %v3116
  %v3118 = vlaneseq
  %v3119 = vshrl.u32 %v3118, 7
  %v3120 = vsub.s32 1, %v3119
  %v3121 = vrot.slane %v2973, %v3120
  %v3122 = vlaneseq
  %v3123 = vshrl.u32 %v3122, 7
  %v3124 = vsub.s32 2, %v3123
  %v3125 = vrot.slane %v2973, %v3124
  %v3126 = vlaneseq
  %v3127 = vshrl.u32 %v3126, 7
  %v3128 = vsub.s32 3, %v3127
  %v3129 = vrot.slane %v2973, %v3128
  %v3130 = vlaneseq
  %v3131 = vshrl.u32 %v3130, 7
  %v3132 = vsub.s32 4, %v3131
  %v3133 = vrot.slane %v2973, %v3132
  %v3134 = vlaneseq
  %v3135 = vshrl.u32 %v3134, 7
  %v3136 = vsub.s32 5, %v3135
  %v3137 = vrot.slane %v2973, %v3136
  %v3138 = vlaneseq
  %v3139 = vshrl.u32 %v3138, 7
  %v3140 = vsub.s32 6, %v3139
  %v3141 = vrot.slane %v2973, %v3140
  %v3142 = vlaneseq
  %v3143 = vshrl.u32 %v3142, 7
  %v3144 = vsub.s32 7, %v3143
  %v3145 = vrot.slane %v2973, %v3144
  %v3146 = vlaneseq
  %v3147 = vshrl.u32 %v3146, 7
  %v3148 = vsub.s32 0, %v3147
  %v3149 = vrot.slane %v2977, %v3148
  %v3150 = vlaneseq
  %v3151 = vshrl.u32 %v3150, 7
  %v3152 = vsub.s32 1, %v3151
  %v3153 = vrot.slane %v2977, %v3152
  %v3154 = vlaneseq
  %v3155 = vshrl.u32 %v3154, 7
  %v3156 = vsub.s32 2, %v3155
  %v3157 = vrot.slane %v2977, %v3156
  %v3158 = vlaneseq
  %v3159 = vshrl.u32 %v3158, 7
  %v3160 = vsub.s32 3, %v3159
  %v3161 = vrot.slane %v2977, %v3160
  %v3162 = vlaneseq
  %v3163 = vshrl.u32 %v3162, 7
  %v3164 = vsub.s32 4, %v3163
  %v3165 = vrot.slane %v2977, %v3164
  %v3166 = vlaneseq
  %v3167 = vshrl.u32 %v3166, 7
  %v3168 = vsub.s32 5, %v3167
  %v3169 = vrot.slane %v2977, %v3168
  %v3170 = vlaneseq
  %v3171 = vshrl.u32 %v3170, 7
  %v3172 = vsub.s32 6, %v3171
  %v3173 = vrot.slane %v2977, %v3172
  %v3174 = vlaneseq
  %v3175 = vshrl.u32 %v3174, 7
  %v3176 = vsub.s32 7, %v3175
  %v3177 = vrot.slane %v2977, %v3176
  %v3178 = vlaneseq
  %v3179 = vshrl.u32 %v3178, 7
  %v3180 = vsub.s32 0, %v3179
  %v3181 = vrot.slane %v2981, %v3180
  %v3182 = vlaneseq
  %v3183 = vshrl.u32 %v3182, 7
  %v3184 = vsub.s32 1, %v3183
  %v3185 = vrot.slane %v2981, %v3184
  %v3186 = vlaneseq
  %v3187 = vshrl.u32 %v3186, 7
  %v3188 = vsub.s32 2, %v3187
  %v3189 = vrot.slane %v2981, %v3188
  %v3190 = vlaneseq
  %v3191 = vshrl.u32 %v3190, 7
  %v3192 = vsub.s32 3, %v3191
  %v3193 = vrot.slane %v2981, %v3192
  %v3194 = vlaneseq
  %v3195 = vshrl.u32 %v3194, 7
  %v3196 = vsub.s32 4, %v3195
  %v3197 = vrot.slane %v2981, %v3196
  %v3198 = vlaneseq
  %v3199 = vshrl.u32 %v3198, 7
  %v3200 = vsub.s32 5, %v3199
  %v3201 = vrot.slane %v2981, %v3200
  %v3202 = vlaneseq
  %v3203 = vshrl.u32 %v3202, 7
  %v3204 = vsub.s32 6, %v3203
  %v3205 = vrot.slane %v2981, %v3204
  %v3206 = vlaneseq
  %v3207 = vshrl.u32 %v3206, 7
  %v3208 = vsub.s32 7, %v3207
  %v3209 = vrot.slane %v2981, %v3208
  %v3210 = vlaneseq
  %v3211 = vshrl.u32 %v3210, 7
  %v3212 = vsub.s32 0, %v3211
  %v3213 = vrot.slane %v2985, %v3212
  %v3214 = vlaneseq
  %v3215 = vshrl.u32 %v3214, 7
  %v3216 = vsub.s32 1, %v3215
  %v3217 = vrot.slane %v2985, %v3216
  %v3218 = vlaneseq
  %v3219 = vshrl.u32 %v3218, 7
  %v3220 = vsub.s32 2, %v3219
  %v3221 = vrot.slane %v2985, %v3220
  %v3222 = vlaneseq
  %v3223 = vshrl.u32 %v3222, 7
  %v3224 = vsub.s32 3, %v3223
  %v3225 = vrot.slane %v2985, %v3224
  %v3226 = vlaneseq
  %v3227 = vshrl.u32 %v3226, 7
  %v3228 = vsub.s32 4, %v3227
  %v3229 = vrot.slane %v2985, %v3228
  %v3230 = vlaneseq
  %v3231 = vshrl.u32 %v3230, 7
  %v3232 = vsub.s32 5, %v3231
  %v3233 = vrot.slane %v2985, %v3232
  %v3234 = vlaneseq
  %v3235 = vshrl.u32 %v3234, 7
  %v3236 = vsub.s32 6, %v3235
  %v3237 = vrot.slane %v2985, %v3236
  %v3238 = vlaneseq
  %v3239 = vshrl.u32 %v3238, 7
  %v3240 = vsub.s32 7, %v3239
  %v3241 = vrot.slane %v2985, %v3240
  %v3242 = vmul.f32 %v20, %v2989
  %v3243 = vmul.f32 %v21, %v2989
  %v3244 = vmul.f32 %v22, %v2993
  %v3245 = vmul.f32 %v23, %v2993
  %v3246 = vmul.f32 %v24, %v2997
  %v3247 = vmul.f32 %v25, %v2997
  %v3248 = vmul.f32 %v26, %v3001
  %v3249 = vmul.f32 %v27, %v3001
  %v3250 = vmul.f32 %v28, %v3005
  %v3251 = vmul.f32 %v29, %v3005
  %v3252 = vmul.f32 %v30, %v3009
  %v3253 = vmul.f32 %v31, %v3009
  %v3254 = vmul.f32 %v32, %v3013
  %v3255 = vmul.f32 %v33, %v3013
  %v3256 = vmul.f32 %v34, %v3017
  %v3257 = vmul.f32 %v35, %v3017
  %v3258 = vmul.f32 %v36, %v3021
  %v3259 = vmul.f32 %v37, %v3021
  %v3260 = vmul.f32 %v38, %v3025
  %v3261 = vmul.f32 %v39, %v3025
  %v3262 = vmul.f32 %v40, %v3029
  %v3263 = vmul.f32 %v41, %v3029
  %v3264 = vmul.f32 %v42, %v3033
  %v3265 = vmul.f32 %v43, %v3033
  %v3266 = vmul.f32 %v44, %v3037
  %v3267 = vmul.f32 %v45, %v3037
  %v3268 = vmul.f32 %v46, %v3041
  %v3269 = vmul.f32 %v47, %v3041
  %v3270 = vmul.f32 %v48, %v3045
  %v3271 = vmul.f32 %v49, %v3045
  %v3272 = vmul.f32 %v50, %v3049
  %v3273 = vmul.f32 %v51, %v3049
  %v3274 = vmul.f32 %v52, %v3053
  %v3275 = vmul.f32 %v53, %v3053
  %v3276 = vmul.f32 %v54, %v3057
  %v3277 = vmul.f32 %v55, %v3057
  %v3278 = vmul.f32 %v56, %v3061
  %v3279 = vmul.f32 %v57, %v3061
  %v3280 = vmul.f32 %v58, %v3065
  %v3281 = vmul.f32 %v59, %v3065
  %v3282 = vmul.f32 %v60, %v3069
  %v3283 = vmul.f32 %v61, %v3069
  %v3284 = vmul.f32 %v62, %v3073
  %v3285 = vmul.f32 %v63, %v3073
  %v3286 = vmul.f32 %v64, %v3077
  %v3287 = vmul.f32 %v65, %v3077
  %v3288 = vmul.f32 %v66, %v3081
  %v3289 = vmul.f32 %v67, %v3081
  %v3290 = vmul.f32 %v68, %v3085
  %v3291 = vmul.f32 %v69, %v3085
  %v3292 = vmul.f32 %v70, %v3089
  %v3293 = vmul.f32 %v71, %v3089
  %v3294 = vmul.f32 %v72, %v3093
  %v3295 = vmul.f32 %v73, %v3093
  %v3296 = vmul.f32 %v74, %v3097
  %v3297 = vmul.f32 %v75, %v3097
  %v3298 = vmul.f32 %v76, %v3101
  %v3299 = vmul.f32 %v77, %v3101
  %v3300 = vmul.f32 %v78, %v3105
  %v3301 = vmul.f32 %v79, %v3105
  %v3302 = vmul.f32 %v80, %v3109
  %v3303 = vmul.f32 %v81, %v3109
  %v3304 = vmul.f32 %v82, %v3113
  %v3305 = vmul.f32 %v83, %v3113
  %v3306 = vmul.f32 %v84, %v3117
  %v3307 = vmul.f32 %v85, %v3117
  %v3308 = vmul.f32 %v86, %v3121
  %v3309 = vmul.f32 %v87, %v3121
  %v3310 = vmul.f32 %v88, %v3125
  %v3311 = vmul.f32 %v89, %v3125
  %v3312 = vmul.f32 %v90, %v3129
  %v3313 = vmul.f32 %v91, %v3129
  %v3314 = vmul.f32 %v92, %v3133
  %v3315 = vmul.f32 %v93, %v3133
  %v3316 = vmul.f32 %v94, %v3137
  %v3317 = vmul.f32 %v95, %v3137
  %v3318 = vmul.f32 %v96, %v3141
  %v3319 = vmul.f32 %v97, %v3141
  %v3320 = vmul.f32 %v98, %v3145
  %v3321 = vmul.f32 %v99, %v3145
  %v3322 = vmul.f32 %v100, %v3149
  %v3323 = vmul.f32 %v101, %v3149
  %v3324 = vmul.f32 %v102, %v3153
  %v3325 = vmul.f32 %v103, %v3153
  %v3326 = vmul.f32 %v104, %v3157
  %v3327 = vmul.f32 %v105, %v3157
  %v3328 = vmul.f32 %v106, %v3161
  %v3329 = vmul.f32 %v107, %v3161
  %v3330 = vmul.f32 %v108, %v3165
  %v3331 = vmul.f32 %v109, %v3165
  %v3332 = vmul.f32 %v110, %v3169
  %v3333 = vmul.f32 %v111, %v3169
  %v3334 = vmul.f32 %v112, %v3173
  %v3335 = vmul.f32 %v113, %v3173
  %v3336 = vmul.f32 %v114, %v3177
  %v3337 = vmul.f32 %v115, %v3177
  %v3338 = vmul.f32 %v116, %v3181
  %v3339 = vmul.f32 %v117, %v3181
  %v3340 = vmul.f32 %v118, %v3185
  %v3341 = vmul.f32 %v119, %v3185
  %v3342 = vmul.f32 %v120, %v3189
  %v3343 = vmul.f32 %v121, %v3189
  %v3344 = vmul.f32 %v122, %v3193
  %v3345 = vmul.f32 %v123, %v3193
  %v3346 = vmul.f32 %v124, %v3197
  %v3347 = vmul.f32 %v125, %v3197
  %v3348 = vmul.f32 %v126, %v3201
  %v3349 = vmul.f32 %v127, %v3201
  %v3350 = vmul.f32 %v128, %v3205
  %v3351 = vmul.f32 %v129, %v3205
  %v3352 = vmul.f32 %v130, %v3209
  %v3353 = vmul.f32 %v131, %v3209
  %v3354 = vmul.f32 %v132, %v3213
  %v3355 = vmul.f32 %v133, %v3213
  %v3356 = vmul.f32 %v134, %v3217
  %v3357 = vmul.f32 %v135, %v3217
  %v3358 = vmul.f32 %v136, %v3221
  %v3359 = vmul.f32 %v137, %v3221
  %v3360 = vmul.f32 %v138, %v3225
  %v3361 = vmul.f32 %v139, %v3225
  %v3362 = vmul.f32 %v140, %v3229
  %v3363 = vmul.f32 %v141, %v3229
  %v3364 = vmul.f32 %v142, %v3233
  %v3365 = vmul.f32 %v143, %v3233
  %v3366 = vmul.f32 %v144, %v3237
  %v3367 = vmul.f32 %v145, %v3237
  %v3368 = vmul.f32 %v146, %v3241
  %v3369 = vmul.f32 %v147, %v3241
  %3370 = vst.msk [vmem:[%s5] sm:$0xff] %vm148, %v3242
  %3371 = vst.msk [vmem:[%s5 + $0x8] sm:$0xff] %vm148, %v3243
  %3372 = vst.msk [vmem:[%s5 + $0x10] sm:$0xff] %vm148, %v3244
  %3373 = vst.msk [vmem:[%s5 + $0x18] sm:$0xff] %vm148, %v3245
  %3374 = vst.msk [vmem:[%s5 + $0x20] sm:$0xff] %vm148, %v3246
  %3375 = vst.msk [vmem:[%s5 + $0x28] sm:$0xff] %vm148, %v3247
  %3376 = vst.msk [vmem:[%s5 + $0x30] sm:$0xff] %vm148, %v3248
  %3377 = vst.msk [vmem:[%s5 + $0x38] sm:$0xff] %vm148, %v3249
  %3378 = vst.msk [vmem:[%s5 + $0x40] sm:$0xff] %vm148, %v3250
  %3379 = vst.msk [vmem:[%s5 + $0x48] sm:$0xff] %vm148, %v3251
  %3380 = vst.msk [vmem:[%s5 + $0x50] sm:$0xff] %vm148, %v3252
  %3381 = vst.msk [vmem:[%s5 + $0x58] sm:$0xff] %vm148, %v3253
  %3382 = vst.msk [vmem:[%s5 + $0x60] sm:$0xff] %vm148, %v3254
  %3383 = vst.msk [vmem:[%s5 + $0x68] sm:$0xff] %vm148, %v3255
  %3384 = vst.msk [vmem:[%s5 + $0x70] sm:$0xff] %vm148, %v3256
  %3385 = vst.msk [vmem:[%s5 + $0x78] sm:$0xff] %vm148, %v3257
  %3386 = vst.msk [vmem:[%s5 + $0x80] sm:$0xff] %vm148, %v3258
  %3387 = vst.msk [vmem:[%s5 + $0x88] sm:$0xff] %vm148, %v3259
  %3388 = vst.msk [vmem:[%s5 + $0x90] sm:$0xff] %vm148, %v3260
  %3389 = vst.msk [vmem:[%s5 + $0x98] sm:$0xff] %vm148, %v3261
  %3390 = vst.msk [vmem:[%s5 + $0xa0] sm:$0xff] %vm148, %v3262
  %3391 = vst.msk [vmem:[%s5 + $0xa8] sm:$0xff] %vm148, %v3263
  %3392 = vst.msk [vmem:[%s5 + $0xb0] sm:$0xff] %vm148, %v3264
  %3393 = vst.msk [vmem:[%s5 + $0xb8] sm:$0xff] %vm148, %v3265
  %3394 = vst.msk [vmem:[%s5 + $0xc0] sm:$0xff] %vm148, %v3266
  %3395 = vst.msk [vmem:[%s5 + $0xc8] sm:$0xff] %vm148, %v3267
  %3396 = vst.msk [vmem:[%s5 + $0xd0] sm:$0xff] %vm148, %v3268
  %3397 = vst.msk [vmem:[%s5 + $0xd8] sm:$0xff] %vm148, %v3269
  %3398 = vst.msk [vmem:[%s5 + $0xe0] sm:$0xff] %vm148, %v3270
  %3399 = vst.msk [vmem:[%s5 + $0xe8] sm:$0xff] %vm148, %v3271
  %3400 = vst.msk [vmem:[%s5 + $0xf0] sm:$0xff] %vm148, %v3272
  %3401 = vst.msk [vmem:[%s5 + $0xf8] sm:$0xff] %vm148, %v3273
  %3402 = vst.msk [vmem:[%s5 + $0x100] sm:$0xff] %vm148, %v3274
  %3403 = vst.msk [vmem:[%s5 + $0x108] sm:$0xff] %vm148, %v3275
  %3404 = vst.msk [vmem:[%s5 + $0x110] sm:$0xff] %vm148, %v3276
  %3405 = vst.msk [vmem:[%s5 + $0x118] sm:$0xff] %vm148, %v3277
  %3406 = vst.msk [vmem:[%s5 + $0x120] sm:$0xff] %vm148, %v3278
  %3407 = vst.msk [vmem:[%s5 + $0x128] sm:$0xff] %vm148, %v3279
  %3408 = vst.msk [vmem:[%s5 + $0x130] sm:$0xff] %vm148, %v3280
  %3409 = vst.msk [vmem:[%s5 + $0x138] sm:$0xff] %vm148, %v3281
  %3410 = vst.msk [vmem:[%s5 + $0x140] sm:$0xff] %vm148, %v3282
  %3411 = vst.msk [vmem:[%s5 + $0x148] sm:$0xff] %vm148, %v3283
  %3412 = vst.msk [vmem:[%s5 + $0x150] sm:$0xff] %vm148, %v3284
  %3413 = vst.msk [vmem:[%s5 + $0x158] sm:$0xff] %vm148, %v3285
  %3414 = vst.msk [vmem:[%s5 + $0x160] sm:$0xff] %vm148, %v3286
  %3415 = vst.msk [vmem:[%s5 + $0x168] sm:$0xff] %vm148, %v3287
  %3416 = vst.msk [vmem:[%s5 + $0x170] sm:$0xff] %vm148, %v3288
  %3417 = vst.msk [vmem:[%s5 + $0x178] sm:$0xff] %vm148, %v3289
  %3418 = vst.msk [vmem:[%s5 + $0x180] sm:$0xff] %vm148, %v3290
  %3419 = vst.msk [vmem:[%s5 + $0x188] sm:$0xff] %vm148, %v3291
  %3420 = vst.msk [vmem:[%s5 + $0x190] sm:$0xff] %vm148, %v3292
  %3421 = vst.msk [vmem:[%s5 + $0x198] sm:$0xff] %vm148, %v3293
  %3422 = vst.msk [vmem:[%s5 + $0x1a0] sm:$0xff] %vm148, %v3294
  %3423 = vst.msk [vmem:[%s5 + $0x1a8] sm:$0xff] %vm148, %v3295
  %3424 = vst.msk [vmem:[%s5 + $0x1b0] sm:$0xff] %vm148, %v3296
  %3425 = vst.msk [vmem:[%s5 + $0x1b8] sm:$0xff] %vm148, %v3297
  %3426 = vst.msk [vmem:[%s5 + $0x1c0] sm:$0xff] %vm148, %v3298
  %3427 = vst.msk [vmem:[%s5 + $0x1c8] sm:$0xff] %vm148, %v3299
  %3428 = vst.msk [vmem:[%s5 + $0x1d0] sm:$0xff] %vm148, %v3300
  %3429 = vst.msk [vmem:[%s5 + $0x1d8] sm:$0xff] %vm148, %v3301
  %3430 = vst.msk [vmem:[%s5 + $0x1e0] sm:$0xff] %vm148, %v3302
  %3431 = vst.msk [vmem:[%s5 + $0x1e8] sm:$0xff] %vm148, %v3303
  %3432 = vst.msk [vmem:[%s5 + $0x1f0] sm:$0xff] %vm148, %v3304
  %3433 = vst.msk [vmem:[%s5 + $0x1f8] sm:$0xff] %vm148, %v3305
  %3434 = vst.msk [vmem:[%s5 + $0x200] sm:$0xff] %vm148, %v3306
  %3435 = vst.msk [vmem:[%s5 + $0x208] sm:$0xff] %vm148, %v3307
  %3436 = vst.msk [vmem:[%s5 + $0x210] sm:$0xff] %vm148, %v3308
  %3437 = vst.msk [vmem:[%s5 + $0x218] sm:$0xff] %vm148, %v3309
  %3438 = vst.msk [vmem:[%s5 + $0x220] sm:$0xff] %vm148, %v3310
  %3439 = vst.msk [vmem:[%s5 + $0x228] sm:$0xff] %vm148, %v3311
  %3440 = vst.msk [vmem:[%s5 + $0x230] sm:$0xff] %vm148, %v3312
  %3441 = vst.msk [vmem:[%s5 + $0x238] sm:$0xff] %vm148, %v3313
  %3442 = vst.msk [vmem:[%s5 + $0x240] sm:$0xff] %vm148, %v3314
  %3443 = vst.msk [vmem:[%s5 + $0x248] sm:$0xff] %vm148, %v3315
  %3444 = vst.msk [vmem:[%s5 + $0x250] sm:$0xff] %vm148, %v3316
  %3445 = vst.msk [vmem:[%s5 + $0x258] sm:$0xff] %vm148, %v3317
  %3446 = vst.msk [vmem:[%s5 + $0x260] sm:$0xff] %vm148, %v3318
  %3447 = vst.msk [vmem:[%s5 + $0x268] sm:$0xff] %vm148, %v3319
  %3448 = vst.msk [vmem:[%s5 + $0x270] sm:$0xff] %vm148, %v3320
  %3449 = vst.msk [vmem:[%s5 + $0x278] sm:$0xff] %vm148, %v3321
  %3450 = vst.msk [vmem:[%s5 + $0x280] sm:$0xff] %vm148, %v3322
  %3451 = vst.msk [vmem:[%s5 + $0x288] sm:$0xff] %vm148, %v3323
  %3452 = vst.msk [vmem:[%s5 + $0x290] sm:$0xff] %vm148, %v3324
  %3453 = vst.msk [vmem:[%s5 + $0x298] sm:$0xff] %vm148, %v3325
  %3454 = vst.msk [vmem:[%s5 + $0x2a0] sm:$0xff] %vm148, %v3326
  %3455 = vst.msk [vmem:[%s5 + $0x2a8] sm:$0xff] %vm148, %v3327
  %3456 = vst.msk [vmem:[%s5 + $0x2b0] sm:$0xff] %vm148, %v3328
  %3457 = vst.msk [vmem:[%s5 + $0x2b8] sm:$0xff] %vm148, %v3329
  %3458 = vst.msk [vmem:[%s5 + $0x2c0] sm:$0xff] %vm148, %v3330
  %3459 = vst.msk [vmem:[%s5 + $0x2c8] sm:$0xff] %vm148, %v3331
  %3460 = vst.msk [vmem:[%s5 + $0x2d0] sm:$0xff] %vm148, %v3332
  %3461 = vst.msk [vmem:[%s5 + $0x2d8] sm:$0xff] %vm148, %v3333
  %3462 = vst.msk [vmem:[%s5 + $0x2e0] sm:$0xff] %vm148, %v3334
  %3463 = vst.msk [vmem:[%s5 + $0x2e8] sm:$0xff] %vm148, %v3335
  %3464 = vst.msk [vmem:[%s5 + $0x2f0] sm:$0xff] %vm148, %v3336
  %3465 = vst.msk [vmem:[%s5 + $0x2f8] sm:$0xff] %vm148, %v3337
  %3466 = vst.msk [vmem:[%s5 + $0x300] sm:$0xff] %vm148, %v3338
  %3467 = vst.msk [vmem:[%s5 + $0x308] sm:$0xff] %vm148, %v3339
  %3468 = vst.msk [vmem:[%s5 + $0x310] sm:$0xff] %vm148, %v3340
  %3469 = vst.msk [vmem:[%s5 + $0x318] sm:$0xff] %vm148, %v3341
  %3470 = vst.msk [vmem:[%s5 + $0x320] sm:$0xff] %vm148, %v3342
  %3471 = vst.msk [vmem:[%s5 + $0x328] sm:$0xff] %vm148, %v3343
  %3472 = vst.msk [vmem:[%s5 + $0x330] sm:$0xff] %vm148, %v3344
  %3473 = vst.msk [vmem:[%s5 + $0x338] sm:$0xff] %vm148, %v3345
  %3474 = vst.msk [vmem:[%s5 + $0x340] sm:$0xff] %vm148, %v3346
  %3475 = vst.msk [vmem:[%s5 + $0x348] sm:$0xff] %vm148, %v3347
  %3476 = vst.msk [vmem:[%s5 + $0x350] sm:$0xff] %vm148, %v3348
  %3477 = vst.msk [vmem:[%s5 + $0x358] sm:$0xff] %vm148, %v3349
  %3478 = vst.msk [vmem:[%s5 + $0x360] sm:$0xff] %vm148, %v3350
  %3479 = vst.msk [vmem:[%s5 + $0x368] sm:$0xff] %vm148, %v3351
  %3480 = vst.msk [vmem:[%s5 + $0x370] sm:$0xff] %vm148, %v3352
  %3481 = vst.msk [vmem:[%s5 + $0x378] sm:$0xff] %vm148, %v3353
  %3482 = vst.msk [vmem:[%s5 + $0x380] sm:$0xff] %vm148, %v3354
  %3483 = vst.msk [vmem:[%s5 + $0x388] sm:$0xff] %vm148, %v3355
  %3484 = vst.msk [vmem:[%s5 + $0x390] sm:$0xff] %vm148, %v3356
  %3485 = vst.msk [vmem:[%s5 + $0x398] sm:$0xff] %vm148, %v3357
  %3486 = vst.msk [vmem:[%s5 + $0x3a0] sm:$0xff] %vm148, %v3358
  %3487 = vst.msk [vmem:[%s5 + $0x3a8] sm:$0xff] %vm148, %v3359
  %3488 = vst.msk [vmem:[%s5 + $0x3b0] sm:$0xff] %vm148, %v3360
  %3489 = vst.msk [vmem:[%s5 + $0x3b8] sm:$0xff] %vm148, %v3361
  %3490 = vst.msk [vmem:[%s5 + $0x3c0] sm:$0xff] %vm148, %v3362
  %3491 = vst.msk [vmem:[%s5 + $0x3c8] sm:$0xff] %vm148, %v3363
  %3492 = vst.msk [vmem:[%s5 + $0x3d0] sm:$0xff] %vm148, %v3364
  %3493 = vst.msk [vmem:[%s5 + $0x3d8] sm:$0xff] %vm148, %v3365
  %3494 = vst.msk [vmem:[%s5 + $0x3e0] sm:$0xff] %vm148, %v3366
  %3495 = vst.msk [vmem:[%s5 + $0x3e8] sm:$0xff] %vm148, %v3367
  %3496 = vst.msk [vmem:[%s5 + $0x3f0] sm:$0xff] %vm148, %v3368
  %3497 = vst.msk [vmem:[%s5 + $0x3f8] sm:$0xff] %vm148, %v3369
  // Predicated region
  $region22: #{tpu_custom_call.1} parent=0 // pred_check
    _
  $region23: #{tpu_custom_call.1} parent=0 // pred_check_branch
    %3499 = sbr.rel (0) target = $region25
  $region24: #{tpu_custom_call.1} parent=0 // pred_region
    _
  $region25: #{tpu_custom_call.1} parent=0 // pred_fallthru
    _
  // Predicated region
  $region26: #{tpu_custom_call.1} parent=0 // pred_check
    _
  $region27: #{tpu_custom_call.1} parent=0 // pred_check_branch
    %3501 = sbr.rel (0) target = $region29
  $region28: #{tpu_custom_call.1} parent=0 // pred_region
    _
  $region29: #{tpu_custom_call.1} parent=0 // pred_fallthru
    _

</llo_original>
